<compile_context>
chip_gen: v5e
topology: v5e:2x2
jax: 0.10.0
libtpu: 0.0.40
codegen_flags: <defaults>
</compile_context>

<pallas_src>
import functools

import jax
import jax.numpy as jnp
from jax import lax
from jax.experimental import pallas as pl
from jax.experimental.pallas import tpu as pltpu


def _proj_logsoftmax_kernel(x_ref, w_ref, b_ref, o_ref, m_ref, l_ref):
    """Grid = (row_tile i, pass p in {0: stats, 1: write}, vocab_tile n)."""
    p = pl.program_id(1)
    n = pl.program_id(2)
    nv = pl.num_programs(2)

    # (tm, tn) logits tile: contract on d_model with the weight kept in its
    # PyTorch (vocab, d_model) layout; f32 accumulation on the MXU, then a
    # lane-aligned (1, tn) f32 bias add.
    logits = lax.dot_general(
        x_ref[...],
        w_ref[...],
        dimension_numbers=(((1,), (1,)), ((), ())),
        preferred_element_type=jnp.float32,
    ) + b_ref[...]

    # Reset the per-row-tile online-logsumexp state at the start of pass 0.
    @pl.when((p == 0) & (n == 0))
    def _():
        m_ref[...] = jnp.full(m_ref.shape, -jnp.inf, m_ref.dtype)
        l_ref[...] = jnp.zeros(l_ref.shape, l_ref.dtype)

    # Pass 0: accumulate running max m and rescaled sum-of-exp l.
    @pl.when(p == 0)
    def _():
        m_prev = m_ref[...]
        m_new = jnp.maximum(m_prev, jnp.max(logits, axis=-1, keepdims=True))
        l_ref[...] = (l_ref[...] * jnp.exp(m_prev - m_new)
                      + jnp.sum(jnp.exp(logits - m_new), axis=-1, keepdims=True))
        m_ref[...] = m_new

    # End of pass 0: fold the logsumexp into m once (instead of redoing
    # m + log(l) for every vocab tile of pass 1).
    @pl.when((p == 0) & (n == nv - 1))
    def _():
        m_ref[...] = m_ref[...] + jnp.log(l_ref[...])

    # Pass 1: logits - logsumexp, finalized per vocab tile (no giant buffer).
    @pl.when(p == 1)
    def _():
        o_ref[...] = (logits - m_ref[...]).astype(o_ref.dtype)


@functools.partial(
    jax.jit, static_argnames=("tm", "tn", "compute_dtype", "out_dtype"))
def projection_layer(x, weight, bias, *, tm=256, tn=512,
                     compute_dtype=jnp.bfloat16, out_dtype=None):
    """x: (B, S, d_model); weight: (vocab, d_model) (PyTorch layout); bias: (vocab,)."""
    B, S, d_model = x.shape
    vocab = weight.shape[0]
    out_dtype = x.dtype if out_dtype is None else out_dtype

    M = B * S
    m_pad = ((M + tm - 1) // tm) * tm
    v_pad = ((vocab + tn - 1) // tn) * tn

    x2d = x.reshape(M, d_model)
    if x2d.dtype != compute_dtype:
        x2d = x2d.astype(compute_dtype)
    w = weight if weight.dtype == compute_dtype else weight.astype(compute_dtype)
    b = bias.astype(jnp.float32).reshape(1, vocab)

    # Pad ragged row / vocab extents.  Padded vocab columns get a huge
    # negative bias so they contribute exp(.) == 0 to the logsumexp.
    if m_pad != M:
        x2d = jnp.pad(x2d, ((0, m_pad - M), (0, 0)))
    if v_pad != vocab:
        w = jnp.pad(w, ((0, v_pad - vocab), (0, 0)))
        b = jnp.pad(b, ((0, 0), (0, v_pad - vocab)), constant_values=-1e30)

    nm = m_pad // tm
    nv = v_pad // tn

    out = pl.pallas_call(
        _proj_logsoftmax_kernel,
        out_shape=jax.ShapeDtypeStruct((m_pad, v_pad), out_dtype),
        grid_spec=pltpu.PrefetchScalarGridSpec(
            num_scalar_prefetch=0,
            grid=(nm, 2, nv),                       # rows | pass | vocab tiles
            in_specs=[
                # x row tile: invariant across pass / vocab axes -> fetched
                # once per row tile, stays resident in VMEM.
                pl.BlockSpec((tm, d_model), lambda i, p, n: (i, 0)),
                # weight column tile, PyTorch (vocab, d_model) layout.
                pl.BlockSpec((tn, d_model), lambda i, p, n: (n, 0)),
                # bias tile (1, tn), f32.
                pl.BlockSpec((1, tn), lambda i, p, n: (0, n)),
            ],
            # Pass 0 parks the output window on (i, 0) (never written there);
            # pass 1 walks (i, n) and writes each vocab tile exactly once --
            # every output block is DMA'd back to HBM exactly once.
            out_specs=pl.BlockSpec((tm, tn), lambda i, p, n: (i, p * n)),
            scratch_shapes=[
                pltpu.VMEM((tm, 1), jnp.float32),   # running max m (-> lse)
                pltpu.VMEM((tm, 1), jnp.float32),   # running sum-of-exp l
            ],
        ),
        compiler_params=pltpu.CompilerParams(
            dimension_semantics=("parallel", "arbitrary", "arbitrary"),
        ),
    )(x2d, w, b)

    return out[:M, :vocab].reshape(B, S, vocab)


if __name__ == "__main__":
    # Small shapes consistent with the module's forward.  vocab=1000 is not a
    # multiple of tn and B*S=16 is not a multiple of tm=256, so both padding
    # paths and the multi-vocab-tile online logsumexp are exercised; the
    # second (tm=8, tn=128) config additionally exercises multiple row tiles.
    B, S, d_model, vocab = 2, 8, 32, 1000

    key = jax.random.PRNGKey(0)
    kx, kw, kb = jax.random.split(key, 3)

    # Deterministic nn.Linear-style init: U(-1/sqrt(d_model), 1/sqrt(d_model)).
    bound = 1.0 / (d_model ** 0.5)
    weight = jax.random.uniform(kw, (vocab, d_model), jnp.float32, -bound, bound)
    bias = jax.random.uniform(kb, (vocab,), jnp.float32, -bound, bound)
    x = jax.random.normal(kx, (B, S, d_model), jnp.float32)

    # Reference with matching bf16 MXU operands / f32 accumulation & softmax.
    logits_ref = jnp.dot(
        x.astype(jnp.bfloat16).reshape(B * S, d_model),
        weight.astype(jnp.bfloat16).T,
        preferred_element_type=jnp.float32,
    ) + bias
    ref = jax.nn.log_softmax(logits_ref, axis=-1).reshape(B, S, vocab)
    # Pure-f32 PyTorch-spec math (coarse check; bf16 operand noise only).
    ref_f32 = jax.nn.log_softmax(x @ weight.T + bias, axis=-1)

    for (tm, tn) in ((256, 512), (8, 128)):
        out = projection_layer(x, weight, bias, tm=tm, tn=tn)
        out = jax.block_until_ready(out)
        assert out.shape == (B, S, vocab)
        err = jnp.max(jnp.abs(out.astype(jnp.float32) - ref))
        assert jnp.allclose(out.astype(jnp.float32), ref,
                            atol=1e-3, rtol=1e-3), float(err)
        assert jnp.allclose(out.astype(jnp.float32), ref_f32,
                            atol=1e-1, rtol=1e-1)

    print("KERNEL_OK")
</pallas_src>

<mosaic_0001>
module attributes {stable_mosaic.version = 11 : i64} {
  func.func @_proj_logsoftmax_kernel(%arg0: i32, %arg1: i32, %arg2: i32, %arg3: memref<256x32xbf16, #tpu.memory_space<vmem>>, %arg4: memref<512x32xbf16, #tpu.memory_space<vmem>>, %arg5: memref<1x512xf32, #tpu.memory_space<vmem>>, %arg6: memref<256x512xf32, #tpu.memory_space<vmem>>, %arg7: memref<256x1xf32, #tpu.memory_space<vmem>>, %arg8: memref<256x1xf32, #tpu.memory_space<vmem>>) attributes {dimension_semantics = [#tpu.dimension_semantics<parallel>, #tpu.dimension_semantics<arbitrary>, #tpu.dimension_semantics<arbitrary>], iteration_bounds = array<i64: 1, 2, 2>, scalar_prefetch = 0 : i64, scratch_operands = 2 : i64, tpu.core_type = #tpu.core_type<tc>, window_params = [{transform_indices = @transform_0, window_bounds = array<i64: 256, 32>}, {transform_indices = @transform_1, window_bounds = array<i64: 512, 32>}, {transform_indices = @transform_2, window_bounds = array<i64: 1, 512>}, {transform_indices = @transform_3, window_bounds = array<i64: 256, 512>}]} {
    %c0 = arith.constant 0 : index
    %c0_0 = arith.constant 0 : index
    %0 = vector.load %arg3[%c0, %c0_0] : memref<256x32xbf16, #tpu.memory_space<vmem>>, vector<256x32xbf16>
    %c0_1 = arith.constant 0 : index
    %c0_2 = arith.constant 0 : index
    %1 = vector.load %arg4[%c0_1, %c0_2] : memref<512x32xbf16, #tpu.memory_space<vmem>>, vector<512x32xbf16>
    %cst = arith.constant dense<0.000000e+00> : vector<256x512xf32>
    %2 = tpu.matmul %0, %1, %cst {dimension_numbers = #tpu.dot_dimension_numbers<[1], [1], [0], [0], [0, 0, 1, 0], [], []>} : vector<256x32xbf16>, vector<512x32xbf16>, vector<256x512xf32> -> vector<256x512xf32>
    %c0_3 = arith.constant 0 : index
    %c0_4 = arith.constant 0 : index
    %3 = vector.load %arg5[%c0_3, %c0_4] : memref<1x512xf32, #tpu.memory_space<vmem>>, vector<1x512xf32>
    %4 = vector.broadcast %3 : vector<1x512xf32> to vector<256x512xf32>
    %5 = arith.addf %2, %4 : vector<256x512xf32>
    %c0_i32 = arith.constant 0 : i32
    %6 = arith.cmpi eq, %arg1, %c0_i32 : i32
    %c0_i32_5 = arith.constant 0 : i32
    %7 = arith.cmpi eq, %arg2, %c0_i32_5 : i32
    %8 = arith.andi %6, %7 : i1
    %9 = arith.extui %8 : i1 to i32
    %c0_i32_6 = arith.constant 0 : i32
    %10 = arith.cmpi ne, %9, %c0_i32_6 : i32
    scf.if %10 {
      %cst_13 = arith.constant 0xFF800000 : f32
      %22 = vector.broadcast %cst_13 : f32 to vector<256x1xf32>
      %c0_14 = arith.constant 0 : index
      %c0_15 = arith.constant 0 : index
      %23 = vector.load %arg7[%c0_14, %c0_15] : memref<256x1xf32, #tpu.memory_space<vmem>>, vector<256x1xf32>
      tpu.vector_store %arg7[%c0_14, %c0_15], %22 {strides = array<i32>} : memref<256x1xf32, #tpu.memory_space<vmem>>, vector<256x1xf32>,
      %cst_16 = arith.constant 0.000000e+00 : f32
      %24 = vector.broadcast %cst_16 : f32 to vector<256x1xf32>
      %c0_17 = arith.constant 0 : index
      %c0_18 = arith.constant 0 : index
      %25 = vector.load %arg8[%c0_17, %c0_18] : memref<256x1xf32, #tpu.memory_space<vmem>>, vector<256x1xf32>
      tpu.vector_store %arg8[%c0_17, %c0_18], %24 {strides = array<i32>} : memref<256x1xf32, #tpu.memory_space<vmem>>, vector<256x1xf32>,
    } else {
    }
    %c0_i32_7 = arith.constant 0 : i32
    %11 = arith.cmpi eq, %arg1, %c0_i32_7 : i32
    %12 = arith.extui %11 : i1 to i32
    %c0_i32_8 = arith.constant 0 : i32
    %13 = arith.cmpi ne, %12, %c0_i32_8 : i32
    scf.if %13 {
      %c0_13 = arith.constant 0 : index
      %c0_14 = arith.constant 0 : index
      %22 = vector.load %arg7[%c0_13, %c0_14] : memref<256x1xf32, #tpu.memory_space<vmem>>, vector<256x1xf32>
      %cst_15 = arith.constant dense<0xFF800000> : vector<256xf32>
      %23 = vector.multi_reduction <maximumf>, %5, %cst_15 [1] : vector<256x512xf32> to vector<256xf32>
      %24 = vector.shape_cast %23 : vector<256xf32> to vector<256x1xf32>
      %25 = arith.maximumf %22, %24 : vector<256x1xf32>
      %c0_16 = arith.constant 0 : index
      %c0_17 = arith.constant 0 : index
      %26 = vector.load %arg8[%c0_16, %c0_17] : memref<256x1xf32, #tpu.memory_space<vmem>>, vector<256x1xf32>
      %27 = arith.subf %22, %25 : vector<256x1xf32>
      %28 = math.exp %27 : vector<256x1xf32>
      %29 = arith.mulf %26, %28 : vector<256x1xf32>
      %30 = vector.broadcast %25 : vector<256x1xf32> to vector<256x512xf32>
      %31 = arith.subf %5, %30 : vector<256x512xf32>
      %32 = math.exp %31 : vector<256x512xf32>
      %cst_18 = arith.constant dense<0.000000e+00> : vector<256xf32>
      %33 = vector.multi_reduction <add>, %32, %cst_18 [1] : vector<256x512xf32> to vector<256xf32>
      %34 = vector.shape_cast %33 : vector<256xf32> to vector<256x1xf32>
      %35 = arith.addf %29, %34 : vector<256x1xf32>
      %c0_19 = arith.constant 0 : index
      %c0_20 = arith.constant 0 : index
      %36 = vector.load %arg8[%c0_19, %c0_20] : memref<256x1xf32, #tpu.memory_space<vmem>>, vector<256x1xf32>
      tpu.vector_store %arg8[%c0_19, %c0_20], %35 {strides = array<i32>} : memref<256x1xf32, #tpu.memory_space<vmem>>, vector<256x1xf32>,
      %c0_21 = arith.constant 0 : index
      %c0_22 = arith.constant 0 : index
      %37 = vector.load %arg7[%c0_21, %c0_22] : memref<256x1xf32, #tpu.memory_space<vmem>>, vector<256x1xf32>
      tpu.vector_store %arg7[%c0_21, %c0_22], %25 {strides = array<i32>} : memref<256x1xf32, #tpu.memory_space<vmem>>, vector<256x1xf32>,
    } else {
    }
    %c0_i32_9 = arith.constant 0 : i32
    %14 = arith.cmpi eq, %arg1, %c0_i32_9 : i32
    %c1_i32 = arith.constant 1 : i32
    %15 = arith.cmpi eq, %arg2, %c1_i32 : i32
    %16 = arith.andi %14, %15 : i1
    %17 = arith.extui %16 : i1 to i32
    %c0_i32_10 = arith.constant 0 : i32
    %18 = arith.cmpi ne, %17, %c0_i32_10 : i32
    scf.if %18 {
      %c0_13 = arith.constant 0 : index
      %c0_14 = arith.constant 0 : index
      %22 = vector.load %arg7[%c0_13, %c0_14] : memref<256x1xf32, #tpu.memory_space<vmem>>, vector<256x1xf32>
      %c0_15 = arith.constant 0 : index
      %c0_16 = arith.constant 0 : index
      %23 = vector.load %arg8[%c0_15, %c0_16] : memref<256x1xf32, #tpu.memory_space<vmem>>, vector<256x1xf32>
      %24 = math.log %23 : vector<256x1xf32>
      %25 = arith.addf %22, %24 : vector<256x1xf32>
      %c0_17 = arith.constant 0 : index
      %c0_18 = arith.constant 0 : index
      %26 = vector.load %arg7[%c0_17, %c0_18] : memref<256x1xf32, #tpu.memory_space<vmem>>, vector<256x1xf32>
      tpu.vector_store %arg7[%c0_17, %c0_18], %25 {strides = array<i32>} : memref<256x1xf32, #tpu.memory_space<vmem>>, vector<256x1xf32>,
    } else {
    }
    %c1_i32_11 = arith.constant 1 : i32
    %19 = arith.cmpi eq, %arg1, %c1_i32_11 : i32
    %20 = arith.extui %19 : i1 to i32
    %c0_i32_12 = arith.constant 0 : i32
    %21 = arith.cmpi ne, %20, %c0_i32_12 : i32
    scf.if %21 {
      %c0_13 = arith.constant 0 : index
      %c0_14 = arith.constant 0 : index
      %22 = vector.load %arg7[%c0_13, %c0_14] : memref<256x1xf32, #tpu.memory_space<vmem>>, vector<256x1xf32>
      %23 = vector.broadcast %22 : vector<256x1xf32> to vector<256x512xf32>
      %24 = arith.subf %5, %23 : vector<256x512xf32>
      %c0_15 = arith.constant 0 : index
      %c0_16 = arith.constant 0 : index
      %25 = vector.load %arg6[%c0_15, %c0_16] : memref<256x512xf32, #tpu.memory_space<vmem>>, vector<256x512xf32>
      tpu.vector_store %arg6[%c0_15, %c0_16], %24 {strides = array<i32>} : memref<256x512xf32, #tpu.memory_space<vmem>>, vector<256x512xf32>,
    } else {
    }
    return
  }
  func.func @transform_0(%arg0: i32, %arg1: i32, %arg2: i32) -> (i32, i32) {
    %c0_i32 = arith.constant 0 : i32
    %c0_i32_0 = arith.constant 0 : i32
    return %arg0, %c0_i32 : i32, i32
  }
  func.func @transform_1(%arg0: i32, %arg1: i32, %arg2: i32) -> (i32, i32) {
    %c0_i32 = arith.constant 0 : i32
    %c0_i32_0 = arith.constant 0 : i32
    return %arg2, %c0_i32 : i32, i32
  }
  func.func @transform_2(%arg0: i32, %arg1: i32, %arg2: i32) -> (i32, i32) {
    %c0_i32 = arith.constant 0 : i32
    %c0_i32_0 = arith.constant 0 : i32
    return %c0_i32, %arg2 : i32, i32
  }
  func.func @transform_3(%arg0: i32, %arg1: i32, %arg2: i32) -> (i32, i32) {
    %0 = arith.muli %arg1, %arg2 : i32
    %c0_i32 = arith.constant 0 : i32
    return %arg0, %0 : i32, i32
  }
}

</mosaic_0001>

<llo_original>
// kernel: projection_layer.1
$region0: #{projection_layer.1}
  #allocation0 [shape = 'u32[]', space=smem, size = 0x4, offset = 0x4, fixed_abs, tag = 'smem constant byte address 0x4 - core index']
  #allocation1 [shape = 'u32[72,128]{1,0:T(1,128)}', space=vmem, size = 0x9000, scoped, tag = 'internal scratch']
  #allocation2 [shape = 'f32[256,1]{1,0:T(8,128)}', space=vmem, size = 0x20000, scoped, tag = 'scratch operand']
  #allocation3 [shape = 'f32[256,1]{1,0:T(8,128)}', space=vmem, size = 0x20000, scoped, tag = 'scratch operand']
  %s0 = inlined_call_operand.vmem [shape: bf16[256,32], index: 0, kind: input, shape index: {}]
  %s1 = inlined_call_operand.vmem [shape: bf16[1024,32], index: 1, kind: input, shape index: {}]
  %s2 = inlined_call_operand.vmem [shape: f32[1,1024], index: 2, kind: input, shape index: {}]
  %s3 = inlined_call_operand.vmem [shape: f32[256,1024], index: 3, kind: output, shape index: {}]
  %s4 = sld [smem:[#allocation0]]
  $region80: #{projection_layer.1} parent=0
    _
  %s6 = ssub.s32 1, %s4
  %s7 = scalar_select 0, %s6, %s4
  $region1: #{projection_layer.1} parent=0
    #allocation4 [shape = 'u8[1048576]{0}', space=vmem, size = 0x100000, scoped, tag = 'output window, operand 0']
    loop: start=0, step=1, limit=6
    $region2: #{projection_layer.1} parent=1 // loop_pre_header
      _
    $region3: #{projection_layer.1} parent=1 // loop_header
      %s9 = sphi 0, %s13
      %p10 = scmp.ge.s32.totalorder %s9, 6
      %s16 = sphi 0, %s35
      %s17 = sphi 0, %s31
      %s18 = sphi 0, %s27
      %s19 = sphi 0, %s16
      %s20 = sphi 0, %s17
      %s21 = sphi 0, %s18
      %s22 = sphi 0, %s19
      %s23 = sphi 0, %s20
      %s24 = sphi 0, %s21
      %s38 = sphi 0, %s40
      %s41 = sphi 0, %s38
      %s42 = sphi 0, %s41
      %s58 = sphi 0, %s42
      %s64 = sphi 0, %s66
      %s67 = sphi 0, %s64
      %s68 = sphi 0, %s67
      %s84 = sphi 0, %s68
      %s90 = sphi 0, %s92
      %s93 = sphi 0, %s90
      %s94 = sphi 0, %s93
      %s110 = sphi 0, %s94
      %s120 = sphi 0, %s122
      %s123 = sphi 0, %s120
      %s124 = sphi 0, %s123
      %s140 = sphi 0, %s124
    $region4: #{projection_layer.1} parent=1 // loop_header_branch
      %12 = sbr.rel (%p10) target = $region8
    $region5: #{projection_layer.1} parent=1 // loop_body
      %s14 = ssub.s32 %s9, 1
      %s15 = ssub.s32 %s9, 2
      %s25 = sadd.s32 1, %s18
      %p26 = scmp.ge.s32.totalorder %s25, 2
      %s27 = scalar_select %p26, 0, %s25
      %s28 = sadd.s32 1, %s17
      %s29 = scalar_select %p26, %s28, %s17
      %p30 = scmp.ge.s32.totalorder %s29, 2
      %s31 = scalar_select %p30, 0, %s29
      %s32 = sadd.s32 1, %s16
      %s33 = scalar_select %p30, %s32, %s16
      %p34 = scmp.ge.s32.totalorder %s33, 1
      %s35 = scalar_select %p34, 0, %s33
      %s36 = ssub.s32 %s16, %s35
      %p37 = scmp.eq.s32.totalorder %s36, 0
      %s39 = sadd.s32 %s38, 1
      %s40 = scalar_select %p37, %s38, %s39
      %p43 = pneg %p37
      %p44 = scmp.eq.s32.totalorder %s9, 3
      %p45 = por %p43, %p44
      %p46 = scmp.ne.s32.totalorder %s38, %s41
      %p47 = scmp.eq.s32.totalorder %s9, 0
      %p48 = por %p46, %p47
      %p49 = scmp.ne.s32.totalorder %s38, %s41
      %p50 = scmp.eq.s32.totalorder %s14, 3
      %p51 = por %p49, %p50
      %p52 = scmp.ne.s32.totalorder %s41, %s42
      %p53 = scmp.eq.s32.totalorder %s14, 0
      %p54 = por %p52, %p53
      %p55 = scmp.ne.s32.totalorder %s41, %s42
      %p56 = scmp.eq.s32.totalorder %s15, 3
      %p57 = por %p55, %p56
      %p59 = scmp.ne.s32.totalorder %s42, %s58
      %p60 = scmp.eq.s32.totalorder %s15, 0
      %p61 = por %p59, %p60
      %s62 = ssub.s32 %s18, %s27
      %p63 = scmp.eq.s32.totalorder %s62, 0
      %s65 = sadd.s32 %s64, 1
      %s66 = scalar_select %p63, %s64, %s65
      %p69 = pneg %p63
      %p70 = scmp.eq.s32.totalorder %s9, 3
      %p71 = por %p69, %p70
      %p72 = scmp.ne.s32.totalorder %s64, %s67
      %p73 = scmp.eq.s32.totalorder %s9, 0
      %p74 = por %p72, %p73
      %p75 = scmp.ne.s32.totalorder %s64, %s67
      %p76 = scmp.eq.s32.totalorder %s14, 3
      %p77 = por %p75, %p76
      %p78 = scmp.ne.s32.totalorder %s67, %s68
      %p79 = scmp.eq.s32.totalorder %s14, 0
      %p80 = por %p78, %p79
      %p81 = scmp.ne.s32.totalorder %s67, %s68
      %p82 = scmp.eq.s32.totalorder %s15, 3
      %p83 = por %p81, %p82
      %p85 = scmp.ne.s32.totalorder %s68, %s84
      %p86 = scmp.eq.s32.totalorder %s15, 0
      %p87 = por %p85, %p86
      %s88 = ssub.s32 %s18, %s27
      %p89 = scmp.eq.s32.totalorder %s88, 0
      %s91 = sadd.s32 %s90, 1
      %s92 = scalar_select %p89, %s90, %s91
      %p95 = pneg %p89
      %p96 = scmp.eq.s32.totalorder %s9, 3
      %p97 = por %p95, %p96
      %p98 = scmp.ne.s32.totalorder %s90, %s93
      %p99 = scmp.eq.s32.totalorder %s9, 0
      %p100 = por %p98, %p99
      %p101 = scmp.ne.s32.totalorder %s90, %s93
      %p102 = scmp.eq.s32.totalorder %s14, 3
      %p103 = por %p101, %p102
      %p104 = scmp.ne.s32.totalorder %s93, %s94
      %p105 = scmp.eq.s32.totalorder %s14, 0
      %p106 = por %p104, %p105
      %p107 = scmp.ne.s32.totalorder %s93, %s94
      %p108 = scmp.eq.s32.totalorder %s15, 3
      %p109 = por %p107, %p108
      %p111 = scmp.ne.s32.totalorder %s94, %s110
      %p112 = scmp.eq.s32.totalorder %s15, 0
      %p113 = por %p111, %p112
      %s114 = smul.u32 %s17, %s18
      %s115 = smul.u32 %s31, %s27
      %s116 = ssub.s32 %s16, %s35
      %s117 = ssub.s32 %s114, %s115
      %s118 = sor.u32 %s116, %s117
      %p119 = scmp.eq.s32.totalorder %s118, 0
      %s121 = sadd.s32 %s120, 1
      %s122 = scalar_select %p119, %s120, %s121
      %p125 = pneg %p119
      %p126 = scmp.eq.s32.totalorder %s9, 3
      %p127 = por %p125, %p126
      %p128 = scmp.ne.s32.totalorder %s120, %s123
      %p129 = scmp.eq.s32.totalorder %s9, 0
      %p130 = por %p128, %p129
      %p131 = scmp.ne.s32.totalorder %s120, %s123
      %p132 = scmp.eq.s32.totalorder %s14, 3
      %p133 = por %p131, %p132
      %p134 = scmp.ne.s32.totalorder %s123, %s124
      %p135 = scmp.eq.s32.totalorder %s14, 0
      %p136 = por %p134, %p135
      %p137 = scmp.ne.s32.totalorder %s123, %s124
      %p138 = scmp.eq.s32.totalorder %s15, 3
      %p139 = por %p137, %p138
      %p141 = scmp.ne.s32.totalorder %s124, %s140
      %p142 = scmp.eq.s32.totalorder %s15, 0
      %p143 = por %p141, %p142
      %p144 = scmp.le.s32.totalorder 1, %s9
      %p145 = scmp.lt.s32.totalorder %s9, 5
      %p146 = pnand %p144, %p145
      %p147 = pneg %p146
      // Predicated region
      $region9: #{projection_layer.1} parent=5 // pred_check
        _
      $region10: #{projection_layer.1} parent=5 // pred_check_branch
        %149 = sbr.rel (%p146) target = $region12
      $region11: #{projection_layer.1} parent=5 // pred_region
        %s150 = ssub.s32 %s9, 1
        // Predicated region
        $region13: #{projection_layer.1} parent=11 // pred_check
          %p151 = pneg %p54
        $region14: #{projection_layer.1} parent=11 // pred_check_branch
          %153 = sbr.rel (%p151) target = $region16
        $region15: #{projection_layer.1} parent=11 // pred_region
          %s154 = smul.u32 32, %s19
          %p155 = scmp.lt.s32.totalorder %s154, 31
          %s156 = scalar_select %p155, %s154, 31
          %s157 = smul.addr %s156, 4
          %s158 = scalar_lea.vmem %s0, %s157
          %s159 = smul.u32 32, %s19
        $region16: #{projection_layer.1} parent=11 // pred_fallthru
          _
      $region12: #{projection_layer.1} parent=5 // pred_fallthru
        _
      %p160 = scmp.lt.s32.totalorder %s9, 4
      // Predicated region
      $region17: #{projection_layer.1} parent=5 // pred_check
        %p161 = pneg %p160
      $region18: #{projection_layer.1} parent=5 // pred_check_branch
        %163 = sbr.rel (%p161) target = $region20
      $region19: #{projection_layer.1} parent=5 // pred_region
        // Predicated region
        $region21: #{projection_layer.1} parent=19 // pred_check
          %p164 = pneg %p74
        $region22: #{projection_layer.1} parent=19 // pred_check_branch
          %166 = sbr.rel (%p164) target = $region24
        $region23: #{projection_layer.1} parent=19 // pred_region
          %s167 = smul.u32 64, %s18
          %p168 = scmp.lt.s32.totalorder %s167, 127
          %s169 = scalar_select %p168, %s167, 127
          %s170 = smul.addr %s169, 4
          %s171 = scalar_lea.vmem %s1, %s170
          %s172 = smul.u32 64, %s18
        $region24: #{projection_layer.1} parent=19 // pred_fallthru
          _
        // Predicated region
        $region25: #{projection_layer.1} parent=19 // pred_check
          %p173 = pneg %p100
        $region26: #{projection_layer.1} parent=19 // pred_check_branch
          %175 = sbr.rel (%p173) target = $region28
        $region27: #{projection_layer.1} parent=19 // pred_region
          %s176 = smul.u32 4, %s18
          %p177 = scmp.lt.s32.totalorder %s176, 7
          %s178 = scalar_select %p177, %s176, 7
          %s179 = scalar_lea.vmem %s2, %s178
          %s180 = smul.u32 4, %s18
        $region28: #{projection_layer.1} parent=19 // pred_fallthru
          _
      $region20: #{projection_layer.1} parent=5 // pred_fallthru
        _
      %p181 = scmp.le.s32.totalorder 1, %s9
      %p182 = scmp.lt.s32.totalorder %s9, 5
      %p183 = pnand %p181, %p182
      %p184 = pneg %p183
      // Predicated region
      $region29: #{projection_layer.1} parent=5 // pred_check
        _
      $region30: #{projection_layer.1} parent=5 // pred_check_branch
        %186 = sbr.rel (%p183) target = $region32
      $region31: #{projection_layer.1} parent=5 // pred_region
        %s187 = ssub.s32 %s9, 1
        %s188 = smul.u32 32, %s19
        %p189 = scmp.lt.s32.totalorder %s188, 31
        %s190 = scalar_select %p189, %s188, 31
        %s191 = smul.addr %s190, 4
        %s192 = scalar_lea.vmem %s0, %s191
        %p193 = pneg %p54
        %p194 = pneg %p51
        %s195 = smul.u32 64, %s21
        %p196 = scmp.lt.s32.totalorder %s195, 127
        %s197 = scalar_select %p196, %s195, 127
        %s198 = smul.addr %s197, 4
        %s199 = scalar_lea.vmem %s1, %s198
        %p200 = pneg %p80
        %p201 = pneg %p77
        %s202 = smul.u32 4, %s21
        %p203 = scmp.lt.s32.totalorder %s202, 7
        %s204 = scalar_select %p203, %s202, 7
        %s205 = scalar_lea.vmem %s2, %s204
        %p206 = pneg %p106
        %p207 = pneg %p103
        %p208 = pneg %p136
        %p209 = pneg %p133
        %s210 = sand.u32 %s123, 1
        %s211 = sand.u32 %s123, 1
        %s212 = smul.addr %s211, 1024
        %s213 = scalar_lea.vmem [#allocation4], %s212
        %s214 = smul.u32 32, %s19
        %p215 = scmp.lt.s32.totalorder %s214, 31
        %s216 = scalar_select %p215, %s214, 31
        %s217 = smul.addr %s216, 4
        %s218 = scalar_lea.vmem %s0, %s217
        %s219 = smul.u32 32, %s19
        %s220 = smul.u32 64, %s21
        %p221 = scmp.lt.s32.totalorder %s220, 127
        %s222 = scalar_select %p221, %s220, 127
        %s223 = smul.addr %s222, 4
        %s224 = scalar_lea.vmem %s1, %s223
        %s225 = smul.u32 64, %s21
        %s226 = smul.u32 4, %s21
        %p227 = scmp.lt.s32.totalorder %s226, 7
        %s228 = scalar_select %p227, %s226, 7
        %s229 = scalar_lea.vmem %s2, %s228
        %s230 = smul.u32 4, %s21
        %s231 = smul.u32 %s20, %s21
        %s232 = smul.u32 32, %s19
        %s233 = smul.u32 4, %s231
        %v234 = vld [vmem:[%s218] sm:$0xf]
        %v235 = vld [vmem:[%s218 + $0x4] sm:$0xf]
        %v236 = vld [vmem:[%s218 + $0x8] sm:$0xf]
        %v237 = vld [vmem:[%s218 + $0xc] sm:$0xf]
        %v238 = vld [vmem:[%s218 + $0x10] sm:$0xf]
        %v239 = vld [vmem:[%s218 + $0x14] sm:$0xf]
        %v240 = vld [vmem:[%s218 + $0x18] sm:$0xf]
        %v241 = vld [vmem:[%s218 + $0x1c] sm:$0xf]
        %v242 = vld [vmem:[%s218 + $0x20] sm:$0xf]
        %v243 = vld [vmem:[%s218 + $0x24] sm:$0xf]
        %v244 = vld [vmem:[%s218 + $0x28] sm:$0xf]
        %v245 = vld [vmem:[%s218 + $0x2c] sm:$0xf]
        %v246 = vld [vmem:[%s218 + $0x30] sm:$0xf]
        %v247 = vld [vmem:[%s218 + $0x34] sm:$0xf]
        %v248 = vld [vmem:[%s218 + $0x38] sm:$0xf]
        %v249 = vld [vmem:[%s218 + $0x3c] sm:$0xf]
        %v250 = vld [vmem:[%s218 + $0x40] sm:$0xf]
        %v251 = vld [vmem:[%s218 + $0x44] sm:$0xf]
        %v252 = vld [vmem:[%s218 + $0x48] sm:$0xf]
        %v253 = vld [vmem:[%s218 + $0x4c] sm:$0xf]
        %v254 = vld [vmem:[%s218 + $0x50] sm:$0xf]
        %v255 = vld [vmem:[%s218 + $0x54] sm:$0xf]
        %v256 = vld [vmem:[%s218 + $0x58] sm:$0xf]
        %v257 = vld [vmem:[%s218 + $0x5c] sm:$0xf]
        %v258 = vld [vmem:[%s218 + $0x60] sm:$0xf]
        %v259 = vld [vmem:[%s218 + $0x64] sm:$0xf]
        %v260 = vld [vmem:[%s218 + $0x68] sm:$0xf]
        %v261 = vld [vmem:[%s218 + $0x6c] sm:$0xf]
        %v262 = vld [vmem:[%s218 + $0x70] sm:$0xf]
        %v263 = vld [vmem:[%s218 + $0x74] sm:$0xf]
        %v264 = vld [vmem:[%s218 + $0x78] sm:$0xf]
        %v265 = vld [vmem:[%s218 + $0x7c] sm:$0xf]
        %v266 = vld [vmem:[%s224] sm:$0xf]
        %v267 = vld [vmem:[%s224 + $0x4] sm:$0xf]
        %v268 = vld [vmem:[%s224 + $0x8] sm:$0xf]
        %v269 = vld [vmem:[%s224 + $0xc] sm:$0xf]
        %v270 = vld [vmem:[%s224 + $0x10] sm:$0xf]
        %v271 = vld [vmem:[%s224 + $0x14] sm:$0xf]
        %v272 = vld [vmem:[%s224 + $0x18] sm:$0xf]
        %v273 = vld [vmem:[%s224 + $0x1c] sm:$0xf]
        %v274 = vld [vmem:[%s224 + $0x20] sm:$0xf]
        %v275 = vld [vmem:[%s224 + $0x24] sm:$0xf]
        %v276 = vld [vmem:[%s224 + $0x28] sm:$0xf]
        %v277 = vld [vmem:[%s224 + $0x2c] sm:$0xf]
        %v278 = vld [vmem:[%s224 + $0x30] sm:$0xf]
        %v279 = vld [vmem:[%s224 + $0x34] sm:$0xf]
        %v280 = vld [vmem:[%s224 + $0x38] sm:$0xf]
        %v281 = vld [vmem:[%s224 + $0x3c] sm:$0xf]
        %v282 = vld [vmem:[%s224 + $0x40] sm:$0xf]
        %v283 = vld [vmem:[%s224 + $0x44] sm:$0xf]
        %v284 = vld [vmem:[%s224 + $0x48] sm:$0xf]
        %v285 = vld [vmem:[%s224 + $0x4c] sm:$0xf]
        %v286 = vld [vmem:[%s224 + $0x50] sm:$0xf]
        %v287 = vld [vmem:[%s224 + $0x54] sm:$0xf]
        %v288 = vld [vmem:[%s224 + $0x58] sm:$0xf]
        %v289 = vld [vmem:[%s224 + $0x5c] sm:$0xf]
        %v290 = vld [vmem:[%s224 + $0x60] sm:$0xf]
        %v291 = vld [vmem:[%s224 + $0x64] sm:$0xf]
        %v292 = vld [vmem:[%s224 + $0x68] sm:$0xf]
        %v293 = vld [vmem:[%s224 + $0x6c] sm:$0xf]
        %v294 = vld [vmem:[%s224 + $0x70] sm:$0xf]
        %v295 = vld [vmem:[%s224 + $0x74] sm:$0xf]
        %v296 = vld [vmem:[%s224 + $0x78] sm:$0xf]
        %v297 = vld [vmem:[%s224 + $0x7c] sm:$0xf]
        %v298 = vld [vmem:[%s224 + $0x80] sm:$0xf]
        %v299 = vld [vmem:[%s224 + $0x84] sm:$0xf]
        %v300 = vld [vmem:[%s224 + $0x88] sm:$0xf]
        %v301 = vld [vmem:[%s224 + $0x8c] sm:$0xf]
        %v302 = vld [vmem:[%s224 + $0x90] sm:$0xf]
        %v303 = vld [vmem:[%s224 + $0x94] sm:$0xf]
        %v304 = vld [vmem:[%s224 + $0x98] sm:$0xf]
        %v305 = vld [vmem:[%s224 + $0x9c] sm:$0xf]
        %v306 = vld [vmem:[%s224 + $0xa0] sm:$0xf]
        %v307 = vld [vmem:[%s224 + $0xa4] sm:$0xf]
        %v308 = vld [vmem:[%s224 + $0xa8] sm:$0xf]
        %v309 = vld [vmem:[%s224 + $0xac] sm:$0xf]
        %v310 = vld [vmem:[%s224 + $0xb0] sm:$0xf]
        %v311 = vld [vmem:[%s224 + $0xb4] sm:$0xf]
        %v312 = vld [vmem:[%s224 + $0xb8] sm:$0xf]
        %v313 = vld [vmem:[%s224 + $0xbc] sm:$0xf]
        %v314 = vld [vmem:[%s224 + $0xc0] sm:$0xf]
        %v315 = vld [vmem:[%s224 + $0xc4] sm:$0xf]
        %v316 = vld [vmem:[%s224 + $0xc8] sm:$0xf]
        %v317 = vld [vmem:[%s224 + $0xcc] sm:$0xf]
        %v318 = vld [vmem:[%s224 + $0xd0] sm:$0xf]
        %v319 = vld [vmem:[%s224 + $0xd4] sm:$0xf]
        %v320 = vld [vmem:[%s224 + $0xd8] sm:$0xf]
        %v321 = vld [vmem:[%s224 + $0xdc] sm:$0xf]
        %v322 = vld [vmem:[%s224 + $0xe0] sm:$0xf]
        %v323 = vld [vmem:[%s224 + $0xe4] sm:$0xf]
        %v324 = vld [vmem:[%s224 + $0xe8] sm:$0xf]
        %v325 = vld [vmem:[%s224 + $0xec] sm:$0xf]
        %v326 = vld [vmem:[%s224 + $0xf0] sm:$0xf]
        %v327 = vld [vmem:[%s224 + $0xf4] sm:$0xf]
        %v328 = vld [vmem:[%s224 + $0xf8] sm:$0xf]
        %v329 = vld [vmem:[%s224 + $0xfc] sm:$0xf]
        %v330 = vld [vmem:[%s229] sm:$0xf]
        %v332 = vperm.slane %v330, 0
        %v333 = vperm.slane %v330, 1
        %v334 = vperm.slane %v330, 2
        %v335 = vperm.slane %v330, 3
        %v372 = vunpack.c.l.b16 %v234
        %v373 = vunpack.c.l.b16 %v235
        %v374 = vunpack.c.l.b16 %v236
        %v375 = vunpack.c.l.b16 %v237
        %v376 = vunpack.c.l.b16 %v238
        %v377 = vunpack.c.l.b16 %v239
        %v378 = vunpack.c.l.b16 %v240
        %v379 = vunpack.c.l.b16 %v241
        %v380 = vunpack.c.l.b16 %v242
        %v381 = vunpack.c.l.b16 %v243
        %v382 = vunpack.c.l.b16 %v244
        %v383 = vunpack.c.l.b16 %v245
        %v384 = vunpack.c.l.b16 %v246
        %v385 = vunpack.c.l.b16 %v247
        %v386 = vunpack.c.l.b16 %v248
        %v387 = vunpack.c.l.b16 %v249
        %v388 = vunpack.c.l.b16 %v250
        %v389 = vunpack.c.l.b16 %v251
        %v390 = vunpack.c.l.b16 %v252
        %v391 = vunpack.c.l.b16 %v253
        %v392 = vunpack.c.l.b16 %v254
        %v393 = vunpack.c.l.b16 %v255
        %v394 = vunpack.c.l.b16 %v256
        %v395 = vunpack.c.l.b16 %v257
        %v396 = vunpack.c.l.b16 %v258
        %v397 = vunpack.c.l.b16 %v259
        %v398 = vunpack.c.l.b16 %v260
        %v399 = vunpack.c.l.b16 %v261
        %v400 = vunpack.c.l.b16 %v262
        %v401 = vunpack.c.l.b16 %v263
        %v402 = vunpack.c.l.b16 %v264
        %v403 = vunpack.c.l.b16 %v265
        %v404 = vpack.c.b16 %v373, %v372
        %v405 = vpack.c.b16 %v375, %v374
        %v406 = vpack.c.b16 %v377, %v376
        %v407 = vpack.c.b16 %v379, %v378
        %v408 = vpack.c.b16 %v381, %v380
        %v409 = vpack.c.b16 %v383, %v382
        %v410 = vpack.c.b16 %v385, %v384
        %v411 = vpack.c.b16 %v387, %v386
        %v412 = vpack.c.b16 %v389, %v388
        %v413 = vpack.c.b16 %v391, %v390
        %v414 = vpack.c.b16 %v393, %v392
        %v415 = vpack.c.b16 %v395, %v394
        %v416 = vpack.c.b16 %v397, %v396
        %v417 = vpack.c.b16 %v399, %v398
        %v418 = vpack.c.b16 %v401, %v400
        %v419 = vpack.c.b16 %v403, %v402
        %v484 = vunpack.c.l.b16 %v266
        %v485 = vunpack.c.l.b16 %v267
        %v486 = vunpack.c.l.b16 %v268
        %v487 = vunpack.c.l.b16 %v269
        %v488 = vunpack.c.l.b16 %v270
        %v489 = vunpack.c.l.b16 %v271
        %v490 = vunpack.c.l.b16 %v272
        %v491 = vunpack.c.l.b16 %v273
        %v492 = vunpack.c.l.b16 %v274
        %v493 = vunpack.c.l.b16 %v275
        %v494 = vunpack.c.l.b16 %v276
        %v495 = vunpack.c.l.b16 %v277
        %v496 = vunpack.c.l.b16 %v278
        %v497 = vunpack.c.l.b16 %v279
        %v498 = vunpack.c.l.b16 %v280
        %v499 = vunpack.c.l.b16 %v281
        %v500 = vunpack.c.l.b16 %v282
        %v501 = vunpack.c.l.b16 %v283
        %v502 = vunpack.c.l.b16 %v284
        %v503 = vunpack.c.l.b16 %v285
        %v504 = vunpack.c.l.b16 %v286
        %v505 = vunpack.c.l.b16 %v287
        %v506 = vunpack.c.l.b16 %v288
        %v507 = vunpack.c.l.b16 %v289
        %v508 = vunpack.c.l.b16 %v290
        %v509 = vunpack.c.l.b16 %v291
        %v510 = vunpack.c.l.b16 %v292
        %v511 = vunpack.c.l.b16 %v293
        %v512 = vunpack.c.l.b16 %v294
        %v513 = vunpack.c.l.b16 %v295
        %v514 = vunpack.c.l.b16 %v296
        %v515 = vunpack.c.l.b16 %v297
        %v516 = vunpack.c.l.b16 %v298
        %v517 = vunpack.c.l.b16 %v299
        %v518 = vunpack.c.l.b16 %v300
        %v519 = vunpack.c.l.b16 %v301
        %v520 = vunpack.c.l.b16 %v302
        %v521 = vunpack.c.l.b16 %v303
        %v522 = vunpack.c.l.b16 %v304
        %v523 = vunpack.c.l.b16 %v305
        %v524 = vunpack.c.l.b16 %v306
        %v525 = vunpack.c.l.b16 %v307
        %v526 = vunpack.c.l.b16 %v308
        %v527 = vunpack.c.l.b16 %v309
        %v528 = vunpack.c.l.b16 %v310
        %v529 = vunpack.c.l.b16 %v311
        %v530 = vunpack.c.l.b16 %v312
        %v531 = vunpack.c.l.b16 %v313
        %v532 = vunpack.c.l.b16 %v314
        %v533 = vunpack.c.l.b16 %v315
        %v534 = vunpack.c.l.b16 %v316
        %v535 = vunpack.c.l.b16 %v317
        %v536 = vunpack.c.l.b16 %v318
        %v537 = vunpack.c.l.b16 %v319
        %v538 = vunpack.c.l.b16 %v320
        %v539 = vunpack.c.l.b16 %v321
        %v540 = vunpack.c.l.b16 %v322
        %v541 = vunpack.c.l.b16 %v323
        %v542 = vunpack.c.l.b16 %v324
        %v543 = vunpack.c.l.b16 %v325
        %v544 = vunpack.c.l.b16 %v326
        %v545 = vunpack.c.l.b16 %v327
        %v546 = vunpack.c.l.b16 %v328
        %v547 = vunpack.c.l.b16 %v329
        %v548 = vpack.c.b16 %v485, %v484
        %v549 = vpack.c.b16 %v487, %v486
        %v550 = vpack.c.b16 %v489, %v488
        %v551 = vpack.c.b16 %v491, %v490
        %v552 = vpack.c.b16 %v493, %v492
        %v553 = vpack.c.b16 %v495, %v494
        %v554 = vpack.c.b16 %v497, %v496
        %v555 = vpack.c.b16 %v499, %v498
        %v556 = vpack.c.b16 %v501, %v500
        %v557 = vpack.c.b16 %v503, %v502
        %v558 = vpack.c.b16 %v505, %v504
        %v559 = vpack.c.b16 %v507, %v506
        %v560 = vpack.c.b16 %v509, %v508
        %v561 = vpack.c.b16 %v511, %v510
        %v562 = vpack.c.b16 %v513, %v512
        %v563 = vpack.c.b16 %v515, %v514
        %v564 = vpack.c.b16 %v517, %v516
        %v565 = vpack.c.b16 %v519, %v518
        %v566 = vpack.c.b16 %v521, %v520
        %v567 = vpack.c.b16 %v523, %v522
        %v568 = vpack.c.b16 %v525, %v524
        %v569 = vpack.c.b16 %v527, %v526
        %v570 = vpack.c.b16 %v529, %v528
        %v571 = vpack.c.b16 %v531, %v530
        %v572 = vpack.c.b16 %v533, %v532
        %v573 = vpack.c.b16 %v535, %v534
        %v574 = vpack.c.b16 %v537, %v536
        %v575 = vpack.c.b16 %v539, %v538
        %v576 = vpack.c.b16 %v541, %v540
        %v577 = vpack.c.b16 %v543, %v542
        %v578 = vpack.c.b16 %v545, %v544
        %v579 = vpack.c.b16 %v547, %v546
        %vm580 = vcmask 261120
        %v582 = vsel %vm580, %v404, 0
        %v585 = vsel %vm580, %v405, 0
        %v588 = vsel %vm580, %v406, 0
        %v591 = vsel %vm580, %v407, 0
        %v594 = vsel %vm580, %v408, 0
        %v597 = vsel %vm580, %v409, 0
        %v600 = vsel %vm580, %v410, 0
        %v603 = vsel %vm580, %v411, 0
        %v606 = vsel %vm580, %v412, 0
        %v609 = vsel %vm580, %v413, 0
        %v612 = vsel %vm580, %v414, 0
        %v615 = vsel %vm580, %v415, 0
        %v618 = vsel %vm580, %v416, 0
        %v621 = vsel %vm580, %v417, 0
        %v624 = vsel %vm580, %v418, 0
        %v627 = vsel %vm580, %v419, 0
        %v630 = vsel %vm580, %v548, 0
        %v633 = vsel %vm580, %v549, 0
        %v636 = vsel %vm580, %v550, 0
        %v639 = vsel %vm580, %v551, 0
        %v642 = vsel %vm580, %v552, 0
        %v645 = vsel %vm580, %v553, 0
        %v648 = vsel %vm580, %v554, 0
        %v651 = vsel %vm580, %v555, 0
        %v654 = vsel %vm580, %v556, 0
        %v657 = vsel %vm580, %v557, 0
        %v660 = vsel %vm580, %v558, 0
        %v663 = vsel %vm580, %v559, 0
        %v666 = vsel %vm580, %v560, 0
        %v669 = vsel %vm580, %v561, 0
        %v672 = vsel %vm580, %v562, 0
        %v675 = vsel %vm580, %v563, 0
        %v678 = vsel %vm580, %v564, 0
        %v681 = vsel %vm580, %v565, 0
        %v684 = vsel %vm580, %v566, 0
        %v687 = vsel %vm580, %v567, 0
        %v690 = vsel %vm580, %v568, 0
        %v693 = vsel %vm580, %v569, 0
        %v696 = vsel %vm580, %v570, 0
        %v699 = vsel %vm580, %v571, 0
        %v702 = vsel %vm580, %v572, 0
        %v705 = vsel %vm580, %v573, 0
        %v708 = vsel %vm580, %v574, 0
        %v711 = vsel %vm580, %v575, 0
        %v714 = vsel %vm580, %v576, 0
        %v717 = vsel %vm580, %v577, 0
        %v720 = vsel %vm580, %v578, 0
        %v723 = vsel %vm580, %v579, 0
        %725 = vmatpush.bf16.xpose.msra.mxu0 %v651
        %726 = vmatpush.bf16.xpose.msra.mxu0 %v648
        %727 = vmatpush.bf16.xpose.msra.mxu0 %v645
        %728 = vmatpush.bf16.xpose.msra.mxu0 %v642
        %729 = vmatpush.bf16.xpose.msra.mxu0 %v639
        %730 = vmatpush.bf16.xpose.msra.mxu0 %v636
        %731 = vmatpush.bf16.xpose.msra.mxu0 %v633
        %732 = vmatpush.bf16.xpose.msra.mxu0 %v630
        %733 = vmatmul.bf16.gmra.mxu0 %v582
        %v734 = vpop.f32.mrf.mxu0
        %v735 = vadd.f32 %v332, %v734
        %v736 = vpop.f32.mrf.mxu0
        %v737 = vadd.f32 %v332, %v736
        %738 = vmatmul.bf16.gmra.mxu0 %v585
        %v739 = vpop.f32.mrf.mxu0
        %v740 = vadd.f32 %v332, %v739
        %v741 = vpop.f32.mrf.mxu0
        %v742 = vadd.f32 %v332, %v741
        %743 = vmatmul.bf16.gmra.mxu0 %v588
        %v744 = vpop.f32.mrf.mxu0
        %v745 = vadd.f32 %v332, %v744
        %v746 = vpop.f32.mrf.mxu0
        %v747 = vadd.f32 %v332, %v746
        %748 = vmatmul.bf16.gmra.mxu0 %v591
        %v749 = vpop.f32.mrf.mxu0
        %v750 = vadd.f32 %v332, %v749
        %v751 = vpop.f32.mrf.mxu0
        %v752 = vadd.f32 %v332, %v751
        %753 = vmatmul.bf16.gmra.mxu0 %v594
        %v754 = vpop.f32.mrf.mxu0
        %v755 = vadd.f32 %v332, %v754
        %v756 = vpop.f32.mrf.mxu0
        %v757 = vadd.f32 %v332, %v756
        %758 = vmatmul.bf16.gmra.mxu0 %v597
        %v759 = vpop.f32.mrf.mxu0
        %v760 = vadd.f32 %v332, %v759
        %v761 = vpop.f32.mrf.mxu0
        %v762 = vadd.f32 %v332, %v761
        %763 = vmatmul.bf16.gmra.mxu0 %v600
        %v764 = vpop.f32.mrf.mxu0
        %v765 = vadd.f32 %v332, %v764
        %v766 = vpop.f32.mrf.mxu0
        %v767 = vadd.f32 %v332, %v766
        %768 = vmatmul.bf16.gmra.mxu0 %v603
        %v769 = vpop.f32.mrf.mxu0
        %v770 = vadd.f32 %v332, %v769
        %v771 = vpop.f32.mrf.mxu0
        %v772 = vadd.f32 %v332, %v771
        %773 = vmatmul.bf16.gmra.mxu0 %v606
        %v774 = vpop.f32.mrf.mxu0
        %v775 = vadd.f32 %v332, %v774
        %v776 = vpop.f32.mrf.mxu0
        %v777 = vadd.f32 %v332, %v776
        %778 = vmatmul.bf16.gmra.mxu0 %v609
        %v779 = vpop.f32.mrf.mxu0
        %v780 = vadd.f32 %v332, %v779
        %v781 = vpop.f32.mrf.mxu0
        %v782 = vadd.f32 %v332, %v781
        %783 = vmatmul.bf16.gmra.mxu0 %v612
        %v784 = vpop.f32.mrf.mxu0
        %v785 = vadd.f32 %v332, %v784
        %v786 = vpop.f32.mrf.mxu0
        %v787 = vadd.f32 %v332, %v786
        %788 = vmatmul.bf16.gmra.mxu0 %v615
        %v789 = vpop.f32.mrf.mxu0
        %v790 = vadd.f32 %v332, %v789
        %v791 = vpop.f32.mrf.mxu0
        %v792 = vadd.f32 %v332, %v791
        %793 = vmatmul.bf16.gmra.mxu0 %v618
        %v794 = vpop.f32.mrf.mxu0
        %v795 = vadd.f32 %v332, %v794
        %v796 = vpop.f32.mrf.mxu0
        %v797 = vadd.f32 %v332, %v796
        %798 = vmatmul.bf16.gmra.mxu0 %v621
        %v799 = vpop.f32.mrf.mxu0
        %v800 = vadd.f32 %v332, %v799
        %v801 = vpop.f32.mrf.mxu0
        %v802 = vadd.f32 %v332, %v801
        %803 = vmatmul.bf16.gmra.mxu0 %v624
        %v804 = vpop.f32.mrf.mxu0
        %v805 = vadd.f32 %v332, %v804
        %v806 = vpop.f32.mrf.mxu0
        %v807 = vadd.f32 %v332, %v806
        %808 = vmatmul.bf16.gmra.mxu0 %v627
        %v809 = vpop.f32.mrf.mxu0
        %v810 = vadd.f32 %v332, %v809
        %v811 = vpop.f32.mrf.mxu0
        %v812 = vadd.f32 %v332, %v811
        %813 = vdwg.mxu0
        %814 = vmatpush.bf16.xpose.msra.mxu0 %v675
        %815 = vmatpush.bf16.xpose.msra.mxu0 %v672
        %816 = vmatpush.bf16.xpose.msra.mxu0 %v669
        %817 = vmatpush.bf16.xpose.msra.mxu0 %v666
        %818 = vmatpush.bf16.xpose.msra.mxu0 %v663
        %819 = vmatpush.bf16.xpose.msra.mxu0 %v660
        %820 = vmatpush.bf16.xpose.msra.mxu0 %v657
        %821 = vmatpush.bf16.xpose.msra.mxu0 %v654
        %822 = vmatmul.bf16.gmra.mxu0 %v582
        %v823 = vpop.f32.mrf.mxu0
        %v824 = vadd.f32 %v333, %v823
        %v825 = vpop.f32.mrf.mxu0
        %v826 = vadd.f32 %v333, %v825
        %827 = vmatmul.bf16.gmra.mxu0 %v585
        %v828 = vpop.f32.mrf.mxu0
        %v829 = vadd.f32 %v333, %v828
        %v830 = vpop.f32.mrf.mxu0
        %v831 = vadd.f32 %v333, %v830
        %832 = vmatmul.bf16.gmra.mxu0 %v588
        %v833 = vpop.f32.mrf.mxu0
        %v834 = vadd.f32 %v333, %v833
        %v835 = vpop.f32.mrf.mxu0
        %v836 = vadd.f32 %v333, %v835
        %837 = vmatmul.bf16.gmra.mxu0 %v591
        %v838 = vpop.f32.mrf.mxu0
        %v839 = vadd.f32 %v333, %v838
        %v840 = vpop.f32.mrf.mxu0
        %v841 = vadd.f32 %v333, %v840
        %842 = vmatmul.bf16.gmra.mxu0 %v594
        %v843 = vpop.f32.mrf.mxu0
        %v844 = vadd.f32 %v333, %v843
        %v845 = vpop.f32.mrf.mxu0
        %v846 = vadd.f32 %v333, %v845
        %847 = vmatmul.bf16.gmra.mxu0 %v597
        %v848 = vpop.f32.mrf.mxu0
        %v849 = vadd.f32 %v333, %v848
        %v850 = vpop.f32.mrf.mxu0
        %v851 = vadd.f32 %v333, %v850
        %852 = vmatmul.bf16.gmra.mxu0 %v600
        %v853 = vpop.f32.mrf.mxu0
        %v854 = vadd.f32 %v333, %v853
        %v855 = vpop.f32.mrf.mxu0
        %v856 = vadd.f32 %v333, %v855
        %857 = vmatmul.bf16.gmra.mxu0 %v603
        %v858 = vpop.f32.mrf.mxu0
        %v859 = vadd.f32 %v333, %v858
        %v860 = vpop.f32.mrf.mxu0
        %v861 = vadd.f32 %v333, %v860
        %862 = vmatmul.bf16.gmra.mxu0 %v606
        %v863 = vpop.f32.mrf.mxu0
        %v864 = vadd.f32 %v333, %v863
        %v865 = vpop.f32.mrf.mxu0
        %v866 = vadd.f32 %v333, %v865
        %867 = vmatmul.bf16.gmra.mxu0 %v609
        %v868 = vpop.f32.mrf.mxu0
        %v869 = vadd.f32 %v333, %v868
        %v870 = vpop.f32.mrf.mxu0
        %v871 = vadd.f32 %v333, %v870
        %872 = vmatmul.bf16.gmra.mxu0 %v612
        %v873 = vpop.f32.mrf.mxu0
        %v874 = vadd.f32 %v333, %v873
        %v875 = vpop.f32.mrf.mxu0
        %v876 = vadd.f32 %v333, %v875
        %877 = vmatmul.bf16.gmra.mxu0 %v615
        %v878 = vpop.f32.mrf.mxu0
        %v879 = vadd.f32 %v333, %v878
        %v880 = vpop.f32.mrf.mxu0
        %v881 = vadd.f32 %v333, %v880
        %882 = vmatmul.bf16.gmra.mxu0 %v618
        %v883 = vpop.f32.mrf.mxu0
        %v884 = vadd.f32 %v333, %v883
        %v885 = vpop.f32.mrf.mxu0
        %v886 = vadd.f32 %v333, %v885
        %887 = vmatmul.bf16.gmra.mxu0 %v621
        %v888 = vpop.f32.mrf.mxu0
        %v889 = vadd.f32 %v333, %v888
        %v890 = vpop.f32.mrf.mxu0
        %v891 = vadd.f32 %v333, %v890
        %892 = vmatmul.bf16.gmra.mxu0 %v624
        %v893 = vpop.f32.mrf.mxu0
        %v894 = vadd.f32 %v333, %v893
        %v895 = vpop.f32.mrf.mxu0
        %v896 = vadd.f32 %v333, %v895
        %897 = vmatmul.bf16.gmra.mxu0 %v627
        %v898 = vpop.f32.mrf.mxu0
        %v899 = vadd.f32 %v333, %v898
        %v900 = vpop.f32.mrf.mxu0
        %v901 = vadd.f32 %v333, %v900
        %902 = vdwg.mxu0
        %903 = vmatpush.bf16.xpose.msra.mxu0 %v699
        %904 = vmatpush.bf16.xpose.msra.mxu0 %v696
        %905 = vmatpush.bf16.xpose.msra.mxu0 %v693
        %906 = vmatpush.bf16.xpose.msra.mxu0 %v690
        %907 = vmatpush.bf16.xpose.msra.mxu0 %v687
        %908 = vmatpush.bf16.xpose.msra.mxu0 %v684
        %909 = vmatpush.bf16.xpose.msra.mxu0 %v681
        %910 = vmatpush.bf16.xpose.msra.mxu0 %v678
        %911 = vmatmul.bf16.gmra.mxu0 %v582
        %v912 = vpop.f32.mrf.mxu0
        %v913 = vadd.f32 %v334, %v912
        %v914 = vpop.f32.mrf.mxu0
        %v915 = vadd.f32 %v334, %v914
        %916 = vmatmul.bf16.gmra.mxu0 %v585
        %v917 = vpop.f32.mrf.mxu0
        %v918 = vadd.f32 %v334, %v917
        %v919 = vpop.f32.mrf.mxu0
        %v920 = vadd.f32 %v334, %v919
        %921 = vmatmul.bf16.gmra.mxu0 %v588
        %v922 = vpop.f32.mrf.mxu0
        %v923 = vadd.f32 %v334, %v922
        %v924 = vpop.f32.mrf.mxu0
        %v925 = vadd.f32 %v334, %v924
        %926 = vmatmul.bf16.gmra.mxu0 %v591
        %v927 = vpop.f32.mrf.mxu0
        %v928 = vadd.f32 %v334, %v927
        %v929 = vpop.f32.mrf.mxu0
        %v930 = vadd.f32 %v334, %v929
        %931 = vmatmul.bf16.gmra.mxu0 %v594
        %v932 = vpop.f32.mrf.mxu0
        %v933 = vadd.f32 %v334, %v932
        %v934 = vpop.f32.mrf.mxu0
        %v935 = vadd.f32 %v334, %v934
        %936 = vmatmul.bf16.gmra.mxu0 %v597
        %v937 = vpop.f32.mrf.mxu0
        %v938 = vadd.f32 %v334, %v937
        %v939 = vpop.f32.mrf.mxu0
        %v940 = vadd.f32 %v334, %v939
        %941 = vmatmul.bf16.gmra.mxu0 %v600
        %v942 = vpop.f32.mrf.mxu0
        %v943 = vadd.f32 %v334, %v942
        %v944 = vpop.f32.mrf.mxu0
        %v945 = vadd.f32 %v334, %v944
        %946 = vmatmul.bf16.gmra.mxu0 %v603
        %v947 = vpop.f32.mrf.mxu0
        %v948 = vadd.f32 %v334, %v947
        %v949 = vpop.f32.mrf.mxu0
        %v950 = vadd.f32 %v334, %v949
        %951 = vmatmul.bf16.gmra.mxu0 %v606
        %v952 = vpop.f32.mrf.mxu0
        %v953 = vadd.f32 %v334, %v952
        %v954 = vpop.f32.mrf.mxu0
        %v955 = vadd.f32 %v334, %v954
        %956 = vmatmul.bf16.gmra.mxu0 %v609
        %v957 = vpop.f32.mrf.mxu0
        %v958 = vadd.f32 %v334, %v957
        %v959 = vpop.f32.mrf.mxu0
        %v960 = vadd.f32 %v334, %v959
        %961 = vmatmul.bf16.gmra.mxu0 %v612
        %v962 = vpop.f32.mrf.mxu0
        %v963 = vadd.f32 %v334, %v962
        %v964 = vpop.f32.mrf.mxu0
        %v965 = vadd.f32 %v334, %v964
        %966 = vmatmul.bf16.gmra.mxu0 %v615
        %v967 = vpop.f32.mrf.mxu0
        %v968 = vadd.f32 %v334, %v967
        %v969 = vpop.f32.mrf.mxu0
        %v970 = vadd.f32 %v334, %v969
        %971 = vmatmul.bf16.gmra.mxu0 %v618
        %v972 = vpop.f32.mrf.mxu0
        %v973 = vadd.f32 %v334, %v972
        %v974 = vpop.f32.mrf.mxu0
        %v975 = vadd.f32 %v334, %v974
        %976 = vmatmul.bf16.gmra.mxu0 %v621
        %v977 = vpop.f32.mrf.mxu0
        %v978 = vadd.f32 %v334, %v977
        %v979 = vpop.f32.mrf.mxu0
        %v980 = vadd.f32 %v334, %v979
        %981 = vmatmul.bf16.gmra.mxu0 %v624
        %v982 = vpop.f32.mrf.mxu0
        %v983 = vadd.f32 %v334, %v982
        %v984 = vpop.f32.mrf.mxu0
        %v985 = vadd.f32 %v334, %v984
        %986 = vmatmul.bf16.gmra.mxu0 %v627
        %v987 = vpop.f32.mrf.mxu0
        %v988 = vadd.f32 %v334, %v987
        %v989 = vpop.f32.mrf.mxu0
        %v990 = vadd.f32 %v334, %v989
        %991 = vdwg.mxu0
        %992 = vmatpush.bf16.xpose.msra.mxu0 %v723
        %993 = vmatpush.bf16.xpose.msra.mxu0 %v720
        %994 = vmatpush.bf16.xpose.msra.mxu0 %v717
        %995 = vmatpush.bf16.xpose.msra.mxu0 %v714
        %996 = vmatpush.bf16.xpose.msra.mxu0 %v711
        %997 = vmatpush.bf16.xpose.msra.mxu0 %v708
        %998 = vmatpush.bf16.xpose.msra.mxu0 %v705
        %999 = vmatpush.bf16.xpose.msra.mxu0 %v702
        %1000 = vmatmul.bf16.gmra.mxu0 %v582
        %v1001 = vpop.f32.mrf.mxu0
        %v1002 = vadd.f32 %v335, %v1001
        %v1003 = vpop.f32.mrf.mxu0
        %v1004 = vadd.f32 %v335, %v1003
        %1005 = vmatmul.bf16.gmra.mxu0 %v585
        %v1006 = vpop.f32.mrf.mxu0
        %v1007 = vadd.f32 %v335, %v1006
        %v1008 = vpop.f32.mrf.mxu0
        %v1009 = vadd.f32 %v335, %v1008
        %1010 = vmatmul.bf16.gmra.mxu0 %v588
        %v1011 = vpop.f32.mrf.mxu0
        %v1012 = vadd.f32 %v335, %v1011
        %v1013 = vpop.f32.mrf.mxu0
        %v1014 = vadd.f32 %v335, %v1013
        %1015 = vmatmul.bf16.gmra.mxu0 %v591
        %v1016 = vpop.f32.mrf.mxu0
        %v1017 = vadd.f32 %v335, %v1016
        %v1018 = vpop.f32.mrf.mxu0
        %v1019 = vadd.f32 %v335, %v1018
        %1020 = vmatmul.bf16.gmra.mxu0 %v594
        %v1021 = vpop.f32.mrf.mxu0
        %v1022 = vadd.f32 %v335, %v1021
        %v1023 = vpop.f32.mrf.mxu0
        %v1024 = vadd.f32 %v335, %v1023
        %1025 = vmatmul.bf16.gmra.mxu0 %v597
        %v1026 = vpop.f32.mrf.mxu0
        %v1027 = vadd.f32 %v335, %v1026
        %v1028 = vpop.f32.mrf.mxu0
        %v1029 = vadd.f32 %v335, %v1028
        %1030 = vmatmul.bf16.gmra.mxu0 %v600
        %v1031 = vpop.f32.mrf.mxu0
        %v1032 = vadd.f32 %v335, %v1031
        %v1033 = vpop.f32.mrf.mxu0
        %v1034 = vadd.f32 %v335, %v1033
        %1035 = vmatmul.bf16.gmra.mxu0 %v603
        %v1036 = vpop.f32.mrf.mxu0
        %v1037 = vadd.f32 %v335, %v1036
        %v1038 = vpop.f32.mrf.mxu0
        %v1039 = vadd.f32 %v335, %v1038
        %1040 = vmatmul.bf16.gmra.mxu0 %v606
        %v1041 = vpop.f32.mrf.mxu0
        %v1042 = vadd.f32 %v335, %v1041
        %v1043 = vpop.f32.mrf.mxu0
        %v1044 = vadd.f32 %v335, %v1043
        %1045 = vmatmul.bf16.gmra.mxu0 %v609
        %v1046 = vpop.f32.mrf.mxu0
        %v1047 = vadd.f32 %v335, %v1046
        %v1048 = vpop.f32.mrf.mxu0
        %v1049 = vadd.f32 %v335, %v1048
        %1050 = vmatmul.bf16.gmra.mxu0 %v612
        %v1051 = vpop.f32.mrf.mxu0
        %v1052 = vadd.f32 %v335, %v1051
        %v1053 = vpop.f32.mrf.mxu0
        %v1054 = vadd.f32 %v335, %v1053
        %1055 = vmatmul.bf16.gmra.mxu0 %v615
        %v1056 = vpop.f32.mrf.mxu0
        %v1057 = vadd.f32 %v335, %v1056
        %v1058 = vpop.f32.mrf.mxu0
        %v1059 = vadd.f32 %v335, %v1058
        %1060 = vmatmul.bf16.gmra.mxu0 %v618
        %v1061 = vpop.f32.mrf.mxu0
        %v1062 = vadd.f32 %v335, %v1061
        %v1063 = vpop.f32.mrf.mxu0
        %v1064 = vadd.f32 %v335, %v1063
        %1065 = vmatmul.bf16.gmra.mxu0 %v621
        %v1066 = vpop.f32.mrf.mxu0
        %v1067 = vadd.f32 %v335, %v1066
        %v1068 = vpop.f32.mrf.mxu0
        %v1069 = vadd.f32 %v335, %v1068
        %1070 = vmatmul.bf16.gmra.mxu0 %v624
        %v1071 = vpop.f32.mrf.mxu0
        %v1072 = vadd.f32 %v335, %v1071
        %v1073 = vpop.f32.mrf.mxu0
        %v1074 = vadd.f32 %v335, %v1073
        %1075 = vmatmul.bf16.gmra.mxu0 %v627
        %v1076 = vpop.f32.mrf.mxu0
        %v1077 = vadd.f32 %v335, %v1076
        %v1078 = vpop.f32.mrf.mxu0
        %v1079 = vadd.f32 %v335, %v1078
        %1080 = vdwg.mxu0
        %p1081 = scmp.eq.s32.totalorder %s20, 0
        %p1082 = scmp.eq.s32.totalorder %s21, 0
        %p1083 = pnand %p1081, %p1082
        %p1084 = pneg %p1083
        // Predicated region
        $region33: #{projection_layer.1} parent=31 // pred_check
          _
        $region34: #{projection_layer.1} parent=31 // pred_check_branch
          %1086 = sbr.rel (%p1083) target = $region36
        $region35: #{projection_layer.1} parent=31 // pred_region
          %vm1087 = vcmask 7168
          %1088 = vst.msk [vmem:[#allocation2] sm:$0xff] %vm1087, -inf
          %1089 = vst.msk [vmem:[#allocation2 + $0x8] sm:$0xff] %vm1087, -inf
          %1090 = vst.msk [vmem:[#allocation2 + $0x10] sm:$0xff] %vm1087, -inf
          %1091 = vst.msk [vmem:[#allocation2 + $0x18] sm:$0xff] %vm1087, -inf
          %1092 = vst.msk [vmem:[#allocation2 + $0x20] sm:$0xff] %vm1087, -inf
          %1093 = vst.msk [vmem:[#allocation2 + $0x28] sm:$0xff] %vm1087, -inf
          %1094 = vst.msk [vmem:[#allocation2 + $0x30] sm:$0xff] %vm1087, -inf
          %1095 = vst.msk [vmem:[#allocation2 + $0x38] sm:$0xff] %vm1087, -inf
          %1096 = vst.msk [vmem:[#allocation2 + $0x40] sm:$0xff] %vm1087, -inf
          %1097 = vst.msk [vmem:[#allocation2 + $0x48] sm:$0xff] %vm1087, -inf
          %1098 = vst.msk [vmem:[#allocation2 + $0x50] sm:$0xff] %vm1087, -inf
          %1099 = vst.msk [vmem:[#allocation2 + $0x58] sm:$0xff] %vm1087, -inf
          %1100 = vst.msk [vmem:[#allocation2 + $0x60] sm:$0xff] %vm1087, -inf
          %1101 = vst.msk [vmem:[#allocation2 + $0x68] sm:$0xff] %vm1087, -inf
          %1102 = vst.msk [vmem:[#allocation2 + $0x70] sm:$0xff] %vm1087, -inf
          %1103 = vst.msk [vmem:[#allocation2 + $0x78] sm:$0xff] %vm1087, -inf
          %1104 = vst.msk [vmem:[#allocation2 + $0x80] sm:$0xff] %vm1087, -inf
          %1105 = vst.msk [vmem:[#allocation2 + $0x88] sm:$0xff] %vm1087, -inf
          %1106 = vst.msk [vmem:[#allocation2 + $0x90] sm:$0xff] %vm1087, -inf
          %1107 = vst.msk [vmem:[#allocation2 + $0x98] sm:$0xff] %vm1087, -inf
          %1108 = vst.msk [vmem:[#allocation2 + $0xa0] sm:$0xff] %vm1087, -inf
          %1109 = vst.msk [vmem:[#allocation2 + $0xa8] sm:$0xff] %vm1087, -inf
          %1110 = vst.msk [vmem:[#allocation2 + $0xb0] sm:$0xff] %vm1087, -inf
          %1111 = vst.msk [vmem:[#allocation2 + $0xb8] sm:$0xff] %vm1087, -inf
          %1112 = vst.msk [vmem:[#allocation2 + $0xc0] sm:$0xff] %vm1087, -inf
          %1113 = vst.msk [vmem:[#allocation2 + $0xc8] sm:$0xff] %vm1087, -inf
          %1114 = vst.msk [vmem:[#allocation2 + $0xd0] sm:$0xff] %vm1087, -inf
          %1115 = vst.msk [vmem:[#allocation2 + $0xd8] sm:$0xff] %vm1087, -inf
          %1116 = vst.msk [vmem:[#allocation2 + $0xe0] sm:$0xff] %vm1087, -inf
          %1117 = vst.msk [vmem:[#allocation2 + $0xe8] sm:$0xff] %vm1087, -inf
          %1118 = vst.msk [vmem:[#allocation2 + $0xf0] sm:$0xff] %vm1087, -inf
          %1119 = vst.msk [vmem:[#allocation2 + $0xf8] sm:$0xff] %vm1087, -inf
          %1120 = vst.msk [vmem:[#allocation3] sm:$0xff] %vm1087, 0.0
          %1121 = vst.msk [vmem:[#allocation3 + $0x8] sm:$0xff] %vm1087, 0.0
          %1122 = vst.msk [vmem:[#allocation3 + $0x10] sm:$0xff] %vm1087, 0.0
          %1123 = vst.msk [vmem:[#allocation3 + $0x18] sm:$0xff] %vm1087, 0.0
          %1124 = vst.msk [vmem:[#allocation3 + $0x20] sm:$0xff] %vm1087, 0.0
          %1125 = vst.msk [vmem:[#allocation3 + $0x28] sm:$0xff] %vm1087, 0.0
          %1126 = vst.msk [vmem:[#allocation3 + $0x30] sm:$0xff] %vm1087, 0.0
          %1127 = vst.msk [vmem:[#allocation3 + $0x38] sm:$0xff] %vm1087, 0.0
          %1128 = vst.msk [vmem:[#allocation3 + $0x40] sm:$0xff] %vm1087, 0.0
          %1129 = vst.msk [vmem:[#allocation3 + $0x48] sm:$0xff] %vm1087, 0.0
          %1130 = vst.msk [vmem:[#allocation3 + $0x50] sm:$0xff] %vm1087, 0.0
          %1131 = vst.msk [vmem:[#allocation3 + $0x58] sm:$0xff] %vm1087, 0.0
          %1132 = vst.msk [vmem:[#allocation3 + $0x60] sm:$0xff] %vm1087, 0.0
          %1133 = vst.msk [vmem:[#allocation3 + $0x68] sm:$0xff] %vm1087, 0.0
          %1134 = vst.msk [vmem:[#allocation3 + $0x70] sm:$0xff] %vm1087, 0.0
          %1135 = vst.msk [vmem:[#allocation3 + $0x78] sm:$0xff] %vm1087, 0.0
          %1136 = vst.msk [vmem:[#allocation3 + $0x80] sm:$0xff] %vm1087, 0.0
          %1137 = vst.msk [vmem:[#allocation3 + $0x88] sm:$0xff] %vm1087, 0.0
          %1138 = vst.msk [vmem:[#allocation3 + $0x90] sm:$0xff] %vm1087, 0.0
          %1139 = vst.msk [vmem:[#allocation3 + $0x98] sm:$0xff] %vm1087, 0.0
          %1140 = vst.msk [vmem:[#allocation3 + $0xa0] sm:$0xff] %vm1087, 0.0
          %1141 = vst.msk [vmem:[#allocation3 + $0xa8] sm:$0xff] %vm1087, 0.0
          %1142 = vst.msk [vmem:[#allocation3 + $0xb0] sm:$0xff] %vm1087, 0.0
          %1143 = vst.msk [vmem:[#allocation3 + $0xb8] sm:$0xff] %vm1087, 0.0
          %1144 = vst.msk [vmem:[#allocation3 + $0xc0] sm:$0xff] %vm1087, 0.0
          %1145 = vst.msk [vmem:[#allocation3 + $0xc8] sm:$0xff] %vm1087, 0.0
          %1146 = vst.msk [vmem:[#allocation3 + $0xd0] sm:$0xff] %vm1087, 0.0
          %1147 = vst.msk [vmem:[#allocation3 + $0xd8] sm:$0xff] %vm1087, 0.0
          %1148 = vst.msk [vmem:[#allocation3 + $0xe0] sm:$0xff] %vm1087, 0.0
          %1149 = vst.msk [vmem:[#allocation3 + $0xe8] sm:$0xff] %vm1087, 0.0
          %1150 = vst.msk [vmem:[#allocation3 + $0xf0] sm:$0xff] %vm1087, 0.0
          %1151 = vst.msk [vmem:[#allocation3 + $0xf8] sm:$0xff] %vm1087, 0.0
        $region36: #{projection_layer.1} parent=31 // pred_fallthru
          _
        // Predicated region
        $region37: #{projection_layer.1} parent=31 // pred_check
          %p1152 = pneg %p1081
        $region38: #{projection_layer.1} parent=31 // pred_check_branch
          %1154 = sbr.rel (%p1152) target = $region40
        $region39: #{projection_layer.1} parent=31 // pred_region
          %v1155 = vld [vmem:[#allocation2] sm:$0xff]
          %v1156 = vld [vmem:[#allocation2 + $0x8] sm:$0xff]
          %v1157 = vld [vmem:[#allocation2 + $0x10] sm:$0xff]
          %v1158 = vld [vmem:[#allocation2 + $0x18] sm:$0xff]
          %v1159 = vld [vmem:[#allocation2 + $0x20] sm:$0xff]
          %v1160 = vld [vmem:[#allocation2 + $0x28] sm:$0xff]
          %v1161 = vld [vmem:[#allocation2 + $0x30] sm:$0xff]
          %v1162 = vld [vmem:[#allocation2 + $0x38] sm:$0xff]
          %v1163 = vld [vmem:[#allocation2 + $0x40] sm:$0xff]
          %v1164 = vld [vmem:[#allocation2 + $0x48] sm:$0xff]
          %v1165 = vld [vmem:[#allocation2 + $0x50] sm:$0xff]
          %v1166 = vld [vmem:[#allocation2 + $0x58] sm:$0xff]
          %v1167 = vld [vmem:[#allocation2 + $0x60] sm:$0xff]
          %v1168 = vld [vmem:[#allocation2 + $0x68] sm:$0xff]
          %v1169 = vld [vmem:[#allocation2 + $0x70] sm:$0xff]
          %v1170 = vld [vmem:[#allocation2 + $0x78] sm:$0xff]
          %v1171 = vld [vmem:[#allocation2 + $0x80] sm:$0xff]
          %v1172 = vld [vmem:[#allocation2 + $0x88] sm:$0xff]
          %v1173 = vld [vmem:[#allocation2 + $0x90] sm:$0xff]
          %v1174 = vld [vmem:[#allocation2 + $0x98] sm:$0xff]
          %v1175 = vld [vmem:[#allocation2 + $0xa0] sm:$0xff]
          %v1176 = vld [vmem:[#allocation2 + $0xa8] sm:$0xff]
          %v1177 = vld [vmem:[#allocation2 + $0xb0] sm:$0xff]
          %v1178 = vld [vmem:[#allocation2 + $0xb8] sm:$0xff]
          %v1179 = vld [vmem:[#allocation2 + $0xc0] sm:$0xff]
          %v1180 = vld [vmem:[#allocation2 + $0xc8] sm:$0xff]
          %v1181 = vld [vmem:[#allocation2 + $0xd0] sm:$0xff]
          %v1182 = vld [vmem:[#allocation2 + $0xd8] sm:$0xff]
          %v1183 = vld [vmem:[#allocation2 + $0xe0] sm:$0xff]
          %v1184 = vld [vmem:[#allocation2 + $0xe8] sm:$0xff]
          %v1185 = vld [vmem:[#allocation2 + $0xf0] sm:$0xff]
          %v1186 = vld [vmem:[#allocation2 + $0xf8] sm:$0xff]
          %v1187 = vmax.f32 %v735, %v824
          %v1188 = vmax.f32 %v1187, %v913
          %v1189 = vmax.f32 %v1188, %v1002
          %1190 = vmax.xlane.f32.xlu0 %v1189
          %v1191 = vpop.xlane.xlu0 %1190
          %v1192 = vmax.f32 %v737, %v826
          %v1193 = vmax.f32 %v1192, %v915
          %v1194 = vmax.f32 %v1193, %v1004
          %1195 = vmax.xlane.f32.xlu0 %v1194
          %v1196 = vpop.xlane.xlu0 %1195
          %v1197 = vmax.f32 %v740, %v829
          %v1198 = vmax.f32 %v1197, %v918
          %v1199 = vmax.f32 %v1198, %v1007
          %1200 = vmax.xlane.f32.xlu0 %v1199
          %v1201 = vpop.xlane.xlu0 %1200
          %v1202 = vmax.f32 %v742, %v831
          %v1203 = vmax.f32 %v1202, %v920
          %v1204 = vmax.f32 %v1203, %v1009
          %1205 = vmax.xlane.f32.xlu0 %v1204
          %v1206 = vpop.xlane.xlu0 %1205
          %v1207 = vmax.f32 %v745, %v834
          %v1208 = vmax.f32 %v1207, %v923
          %v1209 = vmax.f32 %v1208, %v1012
          %1210 = vmax.xlane.f32.xlu0 %v1209
          %v1211 = vpop.xlane.xlu0 %1210
          %v1212 = vmax.f32 %v747, %v836
          %v1213 = vmax.f32 %v1212, %v925
          %v1214 = vmax.f32 %v1213, %v1014
          %1215 = vmax.xlane.f32.xlu0 %v1214
          %v1216 = vpop.xlane.xlu0 %1215
          %v1217 = vmax.f32 %v750, %v839
          %v1218 = vmax.f32 %v1217, %v928
          %v1219 = vmax.f32 %v1218, %v1017
          %1220 = vmax.xlane.f32.xlu0 %v1219
          %v1221 = vpop.xlane.xlu0 %1220
          %v1222 = vmax.f32 %v752, %v841
          %v1223 = vmax.f32 %v1222, %v930
          %v1224 = vmax.f32 %v1223, %v1019
          %1225 = vmax.xlane.f32.xlu0 %v1224
          %v1226 = vpop.xlane.xlu0 %1225
          %v1227 = vmax.f32 %v755, %v844
          %v1228 = vmax.f32 %v1227, %v933
          %v1229 = vmax.f32 %v1228, %v1022
          %1230 = vmax.xlane.f32.xlu0 %v1229
          %v1231 = vpop.xlane.xlu0 %1230
          %v1232 = vmax.f32 %v757, %v846
          %v1233 = vmax.f32 %v1232, %v935
          %v1234 = vmax.f32 %v1233, %v1024
          %1235 = vmax.xlane.f32.xlu0 %v1234
          %v1236 = vpop.xlane.xlu0 %1235
          %v1237 = vmax.f32 %v760, %v849
          %v1238 = vmax.f32 %v1237, %v938
          %v1239 = vmax.f32 %v1238, %v1027
          %1240 = vmax.xlane.f32.xlu0 %v1239
          %v1241 = vpop.xlane.xlu0 %1240
          %v1242 = vmax.f32 %v762, %v851
          %v1243 = vmax.f32 %v1242, %v940
          %v1244 = vmax.f32 %v1243, %v1029
          %1245 = vmax.xlane.f32.xlu0 %v1244
          %v1246 = vpop.xlane.xlu0 %1245
          %v1247 = vmax.f32 %v765, %v854
          %v1248 = vmax.f32 %v1247, %v943
          %v1249 = vmax.f32 %v1248, %v1032
          %1250 = vmax.xlane.f32.xlu0 %v1249
          %v1251 = vpop.xlane.xlu0 %1250
          %v1252 = vmax.f32 %v767, %v856
          %v1253 = vmax.f32 %v1252, %v945
          %v1254 = vmax.f32 %v1253, %v1034
          %1255 = vmax.xlane.f32.xlu0 %v1254
          %v1256 = vpop.xlane.xlu0 %1255
          %v1257 = vmax.f32 %v770, %v859
          %v1258 = vmax.f32 %v1257, %v948
          %v1259 = vmax.f32 %v1258, %v1037
          %1260 = vmax.xlane.f32.xlu0 %v1259
          %v1261 = vpop.xlane.xlu0 %1260
          %v1262 = vmax.f32 %v772, %v861
          %v1263 = vmax.f32 %v1262, %v950
          %v1264 = vmax.f32 %v1263, %v1039
          %1265 = vmax.xlane.f32.xlu0 %v1264
          %v1266 = vpop.xlane.xlu0 %1265
          %v1267 = vmax.f32 %v775, %v864
          %v1268 = vmax.f32 %v1267, %v953
          %v1269 = vmax.f32 %v1268, %v1042
          %1270 = vmax.xlane.f32.xlu0 %v1269
          %v1271 = vpop.xlane.xlu0 %1270
          %v1272 = vmax.f32 %v777, %v866
          %v1273 = vmax.f32 %v1272, %v955
          %v1274 = vmax.f32 %v1273, %v1044
          %1275 = vmax.xlane.f32.xlu0 %v1274
          %v1276 = vpop.xlane.xlu0 %1275
          %v1277 = vmax.f32 %v780, %v869
          %v1278 = vmax.f32 %v1277, %v958
          %v1279 = vmax.f32 %v1278, %v1047
          %1280 = vmax.xlane.f32.xlu0 %v1279
          %v1281 = vpop.xlane.xlu0 %1280
          %v1282 = vmax.f32 %v782, %v871
          %v1283 = vmax.f32 %v1282, %v960
          %v1284 = vmax.f32 %v1283, %v1049
          %1285 = vmax.xlane.f32.xlu0 %v1284
          %v1286 = vpop.xlane.xlu0 %1285
          %v1287 = vmax.f32 %v785, %v874
          %v1288 = vmax.f32 %v1287, %v963
          %v1289 = vmax.f32 %v1288, %v1052
          %1290 = vmax.xlane.f32.xlu0 %v1289
          %v1291 = vpop.xlane.xlu0 %1290
          %v1292 = vmax.f32 %v787, %v876
          %v1293 = vmax.f32 %v1292, %v965
          %v1294 = vmax.f32 %v1293, %v1054
          %1295 = vmax.xlane.f32.xlu0 %v1294
          %v1296 = vpop.xlane.xlu0 %1295
          %v1297 = vmax.f32 %v790, %v879
          %v1298 = vmax.f32 %v1297, %v968
          %v1299 = vmax.f32 %v1298, %v1057
          %1300 = vmax.xlane.f32.xlu0 %v1299
          %v1301 = vpop.xlane.xlu0 %1300
          %v1302 = vmax.f32 %v792, %v881
          %v1303 = vmax.f32 %v1302, %v970
          %v1304 = vmax.f32 %v1303, %v1059
          %1305 = vmax.xlane.f32.xlu0 %v1304
          %v1306 = vpop.xlane.xlu0 %1305
          %v1307 = vmax.f32 %v795, %v884
          %v1308 = vmax.f32 %v1307, %v973
          %v1309 = vmax.f32 %v1308, %v1062
          %1310 = vmax.xlane.f32.xlu0 %v1309
          %v1311 = vpop.xlane.xlu0 %1310
          %v1312 = vmax.f32 %v797, %v886
          %v1313 = vmax.f32 %v1312, %v975
          %v1314 = vmax.f32 %v1313, %v1064
          %1315 = vmax.xlane.f32.xlu0 %v1314
          %v1316 = vpop.xlane.xlu0 %1315
          %v1317 = vmax.f32 %v800, %v889
          %v1318 = vmax.f32 %v1317, %v978
          %v1319 = vmax.f32 %v1318, %v1067
          %1320 = vmax.xlane.f32.xlu0 %v1319
          %v1321 = vpop.xlane.xlu0 %1320
          %v1322 = vmax.f32 %v802, %v891
          %v1323 = vmax.f32 %v1322, %v980
          %v1324 = vmax.f32 %v1323, %v1069
          %1325 = vmax.xlane.f32.xlu0 %v1324
          %v1326 = vpop.xlane.xlu0 %1325
          %v1327 = vmax.f32 %v805, %v894
          %v1328 = vmax.f32 %v1327, %v983
          %v1329 = vmax.f32 %v1328, %v1072
          %1330 = vmax.xlane.f32.xlu0 %v1329
          %v1331 = vpop.xlane.xlu0 %1330
          %v1332 = vmax.f32 %v807, %v896
          %v1333 = vmax.f32 %v1332, %v985
          %v1334 = vmax.f32 %v1333, %v1074
          %1335 = vmax.xlane.f32.xlu0 %v1334
          %v1336 = vpop.xlane.xlu0 %1335
          %v1337 = vmax.f32 %v810, %v899
          %v1338 = vmax.f32 %v1337, %v988
          %v1339 = vmax.f32 %v1338, %v1077
          %1340 = vmax.xlane.f32.xlu0 %v1339
          %v1341 = vpop.xlane.xlu0 %1340
          %v1342 = vmax.f32 %v812, %v901
          %v1343 = vmax.f32 %v1342, %v990
          %v1344 = vmax.f32 %v1343, %v1079
          %1345 = vmax.xlane.f32.xlu0 %v1344
          %v1346 = vpop.xlane.xlu0 %1345
          %v1347 = vmax.f32 %v1155, %v1191
          %v1348 = vmax.f32 %v1156, %v1196
          %v1349 = vmax.f32 %v1157, %v1201
          %v1350 = vmax.f32 %v1158, %v1206
          %v1351 = vmax.f32 %v1159, %v1211
          %v1352 = vmax.f32 %v1160, %v1216
          %v1353 = vmax.f32 %v1161, %v1221
          %v1354 = vmax.f32 %v1162, %v1226
          %v1355 = vmax.f32 %v1163, %v1231
          %v1356 = vmax.f32 %v1164, %v1236
          %v1357 = vmax.f32 %v1165, %v1241
          %v1358 = vmax.f32 %v1166, %v1246
          %v1359 = vmax.f32 %v1167, %v1251
          %v1360 = vmax.f32 %v1168, %v1256
          %v1361 = vmax.f32 %v1169, %v1261
          %v1362 = vmax.f32 %v1170, %v1266
          %v1363 = vmax.f32 %v1171, %v1271
          %v1364 = vmax.f32 %v1172, %v1276
          %v1365 = vmax.f32 %v1173, %v1281
          %v1366 = vmax.f32 %v1174, %v1286
          %v1367 = vmax.f32 %v1175, %v1291
          %v1368 = vmax.f32 %v1176, %v1296
          %v1369 = vmax.f32 %v1177, %v1301
          %v1370 = vmax.f32 %v1178, %v1306
          %v1371 = vmax.f32 %v1179, %v1311
          %v1372 = vmax.f32 %v1180, %v1316
          %v1373 = vmax.f32 %v1181, %v1321
          %v1374 = vmax.f32 %v1182, %v1326
          %v1375 = vmax.f32 %v1183, %v1331
          %v1376 = vmax.f32 %v1184, %v1336
          %v1377 = vmax.f32 %v1185, %v1341
          %v1378 = vmax.f32 %v1186, %v1346
          %v1379 = vld [vmem:[#allocation3] sm:$0xff]
          %v1380 = vld [vmem:[#allocation3 + $0x8] sm:$0xff]
          %v1381 = vld [vmem:[#allocation3 + $0x10] sm:$0xff]
          %v1382 = vld [vmem:[#allocation3 + $0x18] sm:$0xff]
          %v1383 = vld [vmem:[#allocation3 + $0x20] sm:$0xff]
          %v1384 = vld [vmem:[#allocation3 + $0x28] sm:$0xff]
          %v1385 = vld [vmem:[#allocation3 + $0x30] sm:$0xff]
          %v1386 = vld [vmem:[#allocation3 + $0x38] sm:$0xff]
          %v1387 = vld [vmem:[#allocation3 + $0x40] sm:$0xff]
          %v1388 = vld [vmem:[#allocation3 + $0x48] sm:$0xff]
          %v1389 = vld [vmem:[#allocation3 + $0x50] sm:$0xff]
          %v1390 = vld [vmem:[#allocation3 + $0x58] sm:$0xff]
          %v1391 = vld [vmem:[#allocation3 + $0x60] sm:$0xff]
          %v1392 = vld [vmem:[#allocation3 + $0x68] sm:$0xff]
          %v1393 = vld [vmem:[#allocation3 + $0x70] sm:$0xff]
          %v1394 = vld [vmem:[#allocation3 + $0x78] sm:$0xff]
          %v1395 = vld [vmem:[#allocation3 + $0x80] sm:$0xff]
          %v1396 = vld [vmem:[#allocation3 + $0x88] sm:$0xff]
          %v1397 = vld [vmem:[#allocation3 + $0x90] sm:$0xff]
          %v1398 = vld [vmem:[#allocation3 + $0x98] sm:$0xff]
          %v1399 = vld [vmem:[#allocation3 + $0xa0] sm:$0xff]
          %v1400 = vld [vmem:[#allocation3 + $0xa8] sm:$0xff]
          %v1401 = vld [vmem:[#allocation3 + $0xb0] sm:$0xff]
          %v1402 = vld [vmem:[#allocation3 + $0xb8] sm:$0xff]
          %v1403 = vld [vmem:[#allocation3 + $0xc0] sm:$0xff]
          %v1404 = vld [vmem:[#allocation3 + $0xc8] sm:$0xff]
          %v1405 = vld [vmem:[#allocation3 + $0xd0] sm:$0xff]
          %v1406 = vld [vmem:[#allocation3 + $0xd8] sm:$0xff]
          %v1407 = vld [vmem:[#allocation3 + $0xe0] sm:$0xff]
          %v1408 = vld [vmem:[#allocation3 + $0xe8] sm:$0xff]
          %v1409 = vld [vmem:[#allocation3 + $0xf0] sm:$0xff]
          %v1410 = vld [vmem:[#allocation3 + $0xf8] sm:$0xff]
          %v1411 = vsub.f32 %v1155, %v1347
          %v1412 = vsub.f32 %v1156, %v1348
          %v1413 = vsub.f32 %v1157, %v1349
          %v1414 = vsub.f32 %v1158, %v1350
          %v1415 = vsub.f32 %v1159, %v1351
          %v1416 = vsub.f32 %v1160, %v1352
          %v1417 = vsub.f32 %v1161, %v1353
          %v1418 = vsub.f32 %v1162, %v1354
          %v1419 = vsub.f32 %v1163, %v1355
          %v1420 = vsub.f32 %v1164, %v1356
          %v1421 = vsub.f32 %v1165, %v1357
          %v1422 = vsub.f32 %v1166, %v1358
          %v1423 = vsub.f32 %v1167, %v1359
          %v1424 = vsub.f32 %v1168, %v1360
          %v1425 = vsub.f32 %v1169, %v1361
          %v1426 = vsub.f32 %v1170, %v1362
          %v1427 = vsub.f32 %v1171, %v1363
          %v1428 = vsub.f32 %v1172, %v1364
          %v1429 = vsub.f32 %v1173, %v1365
          %v1430 = vsub.f32 %v1174, %v1366
          %v1431 = vsub.f32 %v1175, %v1367
          %v1432 = vsub.f32 %v1176, %v1368
          %v1433 = vsub.f32 %v1177, %v1369
          %v1434 = vsub.f32 %v1178, %v1370
          %v1435 = vsub.f32 %v1179, %v1371
          %v1436 = vsub.f32 %v1180, %v1372
          %v1437 = vsub.f32 %v1181, %v1373
          %v1438 = vsub.f32 %v1182, %v1374
          %v1439 = vsub.f32 %v1183, %v1375
          %v1440 = vsub.f32 %v1184, %v1376
          %v1441 = vsub.f32 %v1185, %v1377
          %v1442 = vsub.f32 %v1186, %v1378
          %v1443 = vmul.f32 %v1411, 1.442695
          %v1444 = vpow.pop %v1443
          %v1445 = vmul.f32 %v1412, 1.442695
          %v1446 = vpow.pop %v1445
          %v1447 = vmul.f32 %v1413, 1.442695
          %v1448 = vpow.pop %v1447
          %v1449 = vmul.f32 %v1414, 1.442695
          %v1450 = vpow.pop %v1449
          %v1451 = vmul.f32 %v1415, 1.442695
          %v1452 = vpow.pop %v1451
          %v1453 = vmul.f32 %v1416, 1.442695
          %v1454 = vpow.pop %v1453
          %v1455 = vmul.f32 %v1417, 1.442695
          %v1456 = vpow.pop %v1455
          %v1457 = vmul.f32 %v1418, 1.442695
          %v1458 = vpow.pop %v1457
          %v1459 = vmul.f32 %v1419, 1.442695
          %v1460 = vpow.pop %v1459
          %v1461 = vmul.f32 %v1420, 1.442695
          %v1462 = vpow.pop %v1461
          %v1463 = vmul.f32 %v1421, 1.442695
          %v1464 = vpow.pop %v1463
          %v1465 = vmul.f32 %v1422, 1.442695
          %v1466 = vpow.pop %v1465
          %v1467 = vmul.f32 %v1423, 1.442695
          %v1468 = vpow.pop %v1467
          %v1469 = vmul.f32 %v1424, 1.442695
          %v1470 = vpow.pop %v1469
          %v1471 = vmul.f32 %v1425, 1.442695
          %v1472 = vpow.pop %v1471
          %v1473 = vmul.f32 %v1426, 1.442695
          %v1474 = vpow.pop %v1473
          %v1475 = vmul.f32 %v1427, 1.442695
          %v1476 = vpow.pop %v1475
          %v1477 = vmul.f32 %v1428, 1.442695
          %v1478 = vpow.pop %v1477
          %v1479 = vmul.f32 %v1429, 1.442695
          %v1480 = vpow.pop %v1479
          %v1481 = vmul.f32 %v1430, 1.442695
          %v1482 = vpow.pop %v1481
          %v1483 = vmul.f32 %v1431, 1.442695
          %v1484 = vpow.pop %v1483
          %v1485 = vmul.f32 %v1432, 1.442695
          %v1486 = vpow.pop %v1485
          %v1487 = vmul.f32 %v1433, 1.442695
          %v1488 = vpow.pop %v1487
          %v1489 = vmul.f32 %v1434, 1.442695
          %v1490 = vpow.pop %v1489
          %v1491 = vmul.f32 %v1435, 1.442695
          %v1492 = vpow.pop %v1491
          %v1493 = vmul.f32 %v1436, 1.442695
          %v1494 = vpow.pop %v1493
          %v1495 = vmul.f32 %v1437, 1.442695
          %v1496 = vpow.pop %v1495
          %v1497 = vmul.f32 %v1438, 1.442695
          %v1498 = vpow.pop %v1497
          %v1499 = vmul.f32 %v1439, 1.442695
          %v1500 = vpow.pop %v1499
          %v1501 = vmul.f32 %v1440, 1.442695
          %v1502 = vpow.pop %v1501
          %v1503 = vmul.f32 %v1441, 1.442695
          %v1504 = vpow.pop %v1503
          %v1505 = vmul.f32 %v1442, 1.442695
          %v1506 = vpow.pop %v1505
          %v1507 = vmul.f32 %v1379, %v1444
          %v1508 = vmul.f32 %v1380, %v1446
          %v1509 = vmul.f32 %v1381, %v1448
          %v1510 = vmul.f32 %v1382, %v1450
          %v1511 = vmul.f32 %v1383, %v1452
          %v1512 = vmul.f32 %v1384, %v1454
          %v1513 = vmul.f32 %v1385, %v1456
          %v1514 = vmul.f32 %v1386, %v1458
          %v1515 = vmul.f32 %v1387, %v1460
          %v1516 = vmul.f32 %v1388, %v1462
          %v1517 = vmul.f32 %v1389, %v1464
          %v1518 = vmul.f32 %v1390, %v1466
          %v1519 = vmul.f32 %v1391, %v1468
          %v1520 = vmul.f32 %v1392, %v1470
          %v1521 = vmul.f32 %v1393, %v1472
          %v1522 = vmul.f32 %v1394, %v1474
          %v1523 = vmul.f32 %v1395, %v1476
          %v1524 = vmul.f32 %v1396, %v1478
          %v1525 = vmul.f32 %v1397, %v1480
          %v1526 = vmul.f32 %v1398, %v1482
          %v1527 = vmul.f32 %v1399, %v1484
          %v1528 = vmul.f32 %v1400, %v1486
          %v1529 = vmul.f32 %v1401, %v1488
          %v1530 = vmul.f32 %v1402, %v1490
          %v1531 = vmul.f32 %v1403, %v1492
          %v1532 = vmul.f32 %v1404, %v1494
          %v1533 = vmul.f32 %v1405, %v1496
          %v1534 = vmul.f32 %v1406, %v1498
          %v1535 = vmul.f32 %v1407, %v1500
          %v1536 = vmul.f32 %v1408, %v1502
          %v1537 = vmul.f32 %v1409, %v1504
          %v1538 = vmul.f32 %v1410, %v1506
          %1540 = vset.pattern.permute.xlu0 0
          %1541 = vperm.xlu0 %1540, %v1347
          %v1542 = vpop.permute.xlu0 %1541
          %1545 = vset.pattern.permute.xlu0 0
          %1546 = vperm.xlu0 %1545, %v1348
          %v1547 = vpop.permute.xlu0 %1546
          %1550 = vset.pattern.permute.xlu0 0
          %1551 = vperm.xlu0 %1550, %v1349
          %v1552 = vpop.permute.xlu0 %1551
          %1555 = vset.pattern.permute.xlu0 0
          %1556 = vperm.xlu0 %1555, %v1350
          %v1557 = vpop.permute.xlu0 %1556
          %1560 = vset.pattern.permute.xlu0 0
          %1561 = vperm.xlu0 %1560, %v1351
          %v1562 = vpop.permute.xlu0 %1561
          %1565 = vset.pattern.permute.xlu0 0
          %1566 = vperm.xlu0 %1565, %v1352
          %v1567 = vpop.permute.xlu0 %1566
          %1570 = vset.pattern.permute.xlu0 0
          %1571 = vperm.xlu0 %1570, %v1353
          %v1572 = vpop.permute.xlu0 %1571
          %1575 = vset.pattern.permute.xlu0 0
          %1576 = vperm.xlu0 %1575, %v1354
          %v1577 = vpop.permute.xlu0 %1576
          %1580 = vset.pattern.permute.xlu0 0
          %1581 = vperm.xlu0 %1580, %v1355
          %v1582 = vpop.permute.xlu0 %1581
          %1585 = vset.pattern.permute.xlu0 0
          %1586 = vperm.xlu0 %1585, %v1356
          %v1587 = vpop.permute.xlu0 %1586
          %1590 = vset.pattern.permute.xlu0 0
          %1591 = vperm.xlu0 %1590, %v1357
          %v1592 = vpop.permute.xlu0 %1591
          %1595 = vset.pattern.permute.xlu0 0
          %1596 = vperm.xlu0 %1595, %v1358
          %v1597 = vpop.permute.xlu0 %1596
          %1600 = vset.pattern.permute.xlu0 0
          %1601 = vperm.xlu0 %1600, %v1359
          %v1602 = vpop.permute.xlu0 %1601
          %1605 = vset.pattern.permute.xlu0 0
          %1606 = vperm.xlu0 %1605, %v1360
          %v1607 = vpop.permute.xlu0 %1606
          %1610 = vset.pattern.permute.xlu0 0
          %1611 = vperm.xlu0 %1610, %v1361
          %v1612 = vpop.permute.xlu0 %1611
          %1615 = vset.pattern.permute.xlu0 0
          %1616 = vperm.xlu0 %1615, %v1362
          %v1617 = vpop.permute.xlu0 %1616
          %1620 = vset.pattern.permute.xlu0 0
          %1621 = vperm.xlu0 %1620, %v1363
          %v1622 = vpop.permute.xlu0 %1621
          %1625 = vset.pattern.permute.xlu0 0
          %1626 = vperm.xlu0 %1625, %v1364
          %v1627 = vpop.permute.xlu0 %1626
          %1630 = vset.pattern.permute.xlu0 0
          %1631 = vperm.xlu0 %1630, %v1365
          %v1632 = vpop.permute.xlu0 %1631
          %1635 = vset.pattern.permute.xlu0 0
          %1636 = vperm.xlu0 %1635, %v1366
          %v1637 = vpop.permute.xlu0 %1636
          %1640 = vset.pattern.permute.xlu0 0
          %1641 = vperm.xlu0 %1640, %v1367
          %v1642 = vpop.permute.xlu0 %1641
          %1645 = vset.pattern.permute.xlu0 0
          %1646 = vperm.xlu0 %1645, %v1368
          %v1647 = vpop.permute.xlu0 %1646
          %1650 = vset.pattern.permute.xlu0 0
          %1651 = vperm.xlu0 %1650, %v1369
          %v1652 = vpop.permute.xlu0 %1651
          %1655 = vset.pattern.permute.xlu0 0
          %1656 = vperm.xlu0 %1655, %v1370
          %v1657 = vpop.permute.xlu0 %1656
          %1660 = vset.pattern.permute.xlu0 0
          %1661 = vperm.xlu0 %1660, %v1371
          %v1662 = vpop.permute.xlu0 %1661
          %1665 = vset.pattern.permute.xlu0 0
          %1666 = vperm.xlu0 %1665, %v1372
          %v1667 = vpop.permute.xlu0 %1666
          %1670 = vset.pattern.permute.xlu0 0
          %1671 = vperm.xlu0 %1670, %v1373
          %v1672 = vpop.permute.xlu0 %1671
          %1675 = vset.pattern.permute.xlu0 0
          %1676 = vperm.xlu0 %1675, %v1374
          %v1677 = vpop.permute.xlu0 %1676
          %1680 = vset.pattern.permute.xlu0 0
          %1681 = vperm.xlu0 %1680, %v1375
          %v1682 = vpop.permute.xlu0 %1681
          %1685 = vset.pattern.permute.xlu0 0
          %1686 = vperm.xlu0 %1685, %v1376
          %v1687 = vpop.permute.xlu0 %1686
          %1690 = vset.pattern.permute.xlu0 0
          %1691 = vperm.xlu0 %1690, %v1377
          %v1692 = vpop.permute.xlu0 %1691
          %1695 = vset.pattern.permute.xlu0 0
          %1696 = vperm.xlu0 %1695, %v1378
          %v1697 = vpop.permute.xlu0 %1696
          %v1699 = vsub.f32 %v735, %v1542
          %v1700 = vsub.f32 %v824, %v1542
          %v1701 = vsub.f32 %v913, %v1542
          %v1702 = vsub.f32 %v1002, %v1542
          %v1703 = vsub.f32 %v737, %v1547
          %v1704 = vsub.f32 %v826, %v1547
          %v1705 = vsub.f32 %v915, %v1547
          %v1706 = vsub.f32 %v1004, %v1547
          %v1707 = vsub.f32 %v740, %v1552
          %v1708 = vsub.f32 %v829, %v1552
          %v1709 = vsub.f32 %v918, %v1552
          %v1710 = vsub.f32 %v1007, %v1552
          %v1711 = vsub.f32 %v742, %v1557
          %v1712 = vsub.f32 %v831, %v1557
          %v1713 = vsub.f32 %v920, %v1557
          %v1714 = vsub.f32 %v1009, %v1557
          %v1715 = vsub.f32 %v745, %v1562
          %v1716 = vsub.f32 %v834, %v1562
          %v1717 = vsub.f32 %v923, %v1562
          %v1718 = vsub.f32 %v1012, %v1562
          %v1719 = vsub.f32 %v747, %v1567
          %v1720 = vsub.f32 %v836, %v1567
          %v1721 = vsub.f32 %v925, %v1567
          %v1722 = vsub.f32 %v1014, %v1567
          %v1723 = vsub.f32 %v750, %v1572
          %v1724 = vsub.f32 %v839, %v1572
          %v1725 = vsub.f32 %v928, %v1572
          %v1726 = vsub.f32 %v1017, %v1572
          %v1727 = vsub.f32 %v752, %v1577
          %v1728 = vsub.f32 %v841, %v1577
          %v1729 = vsub.f32 %v930, %v1577
          %v1730 = vsub.f32 %v1019, %v1577
          %v1731 = vsub.f32 %v755, %v1582
          %v1732 = vsub.f32 %v844, %v1582
          %v1733 = vsub.f32 %v933, %v1582
          %v1734 = vsub.f32 %v1022, %v1582
          %v1735 = vsub.f32 %v757, %v1587
          %v1736 = vsub.f32 %v846, %v1587
          %v1737 = vsub.f32 %v935, %v1587
          %v1738 = vsub.f32 %v1024, %v1587
          %v1739 = vsub.f32 %v760, %v1592
          %v1740 = vsub.f32 %v849, %v1592
          %v1741 = vsub.f32 %v938, %v1592
          %v1742 = vsub.f32 %v1027, %v1592
          %v1743 = vsub.f32 %v762, %v1597
          %v1744 = vsub.f32 %v851, %v1597
          %v1745 = vsub.f32 %v940, %v1597
          %v1746 = vsub.f32 %v1029, %v1597
          %v1747 = vsub.f32 %v765, %v1602
          %v1748 = vsub.f32 %v854, %v1602
          %v1749 = vsub.f32 %v943, %v1602
          %v1750 = vsub.f32 %v1032, %v1602
          %v1751 = vsub.f32 %v767, %v1607
          %v1752 = vsub.f32 %v856, %v1607
          %v1753 = vsub.f32 %v945, %v1607
          %v1754 = vsub.f32 %v1034, %v1607
          %v1755 = vsub.f32 %v770, %v1612
          %v1756 = vsub.f32 %v859, %v1612
          %v1757 = vsub.f32 %v948, %v1612
          %v1758 = vsub.f32 %v1037, %v1612
          %v1759 = vsub.f32 %v772, %v1617
          %v1760 = vsub.f32 %v861, %v1617
          %v1761 = vsub.f32 %v950, %v1617
          %v1762 = vsub.f32 %v1039, %v1617
          %v1763 = vsub.f32 %v775, %v1622
          %v1764 = vsub.f32 %v864, %v1622
          %v1765 = vsub.f32 %v953, %v1622
          %v1766 = vsub.f32 %v1042, %v1622
          %v1767 = vsub.f32 %v777, %v1627
          %v1768 = vsub.f32 %v866, %v1627
          %v1769 = vsub.f32 %v955, %v1627
          %v1770 = vsub.f32 %v1044, %v1627
          %v1771 = vsub.f32 %v780, %v1632
          %v1772 = vsub.f32 %v869, %v1632
          %v1773 = vsub.f32 %v958, %v1632
          %v1774 = vsub.f32 %v1047, %v1632
          %v1775 = vsub.f32 %v782, %v1637
          %v1776 = vsub.f32 %v871, %v1637
          %v1777 = vsub.f32 %v960, %v1637
          %v1778 = vsub.f32 %v1049, %v1637
          %v1779 = vsub.f32 %v785, %v1642
          %v1780 = vsub.f32 %v874, %v1642
          %v1781 = vsub.f32 %v963, %v1642
          %v1782 = vsub.f32 %v1052, %v1642
          %v1783 = vsub.f32 %v787, %v1647
          %v1784 = vsub.f32 %v876, %v1647
          %v1785 = vsub.f32 %v965, %v1647
          %v1786 = vsub.f32 %v1054, %v1647
          %v1787 = vsub.f32 %v790, %v1652
          %v1788 = vsub.f32 %v879, %v1652
          %v1789 = vsub.f32 %v968, %v1652
          %v1790 = vsub.f32 %v1057, %v1652
          %v1791 = vsub.f32 %v792, %v1657
          %v1792 = vsub.f32 %v881, %v1657
          %v1793 = vsub.f32 %v970, %v1657
          %v1794 = vsub.f32 %v1059, %v1657
          %v1795 = vsub.f32 %v795, %v1662
          %v1796 = vsub.f32 %v884, %v1662
          %v1797 = vsub.f32 %v973, %v1662
          %v1798 = vsub.f32 %v1062, %v1662
          %v1799 = vsub.f32 %v797, %v1667
          %v1800 = vsub.f32 %v886, %v1667
          %v1801 = vsub.f32 %v975, %v1667
          %v1802 = vsub.f32 %v1064, %v1667
          %v1803 = vsub.f32 %v800, %v1672
          %v1804 = vsub.f32 %v889, %v1672
          %v1805 = vsub.f32 %v978, %v1672
          %v1806 = vsub.f32 %v1067, %v1672
          %v1807 = vsub.f32 %v802, %v1677
          %v1808 = vsub.f32 %v891, %v1677
          %v1809 = vsub.f32 %v980, %v1677
          %v1810 = vsub.f32 %v1069, %v1677
          %v1811 = vsub.f32 %v805, %v1682
          %v1812 = vsub.f32 %v894, %v1682
          %v1813 = vsub.f32 %v983, %v1682
          %v1814 = vsub.f32 %v1072, %v1682
          %v1815 = vsub.f32 %v807, %v1687
          %v1816 = vsub.f32 %v896, %v1687
          %v1817 = vsub.f32 %v985, %v1687
          %v1818 = vsub.f32 %v1074, %v1687
          %v1819 = vsub.f32 %v810, %v1692
          %v1820 = vsub.f32 %v899, %v1692
          %v1821 = vsub.f32 %v988, %v1692
          %v1822 = vsub.f32 %v1077, %v1692
          %v1823 = vsub.f32 %v812, %v1697
          %v1824 = vsub.f32 %v901, %v1697
          %v1825 = vsub.f32 %v990, %v1697
          %v1826 = vsub.f32 %v1079, %v1697
          %v1827 = vmul.f32 %v1699, 1.442695
          %v1828 = vpow.pop %v1827
          %v1829 = vmul.f32 %v1700, 1.442695
          %v1830 = vpow.pop %v1829
          %v1831 = vmul.f32 %v1701, 1.442695
          %v1832 = vpow.pop %v1831
          %v1833 = vmul.f32 %v1702, 1.442695
          %v1834 = vpow.pop %v1833
          %v1835 = vmul.f32 %v1703, 1.442695
          %v1836 = vpow.pop %v1835
          %v1837 = vmul.f32 %v1704, 1.442695
          %v1838 = vpow.pop %v1837
          %v1839 = vmul.f32 %v1705, 1.442695
          %v1840 = vpow.pop %v1839
          %v1841 = vmul.f32 %v1706, 1.442695
          %v1842 = vpow.pop %v1841
          %v1843 = vmul.f32 %v1707, 1.442695
          %v1844 = vpow.pop %v1843
          %v1845 = vmul.f32 %v1708, 1.442695
          %v1846 = vpow.pop %v1845
          %v1847 = vmul.f32 %v1709, 1.442695
          %v1848 = vpow.pop %v1847
          %v1849 = vmul.f32 %v1710, 1.442695
          %v1850 = vpow.pop %v1849
          %v1851 = vmul.f32 %v1711, 1.442695
          %v1852 = vpow.pop %v1851
          %v1853 = vmul.f32 %v1712, 1.442695
          %v1854 = vpow.pop %v1853
          %v1855 = vmul.f32 %v1713, 1.442695
          %v1856 = vpow.pop %v1855
          %v1857 = vmul.f32 %v1714, 1.442695
          %v1858 = vpow.pop %v1857
          %v1859 = vmul.f32 %v1715, 1.442695
          %v1860 = vpow.pop %v1859
          %v1861 = vmul.f32 %v1716, 1.442695
          %v1862 = vpow.pop %v1861
          %v1863 = vmul.f32 %v1717, 1.442695
          %v1864 = vpow.pop %v1863
          %v1865 = vmul.f32 %v1718, 1.442695
          %v1866 = vpow.pop %v1865
          %v1867 = vmul.f32 %v1719, 1.442695
          %v1868 = vpow.pop %v1867
          %v1869 = vmul.f32 %v1720, 1.442695
          %v1870 = vpow.pop %v1869
          %v1871 = vmul.f32 %v1721, 1.442695
          %v1872 = vpow.pop %v1871
          %v1873 = vmul.f32 %v1722, 1.442695
          %v1874 = vpow.pop %v1873
          %v1875 = vmul.f32 %v1723, 1.442695
          %v1876 = vpow.pop %v1875
          %v1877 = vmul.f32 %v1724, 1.442695
          %v1878 = vpow.pop %v1877
          %v1879 = vmul.f32 %v1725, 1.442695
          %v1880 = vpow.pop %v1879
          %v1881 = vmul.f32 %v1726, 1.442695
          %v1882 = vpow.pop %v1881
          %v1883 = vmul.f32 %v1727, 1.442695
          %v1884 = vpow.pop %v1883
          %v1885 = vmul.f32 %v1728, 1.442695
          %v1886 = vpow.pop %v1885
          %v1887 = vmul.f32 %v1729, 1.442695
          %v1888 = vpow.pop %v1887
          %v1889 = vmul.f32 %v1730, 1.442695
          %v1890 = vpow.pop %v1889
          %v1891 = vmul.f32 %v1731, 1.442695
          %v1892 = vpow.pop %v1891
          %v1893 = vmul.f32 %v1732, 1.442695
          %v1894 = vpow.pop %v1893
          %v1895 = vmul.f32 %v1733, 1.442695
          %v1896 = vpow.pop %v1895
          %v1897 = vmul.f32 %v1734, 1.442695
          %v1898 = vpow.pop %v1897
          %v1899 = vmul.f32 %v1735, 1.442695
          %v1900 = vpow.pop %v1899
          %v1901 = vmul.f32 %v1736, 1.442695
          %v1902 = vpow.pop %v1901
          %v1903 = vmul.f32 %v1737, 1.442695
          %v1904 = vpow.pop %v1903
          %v1905 = vmul.f32 %v1738, 1.442695
          %v1906 = vpow.pop %v1905
          %v1907 = vmul.f32 %v1739, 1.442695
          %v1908 = vpow.pop %v1907
          %v1909 = vmul.f32 %v1740, 1.442695
          %v1910 = vpow.pop %v1909
          %v1911 = vmul.f32 %v1741, 1.442695
          %v1912 = vpow.pop %v1911
          %v1913 = vmul.f32 %v1742, 1.442695
          %v1914 = vpow.pop %v1913
          %v1915 = vmul.f32 %v1743, 1.442695
          %v1916 = vpow.pop %v1915
          %v1917 = vmul.f32 %v1744, 1.442695
          %v1918 = vpow.pop %v1917
          %v1919 = vmul.f32 %v1745, 1.442695
          %v1920 = vpow.pop %v1919
          %v1921 = vmul.f32 %v1746, 1.442695
          %v1922 = vpow.pop %v1921
          %v1923 = vmul.f32 %v1747, 1.442695
          %v1924 = vpow.pop %v1923
          %v1925 = vmul.f32 %v1748, 1.442695
          %v1926 = vpow.pop %v1925
          %v1927 = vmul.f32 %v1749, 1.442695
          %v1928 = vpow.pop %v1927
          %v1929 = vmul.f32 %v1750, 1.442695
          %v1930 = vpow.pop %v1929
          %v1931 = vmul.f32 %v1751, 1.442695
          %v1932 = vpow.pop %v1931
          %v1933 = vmul.f32 %v1752, 1.442695
          %v1934 = vpow.pop %v1933
          %v1935 = vmul.f32 %v1753, 1.442695
          %v1936 = vpow.pop %v1935
          %v1937 = vmul.f32 %v1754, 1.442695
          %v1938 = vpow.pop %v1937
          %v1939 = vmul.f32 %v1755, 1.442695
          %v1940 = vpow.pop %v1939
          %v1941 = vmul.f32 %v1756, 1.442695
          %v1942 = vpow.pop %v1941
          %v1943 = vmul.f32 %v1757, 1.442695
          %v1944 = vpow.pop %v1943
          %v1945 = vmul.f32 %v1758, 1.442695
          %v1946 = vpow.pop %v1945
          %v1947 = vmul.f32 %v1759, 1.442695
          %v1948 = vpow.pop %v1947
          %v1949 = vmul.f32 %v1760, 1.442695
          %v1950 = vpow.pop %v1949
          %v1951 = vmul.f32 %v1761, 1.442695
          %v1952 = vpow.pop %v1951
          %v1953 = vmul.f32 %v1762, 1.442695
          %v1954 = vpow.pop %v1953
          %v1955 = vmul.f32 %v1763, 1.442695
          %v1956 = vpow.pop %v1955
          %v1957 = vmul.f32 %v1764, 1.442695
          %v1958 = vpow.pop %v1957
          %v1959 = vmul.f32 %v1765, 1.442695
          %v1960 = vpow.pop %v1959
          %v1961 = vmul.f32 %v1766, 1.442695
          %v1962 = vpow.pop %v1961
          %v1963 = vmul.f32 %v1767, 1.442695
          %v1964 = vpow.pop %v1963
          %v1965 = vmul.f32 %v1768, 1.442695
          %v1966 = vpow.pop %v1965
          %v1967 = vmul.f32 %v1769, 1.442695
          %v1968 = vpow.pop %v1967
          %v1969 = vmul.f32 %v1770, 1.442695
          %v1970 = vpow.pop %v1969
          %v1971 = vmul.f32 %v1771, 1.442695
          %v1972 = vpow.pop %v1971
          %v1973 = vmul.f32 %v1772, 1.442695
          %v1974 = vpow.pop %v1973
          %v1975 = vmul.f32 %v1773, 1.442695
          %v1976 = vpow.pop %v1975
          %v1977 = vmul.f32 %v1774, 1.442695
          %v1978 = vpow.pop %v1977
          %v1979 = vmul.f32 %v1775, 1.442695
          %v1980 = vpow.pop %v1979
          %v1981 = vmul.f32 %v1776, 1.442695
          %v1982 = vpow.pop %v1981
          %v1983 = vmul.f32 %v1777, 1.442695
          %v1984 = vpow.pop %v1983
          %v1985 = vmul.f32 %v1778, 1.442695
          %v1986 = vpow.pop %v1985
          %v1987 = vmul.f32 %v1779, 1.442695
          %v1988 = vpow.pop %v1987
          %v1989 = vmul.f32 %v1780, 1.442695
          %v1990 = vpow.pop %v1989
          %v1991 = vmul.f32 %v1781, 1.442695
          %v1992 = vpow.pop %v1991
          %v1993 = vmul.f32 %v1782, 1.442695
          %v1994 = vpow.pop %v1993
          %v1995 = vmul.f32 %v1783, 1.442695
          %v1996 = vpow.pop %v1995
          %v1997 = vmul.f32 %v1784, 1.442695
          %v1998 = vpow.pop %v1997
          %v1999 = vmul.f32 %v1785, 1.442695
          %v2000 = vpow.pop %v1999
          %v2001 = vmul.f32 %v1786, 1.442695
          %v2002 = vpow.pop %v2001
          %v2003 = vmul.f32 %v1787, 1.442695
          %v2004 = vpow.pop %v2003
          %v2005 = vmul.f32 %v1788, 1.442695
          %v2006 = vpow.pop %v2005
          %v2007 = vmul.f32 %v1789, 1.442695
          %v2008 = vpow.pop %v2007
          %v2009 = vmul.f32 %v1790, 1.442695
          %v2010 = vpow.pop %v2009
          %v2011 = vmul.f32 %v1791, 1.442695
          %v2012 = vpow.pop %v2011
          %v2013 = vmul.f32 %v1792, 1.442695
          %v2014 = vpow.pop %v2013
          %v2015 = vmul.f32 %v1793, 1.442695
          %v2016 = vpow.pop %v2015
          %v2017 = vmul.f32 %v1794, 1.442695
          %v2018 = vpow.pop %v2017
          %v2019 = vmul.f32 %v1795, 1.442695
          %v2020 = vpow.pop %v2019
          %v2021 = vmul.f32 %v1796, 1.442695
          %v2022 = vpow.pop %v2021
          %v2023 = vmul.f32 %v1797, 1.442695
          %v2024 = vpow.pop %v2023
          %v2025 = vmul.f32 %v1798, 1.442695
          %v2026 = vpow.pop %v2025
          %v2027 = vmul.f32 %v1799, 1.442695
          %v2028 = vpow.pop %v2027
          %v2029 = vmul.f32 %v1800, 1.442695
          %v2030 = vpow.pop %v2029
          %v2031 = vmul.f32 %v1801, 1.442695
          %v2032 = vpow.pop %v2031
          %v2033 = vmul.f32 %v1802, 1.442695
          %v2034 = vpow.pop %v2033
          %v2035 = vmul.f32 %v1803, 1.442695
          %v2036 = vpow.pop %v2035
          %v2037 = vmul.f32 %v1804, 1.442695
          %v2038 = vpow.pop %v2037
          %v2039 = vmul.f32 %v1805, 1.442695
          %v2040 = vpow.pop %v2039
          %v2041 = vmul.f32 %v1806, 1.442695
          %v2042 = vpow.pop %v2041
          %v2043 = vmul.f32 %v1807, 1.442695
          %v2044 = vpow.pop %v2043
          %v2045 = vmul.f32 %v1808, 1.442695
          %v2046 = vpow.pop %v2045
          %v2047 = vmul.f32 %v1809, 1.442695
          %v2048 = vpow.pop %v2047
          %v2049 = vmul.f32 %v1810, 1.442695
          %v2050 = vpow.pop %v2049
          %v2051 = vmul.f32 %v1811, 1.442695
          %v2052 = vpow.pop %v2051
          %v2053 = vmul.f32 %v1812, 1.442695
          %v2054 = vpow.pop %v2053
          %v2055 = vmul.f32 %v1813, 1.442695
          %v2056 = vpow.pop %v2055
          %v2057 = vmul.f32 %v1814, 1.442695
          %v2058 = vpow.pop %v2057
          %v2059 = vmul.f32 %v1815, 1.442695
          %v2060 = vpow.pop %v2059
          %v2061 = vmul.f32 %v1816, 1.442695
          %v2062 = vpow.pop %v2061
          %v2063 = vmul.f32 %v1817, 1.442695
          %v2064 = vpow.pop %v2063
          %v2065 = vmul.f32 %v1818, 1.442695
          %v2066 = vpow.pop %v2065
          %v2067 = vmul.f32 %v1819, 1.442695
          %v2068 = vpow.pop %v2067
          %v2069 = vmul.f32 %v1820, 1.442695
          %v2070 = vpow.pop %v2069
          %v2071 = vmul.f32 %v1821, 1.442695
          %v2072 = vpow.pop %v2071
          %v2073 = vmul.f32 %v1822, 1.442695
          %v2074 = vpow.pop %v2073
          %v2075 = vmul.f32 %v1823, 1.442695
          %v2076 = vpow.pop %v2075
          %v2077 = vmul.f32 %v1824, 1.442695
          %v2078 = vpow.pop %v2077
          %v2079 = vmul.f32 %v1825, 1.442695
          %v2080 = vpow.pop %v2079
          %v2081 = vmul.f32 %v1826, 1.442695
          %v2082 = vpow.pop %v2081
          %v2083 = vadd.f32 %v1828, %v1830
          %v2084 = vadd.f32 %v2083, %v1832
          %v2085 = vadd.f32 %v2084, %v1834
          %2086 = vadd.xlane.f32.xlu0 %v2085
          %v2087 = vpop.xlane.xlu0 %2086
          %v2088 = vadd.f32 %v1836, %v1838
          %v2089 = vadd.f32 %v2088, %v1840
          %v2090 = vadd.f32 %v2089, %v1842
          %2091 = vadd.xlane.f32.xlu0 %v2090
          %v2092 = vpop.xlane.xlu0 %2091
          %v2093 = vadd.f32 %v1844, %v1846
          %v2094 = vadd.f32 %v2093, %v1848
          %v2095 = vadd.f32 %v2094, %v1850
          %2096 = vadd.xlane.f32.xlu0 %v2095
          %v2097 = vpop.xlane.xlu0 %2096
          %v2098 = vadd.f32 %v1852, %v1854
          %v2099 = vadd.f32 %v2098, %v1856
          %v2100 = vadd.f32 %v2099, %v1858
          %2101 = vadd.xlane.f32.xlu0 %v2100
          %v2102 = vpop.xlane.xlu0 %2101
          %v2103 = vadd.f32 %v1860, %v1862
          %v2104 = vadd.f32 %v2103, %v1864
          %v2105 = vadd.f32 %v2104, %v1866
          %2106 = vadd.xlane.f32.xlu0 %v2105
          %v2107 = vpop.xlane.xlu0 %2106
          %v2108 = vadd.f32 %v1868, %v1870
          %v2109 = vadd.f32 %v2108, %v1872
          %v2110 = vadd.f32 %v2109, %v1874
          %2111 = vadd.xlane.f32.xlu0 %v2110
          %v2112 = vpop.xlane.xlu0 %2111
          %v2113 = vadd.f32 %v1876, %v1878
          %v2114 = vadd.f32 %v2113, %v1880
          %v2115 = vadd.f32 %v2114, %v1882
          %2116 = vadd.xlane.f32.xlu0 %v2115
          %v2117 = vpop.xlane.xlu0 %2116
          %v2118 = vadd.f32 %v1884, %v1886
          %v2119 = vadd.f32 %v2118, %v1888
          %v2120 = vadd.f32 %v2119, %v1890
          %2121 = vadd.xlane.f32.xlu0 %v2120
          %v2122 = vpop.xlane.xlu0 %2121
          %v2123 = vadd.f32 %v1892, %v1894
          %v2124 = vadd.f32 %v2123, %v1896
          %v2125 = vadd.f32 %v2124, %v1898
          %2126 = vadd.xlane.f32.xlu0 %v2125
          %v2127 = vpop.xlane.xlu0 %2126
          %v2128 = vadd.f32 %v1900, %v1902
          %v2129 = vadd.f32 %v2128, %v1904
          %v2130 = vadd.f32 %v2129, %v1906
          %2131 = vadd.xlane.f32.xlu0 %v2130
          %v2132 = vpop.xlane.xlu0 %2131
          %v2133 = vadd.f32 %v1908, %v1910
          %v2134 = vadd.f32 %v2133, %v1912
          %v2135 = vadd.f32 %v2134, %v1914
          %2136 = vadd.xlane.f32.xlu0 %v2135
          %v2137 = vpop.xlane.xlu0 %2136
          %v2138 = vadd.f32 %v1916, %v1918
          %v2139 = vadd.f32 %v2138, %v1920
          %v2140 = vadd.f32 %v2139, %v1922
          %2141 = vadd.xlane.f32.xlu0 %v2140
          %v2142 = vpop.xlane.xlu0 %2141
          %v2143 = vadd.f32 %v1924, %v1926
          %v2144 = vadd.f32 %v2143, %v1928
          %v2145 = vadd.f32 %v2144, %v1930
          %2146 = vadd.xlane.f32.xlu0 %v2145
          %v2147 = vpop.xlane.xlu0 %2146
          %v2148 = vadd.f32 %v1932, %v1934
          %v2149 = vadd.f32 %v2148, %v1936
          %v2150 = vadd.f32 %v2149, %v1938
          %2151 = vadd.xlane.f32.xlu0 %v2150
          %v2152 = vpop.xlane.xlu0 %2151
          %v2153 = vadd.f32 %v1940, %v1942
          %v2154 = vadd.f32 %v2153, %v1944
          %v2155 = vadd.f32 %v2154, %v1946
          %2156 = vadd.xlane.f32.xlu0 %v2155
          %v2157 = vpop.xlane.xlu0 %2156
          %v2158 = vadd.f32 %v1948, %v1950
          %v2159 = vadd.f32 %v2158, %v1952
          %v2160 = vadd.f32 %v2159, %v1954
          %2161 = vadd.xlane.f32.xlu0 %v2160
          %v2162 = vpop.xlane.xlu0 %2161
          %v2163 = vadd.f32 %v1956, %v1958
          %v2164 = vadd.f32 %v2163, %v1960
          %v2165 = vadd.f32 %v2164, %v1962
          %2166 = vadd.xlane.f32.xlu0 %v2165
          %v2167 = vpop.xlane.xlu0 %2166
          %v2168 = vadd.f32 %v1964, %v1966
          %v2169 = vadd.f32 %v2168, %v1968
          %v2170 = vadd.f32 %v2169, %v1970
          %2171 = vadd.xlane.f32.xlu0 %v2170
          %v2172 = vpop.xlane.xlu0 %2171
          %v2173 = vadd.f32 %v1972, %v1974
          %v2174 = vadd.f32 %v2173, %v1976
          %v2175 = vadd.f32 %v2174, %v1978
          %2176 = vadd.xlane.f32.xlu0 %v2175
          %v2177 = vpop.xlane.xlu0 %2176
          %v2178 = vadd.f32 %v1980, %v1982
          %v2179 = vadd.f32 %v2178, %v1984
          %v2180 = vadd.f32 %v2179, %v1986
          %2181 = vadd.xlane.f32.xlu0 %v2180
          %v2182 = vpop.xlane.xlu0 %2181
          %v2183 = vadd.f32 %v1988, %v1990
          %v2184 = vadd.f32 %v2183, %v1992
          %v2185 = vadd.f32 %v2184, %v1994
          %2186 = vadd.xlane.f32.xlu0 %v2185
          %v2187 = vpop.xlane.xlu0 %2186
          %v2188 = vadd.f32 %v1996, %v1998
          %v2189 = vadd.f32 %v2188, %v2000
          %v2190 = vadd.f32 %v2189, %v2002
          %2191 = vadd.xlane.f32.xlu0 %v2190
          %v2192 = vpop.xlane.xlu0 %2191
          %v2193 = vadd.f32 %v2004, %v2006
          %v2194 = vadd.f32 %v2193, %v2008
          %v2195 = vadd.f32 %v2194, %v2010
          %2196 = vadd.xlane.f32.xlu0 %v2195
          %v2197 = vpop.xlane.xlu0 %2196
          %v2198 = vadd.f32 %v2012, %v2014
          %v2199 = vadd.f32 %v2198, %v2016
          %v2200 = vadd.f32 %v2199, %v2018
          %2201 = vadd.xlane.f32.xlu0 %v2200
          %v2202 = vpop.xlane.xlu0 %2201
          %v2203 = vadd.f32 %v2020, %v2022
          %v2204 = vadd.f32 %v2203, %v2024
          %v2205 = vadd.f32 %v2204, %v2026
          %2206 = vadd.xlane.f32.xlu0 %v2205
          %v2207 = vpop.xlane.xlu0 %2206
          %v2208 = vadd.f32 %v2028, %v2030
          %v2209 = vadd.f32 %v2208, %v2032
          %v2210 = vadd.f32 %v2209, %v2034
          %2211 = vadd.xlane.f32.xlu0 %v2210
          %v2212 = vpop.xlane.xlu0 %2211
          %v2213 = vadd.f32 %v2036, %v2038
          %v2214 = vadd.f32 %v2213, %v2040
          %v2215 = vadd.f32 %v2214, %v2042
          %2216 = vadd.xlane.f32.xlu0 %v2215
          %v2217 = vpop.xlane.xlu0 %2216
          %v2218 = vadd.f32 %v2044, %v2046
          %v2219 = vadd.f32 %v2218, %v2048
          %v2220 = vadd.f32 %v2219, %v2050
          %2221 = vadd.xlane.f32.xlu0 %v2220
          %v2222 = vpop.xlane.xlu0 %2221
          %v2223 = vadd.f32 %v2052, %v2054
          %v2224 = vadd.f32 %v2223, %v2056
          %v2225 = vadd.f32 %v2224, %v2058
          %2226 = vadd.xlane.f32.xlu0 %v2225
          %v2227 = vpop.xlane.xlu0 %2226
          %v2228 = vadd.f32 %v2060, %v2062
          %v2229 = vadd.f32 %v2228, %v2064
          %v2230 = vadd.f32 %v2229, %v2066
          %2231 = vadd.xlane.f32.xlu0 %v2230
          %v2232 = vpop.xlane.xlu0 %2231
          %v2233 = vadd.f32 %v2068, %v2070
          %v2234 = vadd.f32 %v2233, %v2072
          %v2235 = vadd.f32 %v2234, %v2074
          %2236 = vadd.xlane.f32.xlu0 %v2235
          %v2237 = vpop.xlane.xlu0 %2236
          %v2238 = vadd.f32 %v2076, %v2078
          %v2239 = vadd.f32 %v2238, %v2080
          %v2240 = vadd.f32 %v2239, %v2082
          %2241 = vadd.xlane.f32.xlu0 %v2240
          %v2242 = vpop.xlane.xlu0 %2241
          %v2243 = vadd.f32 %v1507, %v2087
          %v2244 = vadd.f32 %v1508, %v2092
          %v2245 = vadd.f32 %v1509, %v2097
          %v2246 = vadd.f32 %v1510, %v2102
          %v2247 = vadd.f32 %v1511, %v2107
          %v2248 = vadd.f32 %v1512, %v2112
          %v2249 = vadd.f32 %v1513, %v2117
          %v2250 = vadd.f32 %v1514, %v2122
          %v2251 = vadd.f32 %v1515, %v2127
          %v2252 = vadd.f32 %v1516, %v2132
          %v2253 = vadd.f32 %v1517, %v2137
          %v2254 = vadd.f32 %v1518, %v2142
          %v2255 = vadd.f32 %v1519, %v2147
          %v2256 = vadd.f32 %v1520, %v2152
          %v2257 = vadd.f32 %v1521, %v2157
          %v2258 = vadd.f32 %v1522, %v2162
          %v2259 = vadd.f32 %v1523, %v2167
          %v2260 = vadd.f32 %v1524, %v2172
          %v2261 = vadd.f32 %v1525, %v2177
          %v2262 = vadd.f32 %v1526, %v2182
          %v2263 = vadd.f32 %v1527, %v2187
          %v2264 = vadd.f32 %v1528, %v2192
          %v2265 = vadd.f32 %v1529, %v2197
          %v2266 = vadd.f32 %v1530, %v2202
          %v2267 = vadd.f32 %v1531, %v2207
          %v2268 = vadd.f32 %v1532, %v2212
          %v2269 = vadd.f32 %v1533, %v2217
          %v2270 = vadd.f32 %v1534, %v2222
          %v2271 = vadd.f32 %v1535, %v2227
          %v2272 = vadd.f32 %v1536, %v2232
          %v2273 = vadd.f32 %v1537, %v2237
          %v2274 = vadd.f32 %v1538, %v2242
          %vm2275 = vcmask 7168
          %2276 = vst.msk [vmem:[#allocation3] sm:$0xff] %vm2275, %v2243
          %2277 = vst.msk [vmem:[#allocation3 + $0x8] sm:$0xff] %vm2275, %v2244
          %2278 = vst.msk [vmem:[#allocation3 + $0x10] sm:$0xff] %vm2275, %v2245
          %2279 = vst.msk [vmem:[#allocation3 + $0x18] sm:$0xff] %vm2275, %v2246
          %2280 = vst.msk [vmem:[#allocation3 + $0x20] sm:$0xff] %vm2275, %v2247
          %2281 = vst.msk [vmem:[#allocation3 + $0x28] sm:$0xff] %vm2275, %v2248
          %2282 = vst.msk [vmem:[#allocation3 + $0x30] sm:$0xff] %vm2275, %v2249
          %2283 = vst.msk [vmem:[#allocation3 + $0x38] sm:$0xff] %vm2275, %v2250
          %2284 = vst.msk [vmem:[#allocation3 + $0x40] sm:$0xff] %vm2275, %v2251
          %2285 = vst.msk [vmem:[#allocation3 + $0x48] sm:$0xff] %vm2275, %v2252
          %2286 = vst.msk [vmem:[#allocation3 + $0x50] sm:$0xff] %vm2275, %v2253
          %2287 = vst.msk [vmem:[#allocation3 + $0x58] sm:$0xff] %vm2275, %v2254
          %2288 = vst.msk [vmem:[#allocation3 + $0x60] sm:$0xff] %vm2275, %v2255
          %2289 = vst.msk [vmem:[#allocation3 + $0x68] sm:$0xff] %vm2275, %v2256
          %2290 = vst.msk [vmem:[#allocation3 + $0x70] sm:$0xff] %vm2275, %v2257
          %2291 = vst.msk [vmem:[#allocation3 + $0x78] sm:$0xff] %vm2275, %v2258
          %2292 = vst.msk [vmem:[#allocation3 + $0x80] sm:$0xff] %vm2275, %v2259
          %2293 = vst.msk [vmem:[#allocation3 + $0x88] sm:$0xff] %vm2275, %v2260
          %2294 = vst.msk [vmem:[#allocation3 + $0x90] sm:$0xff] %vm2275, %v2261
          %2295 = vst.msk [vmem:[#allocation3 + $0x98] sm:$0xff] %vm2275, %v2262
          %2296 = vst.msk [vmem:[#allocation3 + $0xa0] sm:$0xff] %vm2275, %v2263
          %2297 = vst.msk [vmem:[#allocation3 + $0xa8] sm:$0xff] %vm2275, %v2264
          %2298 = vst.msk [vmem:[#allocation3 + $0xb0] sm:$0xff] %vm2275, %v2265
          %2299 = vst.msk [vmem:[#allocation3 + $0xb8] sm:$0xff] %vm2275, %v2266
          %2300 = vst.msk [vmem:[#allocation3 + $0xc0] sm:$0xff] %vm2275, %v2267
          %2301 = vst.msk [vmem:[#allocation3 + $0xc8] sm:$0xff] %vm2275, %v2268
          %2302 = vst.msk [vmem:[#allocation3 + $0xd0] sm:$0xff] %vm2275, %v2269
          %2303 = vst.msk [vmem:[#allocation3 + $0xd8] sm:$0xff] %vm2275, %v2270
          %2304 = vst.msk [vmem:[#allocation3 + $0xe0] sm:$0xff] %vm2275, %v2271
          %2305 = vst.msk [vmem:[#allocation3 + $0xe8] sm:$0xff] %vm2275, %v2272
          %2306 = vst.msk [vmem:[#allocation3 + $0xf0] sm:$0xff] %vm2275, %v2273
          %2307 = vst.msk [vmem:[#allocation3 + $0xf8] sm:$0xff] %vm2275, %v2274
          %2308 = vst.msk [vmem:[#allocation2] sm:$0xff] %vm2275, %v1347
          %2309 = vst.msk [vmem:[#allocation2 + $0x8] sm:$0xff] %vm2275, %v1348
          %2310 = vst.msk [vmem:[#allocation2 + $0x10] sm:$0xff] %vm2275, %v1349
          %2311 = vst.msk [vmem:[#allocation2 + $0x18] sm:$0xff] %vm2275, %v1350
          %2312 = vst.msk [vmem:[#allocation2 + $0x20] sm:$0xff] %vm2275, %v1351
          %2313 = vst.msk [vmem:[#allocation2 + $0x28] sm:$0xff] %vm2275, %v1352
          %2314 = vst.msk [vmem:[#allocation2 + $0x30] sm:$0xff] %vm2275, %v1353
          %2315 = vst.msk [vmem:[#allocation2 + $0x38] sm:$0xff] %vm2275, %v1354
          %2316 = vst.msk [vmem:[#allocation2 + $0x40] sm:$0xff] %vm2275, %v1355
          %2317 = vst.msk [vmem:[#allocation2 + $0x48] sm:$0xff] %vm2275, %v1356
          %2318 = vst.msk [vmem:[#allocation2 + $0x50] sm:$0xff] %vm2275, %v1357
          %2319 = vst.msk [vmem:[#allocation2 + $0x58] sm:$0xff] %vm2275, %v1358
          %2320 = vst.msk [vmem:[#allocation2 + $0x60] sm:$0xff] %vm2275, %v1359
          %2321 = vst.msk [vmem:[#allocation2 + $0x68] sm:$0xff] %vm2275, %v1360
          %2322 = vst.msk [vmem:[#allocation2 + $0x70] sm:$0xff] %vm2275, %v1361
          %2323 = vst.msk [vmem:[#allocation2 + $0x78] sm:$0xff] %vm2275, %v1362
          %2324 = vst.msk [vmem:[#allocation2 + $0x80] sm:$0xff] %vm2275, %v1363
          %2325 = vst.msk [vmem:[#allocation2 + $0x88] sm:$0xff] %vm2275, %v1364
          %2326 = vst.msk [vmem:[#allocation2 + $0x90] sm:$0xff] %vm2275, %v1365
          %2327 = vst.msk [vmem:[#allocation2 + $0x98] sm:$0xff] %vm2275, %v1366
          %2328 = vst.msk [vmem:[#allocation2 + $0xa0] sm:$0xff] %vm2275, %v1367
          %2329 = vst.msk [vmem:[#allocation2 + $0xa8] sm:$0xff] %vm2275, %v1368
          %2330 = vst.msk [vmem:[#allocation2 + $0xb0] sm:$0xff] %vm2275, %v1369
          %2331 = vst.msk [vmem:[#allocation2 + $0xb8] sm:$0xff] %vm2275, %v1370
          %2332 = vst.msk [vmem:[#allocation2 + $0xc0] sm:$0xff] %vm2275, %v1371
          %2333 = vst.msk [vmem:[#allocation2 + $0xc8] sm:$0xff] %vm2275, %v1372
          %2334 = vst.msk [vmem:[#allocation2 + $0xd0] sm:$0xff] %vm2275, %v1373
          %2335 = vst.msk [vmem:[#allocation2 + $0xd8] sm:$0xff] %vm2275, %v1374
          %2336 = vst.msk [vmem:[#allocation2 + $0xe0] sm:$0xff] %vm2275, %v1375
          %2337 = vst.msk [vmem:[#allocation2 + $0xe8] sm:$0xff] %vm2275, %v1376
          %2338 = vst.msk [vmem:[#allocation2 + $0xf0] sm:$0xff] %vm2275, %v1377
          %2339 = vst.msk [vmem:[#allocation2 + $0xf8] sm:$0xff] %vm2275, %v1378
        $region40: #{projection_layer.1} parent=31 // pred_fallthru
          _
        %p2340 = scmp.eq.s32.totalorder %s21, 1
        %p2341 = pnand %p1081, %p2340
        %p2342 = pneg %p2341
        // Predicated region
        $region41: #{projection_layer.1} parent=31 // pred_check
          _
        $region42: #{projection_layer.1} parent=31 // pred_check_branch
          %2344 = sbr.rel (%p2341) target = $region44
        $region43: #{projection_layer.1} parent=31 // pred_region
          %v2345 = vld [vmem:[#allocation2] sm:$0xff]
          %v2346 = vld [vmem:[#allocation2 + $0x8] sm:$0xff]
          %v2347 = vld [vmem:[#allocation2 + $0x10] sm:$0xff]
          %v2348 = vld [vmem:[#allocation2 + $0x18] sm:$0xff]
          %v2349 = vld [vmem:[#allocation2 + $0x20] sm:$0xff]
          %v2350 = vld [vmem:[#allocation2 + $0x28] sm:$0xff]
          %v2351 = vld [vmem:[#allocation2 + $0x30] sm:$0xff]
          %v2352 = vld [vmem:[#allocation2 + $0x38] sm:$0xff]
          %v2353 = vld [vmem:[#allocation2 + $0x40] sm:$0xff]
          %v2354 = vld [vmem:[#allocation2 + $0x48] sm:$0xff]
          %v2355 = vld [vmem:[#allocation2 + $0x50] sm:$0xff]
          %v2356 = vld [vmem:[#allocation2 + $0x58] sm:$0xff]
          %v2357 = vld [vmem:[#allocation2 + $0x60] sm:$0xff]
          %v2358 = vld [vmem:[#allocation2 + $0x68] sm:$0xff]
          %v2359 = vld [vmem:[#allocation2 + $0x70] sm:$0xff]
          %v2360 = vld [vmem:[#allocation2 + $0x78] sm:$0xff]
          %v2361 = vld [vmem:[#allocation2 + $0x80] sm:$0xff]
          %v2362 = vld [vmem:[#allocation2 + $0x88] sm:$0xff]
          %v2363 = vld [vmem:[#allocation2 + $0x90] sm:$0xff]
          %v2364 = vld [vmem:[#allocation2 + $0x98] sm:$0xff]
          %v2365 = vld [vmem:[#allocation2 + $0xa0] sm:$0xff]
          %v2366 = vld [vmem:[#allocation2 + $0xa8] sm:$0xff]
          %v2367 = vld [vmem:[#allocation2 + $0xb0] sm:$0xff]
          %v2368 = vld [vmem:[#allocation2 + $0xb8] sm:$0xff]
          %v2369 = vld [vmem:[#allocation2 + $0xc0] sm:$0xff]
          %v2370 = vld [vmem:[#allocation2 + $0xc8] sm:$0xff]
          %v2371 = vld [vmem:[#allocation2 + $0xd0] sm:$0xff]
          %v2372 = vld [vmem:[#allocation2 + $0xd8] sm:$0xff]
          %v2373 = vld [vmem:[#allocation2 + $0xe0] sm:$0xff]
          %v2374 = vld [vmem:[#allocation2 + $0xe8] sm:$0xff]
          %v2375 = vld [vmem:[#allocation2 + $0xf0] sm:$0xff]
          %v2376 = vld [vmem:[#allocation2 + $0xf8] sm:$0xff]
          %v2377 = vld [vmem:[#allocation3] sm:$0xff]
          %v2378 = vld [vmem:[#allocation3 + $0x8] sm:$0xff]
          %v2379 = vld [vmem:[#allocation3 + $0x10] sm:$0xff]
          %v2380 = vld [vmem:[#allocation3 + $0x18] sm:$0xff]
          %v2381 = vld [vmem:[#allocation3 + $0x20] sm:$0xff]
          %v2382 = vld [vmem:[#allocation3 + $0x28] sm:$0xff]
          %v2383 = vld [vmem:[#allocation3 + $0x30] sm:$0xff]
          %v2384 = vld [vmem:[#allocation3 + $0x38] sm:$0xff]
          %v2385 = vld [vmem:[#allocation3 + $0x40] sm:$0xff]
          %v2386 = vld [vmem:[#allocation3 + $0x48] sm:$0xff]
          %v2387 = vld [vmem:[#allocation3 + $0x50] sm:$0xff]
          %v2388 = vld [vmem:[#allocation3 + $0x58] sm:$0xff]
          %v2389 = vld [vmem:[#allocation3 + $0x60] sm:$0xff]
          %v2390 = vld [vmem:[#allocation3 + $0x68] sm:$0xff]
          %v2391 = vld [vmem:[#allocation3 + $0x70] sm:$0xff]
          %v2392 = vld [vmem:[#allocation3 + $0x78] sm:$0xff]
          %v2393 = vld [vmem:[#allocation3 + $0x80] sm:$0xff]
          %v2394 = vld [vmem:[#allocation3 + $0x88] sm:$0xff]
          %v2395 = vld [vmem:[#allocation3 + $0x90] sm:$0xff]
          %v2396 = vld [vmem:[#allocation3 + $0x98] sm:$0xff]
          %v2397 = vld [vmem:[#allocation3 + $0xa0] sm:$0xff]
          %v2398 = vld [vmem:[#allocation3 + $0xa8] sm:$0xff]
          %v2399 = vld [vmem:[#allocation3 + $0xb0] sm:$0xff]
          %v2400 = vld [vmem:[#allocation3 + $0xb8] sm:$0xff]
          %v2401 = vld [vmem:[#allocation3 + $0xc0] sm:$0xff]
          %v2402 = vld [vmem:[#allocation3 + $0xc8] sm:$0xff]
          %v2403 = vld [vmem:[#allocation3 + $0xd0] sm:$0xff]
          %v2404 = vld [vmem:[#allocation3 + $0xd8] sm:$0xff]
          %v2405 = vld [vmem:[#allocation3 + $0xe0] sm:$0xff]
          %v2406 = vld [vmem:[#allocation3 + $0xe8] sm:$0xff]
          %v2407 = vld [vmem:[#allocation3 + $0xf0] sm:$0xff]
          %v2408 = vld [vmem:[#allocation3 + $0xf8] sm:$0xff]
          %v2409 = vlog2.pop %v2377
          %v2410 = vmul.f32 %v2409, 0.6931472
          %v2411 = vlog2.pop %v2378
          %v2412 = vmul.f32 %v2411, 0.6931472
          %v2413 = vlog2.pop %v2379
          %v2414 = vmul.f32 %v2413, 0.6931472
          %v2415 = vlog2.pop %v2380
          %v2416 = vmul.f32 %v2415, 0.6931472
          %v2417 = vlog2.pop %v2381
          %v2418 = vmul.f32 %v2417, 0.6931472
          %v2419 = vlog2.pop %v2382
          %v2420 = vmul.f32 %v2419, 0.6931472
          %v2421 = vlog2.pop %v2383
          %v2422 = vmul.f32 %v2421, 0.6931472
          %v2423 = vlog2.pop %v2384
          %v2424 = vmul.f32 %v2423, 0.6931472
          %v2425 = vlog2.pop %v2385
          %v2426 = vmul.f32 %v2425, 0.6931472
          %v2427 = vlog2.pop %v2386
          %v2428 = vmul.f32 %v2427, 0.6931472
          %v2429 = vlog2.pop %v2387
          %v2430 = vmul.f32 %v2429, 0.6931472
          %v2431 = vlog2.pop %v2388
          %v2432 = vmul.f32 %v2431, 0.6931472
          %v2433 = vlog2.pop %v2389
          %v2434 = vmul.f32 %v2433, 0.6931472
          %v2435 = vlog2.pop %v2390
          %v2436 = vmul.f32 %v2435, 0.6931472
          %v2437 = vlog2.pop %v2391
          %v2438 = vmul.f32 %v2437, 0.6931472
          %v2439 = vlog2.pop %v2392
          %v2440 = vmul.f32 %v2439, 0.6931472
          %v2441 = vlog2.pop %v2393
          %v2442 = vmul.f32 %v2441, 0.6931472
          %v2443 = vlog2.pop %v2394
          %v2444 = vmul.f32 %v2443, 0.6931472
          %v2445 = vlog2.pop %v2395
          %v2446 = vmul.f32 %v2445, 0.6931472
          %v2447 = vlog2.pop %v2396
          %v2448 = vmul.f32 %v2447, 0.6931472
          %v2449 = vlog2.pop %v2397
          %v2450 = vmul.f32 %v2449, 0.6931472
          %v2451 = vlog2.pop %v2398
          %v2452 = vmul.f32 %v2451, 0.6931472
          %v2453 = vlog2.pop %v2399
          %v2454 = vmul.f32 %v2453, 0.6931472
          %v2455 = vlog2.pop %v2400
          %v2456 = vmul.f32 %v2455, 0.6931472
          %v2457 = vlog2.pop %v2401
          %v2458 = vmul.f32 %v2457, 0.6931472
          %v2459 = vlog2.pop %v2402
          %v2460 = vmul.f32 %v2459, 0.6931472
          %v2461 = vlog2.pop %v2403
          %v2462 = vmul.f32 %v2461, 0.6931472
          %v2463 = vlog2.pop %v2404
          %v2464 = vmul.f32 %v2463, 0.6931472
          %v2465 = vlog2.pop %v2405
          %v2466 = vmul.f32 %v2465, 0.6931472
          %v2467 = vlog2.pop %v2406
          %v2468 = vmul.f32 %v2467, 0.6931472
          %v2469 = vlog2.pop %v2407
          %v2470 = vmul.f32 %v2469, 0.6931472
          %v2471 = vlog2.pop %v2408
          %v2472 = vmul.f32 %v2471, 0.6931472
          %v2473 = vadd.f32 %v2345, %v2410
          %v2474 = vadd.f32 %v2346, %v2412
          %v2475 = vadd.f32 %v2347, %v2414
          %v2476 = vadd.f32 %v2348, %v2416
          %v2477 = vadd.f32 %v2349, %v2418
          %v2478 = vadd.f32 %v2350, %v2420
          %v2479 = vadd.f32 %v2351, %v2422
          %v2480 = vadd.f32 %v2352, %v2424
          %v2481 = vadd.f32 %v2353, %v2426
          %v2482 = vadd.f32 %v2354, %v2428
          %v2483 = vadd.f32 %v2355, %v2430
          %v2484 = vadd.f32 %v2356, %v2432
          %v2485 = vadd.f32 %v2357, %v2434
          %v2486 = vadd.f32 %v2358, %v2436
          %v2487 = vadd.f32 %v2359, %v2438
          %v2488 = vadd.f32 %v2360, %v2440
          %v2489 = vadd.f32 %v2361, %v2442
          %v2490 = vadd.f32 %v2362, %v2444
          %v2491 = vadd.f32 %v2363, %v2446
          %v2492 = vadd.f32 %v2364, %v2448
          %v2493 = vadd.f32 %v2365, %v2450
          %v2494 = vadd.f32 %v2366, %v2452
          %v2495 = vadd.f32 %v2367, %v2454
          %v2496 = vadd.f32 %v2368, %v2456
          %v2497 = vadd.f32 %v2369, %v2458
          %v2498 = vadd.f32 %v2370, %v2460
          %v2499 = vadd.f32 %v2371, %v2462
          %v2500 = vadd.f32 %v2372, %v2464
          %v2501 = vadd.f32 %v2373, %v2466
          %v2502 = vadd.f32 %v2374, %v2468
          %v2503 = vadd.f32 %v2375, %v2470
          %v2504 = vadd.f32 %v2376, %v2472
          %vm2505 = vcmask 7168
          %2506 = vst.msk [vmem:[#allocation2] sm:$0xff] %vm2505, %v2473
          %2507 = vst.msk [vmem:[#allocation2 + $0x8] sm:$0xff] %vm2505, %v2474
          %2508 = vst.msk [vmem:[#allocation2 + $0x10] sm:$0xff] %vm2505, %v2475
          %2509 = vst.msk [vmem:[#allocation2 + $0x18] sm:$0xff] %vm2505, %v2476
          %2510 = vst.msk [vmem:[#allocation2 + $0x20] sm:$0xff] %vm2505, %v2477
          %2511 = vst.msk [vmem:[#allocation2 + $0x28] sm:$0xff] %vm2505, %v2478
          %2512 = vst.msk [vmem:[#allocation2 + $0x30] sm:$0xff] %vm2505, %v2479
          %2513 = vst.msk [vmem:[#allocation2 + $0x38] sm:$0xff] %vm2505, %v2480
          %2514 = vst.msk [vmem:[#allocation2 + $0x40] sm:$0xff] %vm2505, %v2481
          %2515 = vst.msk [vmem:[#allocation2 + $0x48] sm:$0xff] %vm2505, %v2482
          %2516 = vst.msk [vmem:[#allocation2 + $0x50] sm:$0xff] %vm2505, %v2483
          %2517 = vst.msk [vmem:[#allocation2 + $0x58] sm:$0xff] %vm2505, %v2484
          %2518 = vst.msk [vmem:[#allocation2 + $0x60] sm:$0xff] %vm2505, %v2485
          %2519 = vst.msk [vmem:[#allocation2 + $0x68] sm:$0xff] %vm2505, %v2486
          %2520 = vst.msk [vmem:[#allocation2 + $0x70] sm:$0xff] %vm2505, %v2487
          %2521 = vst.msk [vmem:[#allocation2 + $0x78] sm:$0xff] %vm2505, %v2488
          %2522 = vst.msk [vmem:[#allocation2 + $0x80] sm:$0xff] %vm2505, %v2489
          %2523 = vst.msk [vmem:[#allocation2 + $0x88] sm:$0xff] %vm2505, %v2490
          %2524 = vst.msk [vmem:[#allocation2 + $0x90] sm:$0xff] %vm2505, %v2491
          %2525 = vst.msk [vmem:[#allocation2 + $0x98] sm:$0xff] %vm2505, %v2492
          %2526 = vst.msk [vmem:[#allocation2 + $0xa0] sm:$0xff] %vm2505, %v2493
          %2527 = vst.msk [vmem:[#allocation2 + $0xa8] sm:$0xff] %vm2505, %v2494
          %2528 = vst.msk [vmem:[#allocation2 + $0xb0] sm:$0xff] %vm2505, %v2495
          %2529 = vst.msk [vmem:[#allocation2 + $0xb8] sm:$0xff] %vm2505, %v2496
          %2530 = vst.msk [vmem:[#allocation2 + $0xc0] sm:$0xff] %vm2505, %v2497
          %2531 = vst.msk [vmem:[#allocation2 + $0xc8] sm:$0xff] %vm2505, %v2498
          %2532 = vst.msk [vmem:[#allocation2 + $0xd0] sm:$0xff] %vm2505, %v2499
          %2533 = vst.msk [vmem:[#allocation2 + $0xd8] sm:$0xff] %vm2505, %v2500
          %2534 = vst.msk [vmem:[#allocation2 + $0xe0] sm:$0xff] %vm2505, %v2501
          %2535 = vst.msk [vmem:[#allocation2 + $0xe8] sm:$0xff] %vm2505, %v2502
          %2536 = vst.msk [vmem:[#allocation2 + $0xf0] sm:$0xff] %vm2505, %v2503
          %2537 = vst.msk [vmem:[#allocation2 + $0xf8] sm:$0xff] %vm2505, %v2504
        $region44: #{projection_layer.1} parent=31 // pred_fallthru
          _
        %p2538 = scmp.eq.s32.totalorder %s20, 1
        // Predicated region
        $region45: #{projection_layer.1} parent=31 // pred_check
          %p2539 = pneg %p2538
        $region46: #{projection_layer.1} parent=31 // pred_check_branch
          %2541 = sbr.rel (%p2539) target = $region48
        $region47: #{projection_layer.1} parent=31 // pred_region
          %v2542 = vld [vmem:[#allocation2] sm:$0xff]
          %v2543 = vld [vmem:[#allocation2 + $0x8] sm:$0xff]
          %v2544 = vld [vmem:[#allocation2 + $0x10] sm:$0xff]
          %v2545 = vld [vmem:[#allocation2 + $0x18] sm:$0xff]
          %v2546 = vld [vmem:[#allocation2 + $0x20] sm:$0xff]
          %v2547 = vld [vmem:[#allocation2 + $0x28] sm:$0xff]
          %v2548 = vld [vmem:[#allocation2 + $0x30] sm:$0xff]
          %v2549 = vld [vmem:[#allocation2 + $0x38] sm:$0xff]
          %v2550 = vld [vmem:[#allocation2 + $0x40] sm:$0xff]
          %v2551 = vld [vmem:[#allocation2 + $0x48] sm:$0xff]
          %v2552 = vld [vmem:[#allocation2 + $0x50] sm:$0xff]
          %v2553 = vld [vmem:[#allocation2 + $0x58] sm:$0xff]
          %v2554 = vld [vmem:[#allocation2 + $0x60] sm:$0xff]
          %v2555 = vld [vmem:[#allocation2 + $0x68] sm:$0xff]
          %v2556 = vld [vmem:[#allocation2 + $0x70] sm:$0xff]
          %v2557 = vld [vmem:[#allocation2 + $0x78] sm:$0xff]
          %v2558 = vld [vmem:[#allocation2 + $0x80] sm:$0xff]
          %v2559 = vld [vmem:[#allocation2 + $0x88] sm:$0xff]
          %v2560 = vld [vmem:[#allocation2 + $0x90] sm:$0xff]
          %v2561 = vld [vmem:[#allocation2 + $0x98] sm:$0xff]
          %v2562 = vld [vmem:[#allocation2 + $0xa0] sm:$0xff]
          %v2563 = vld [vmem:[#allocation2 + $0xa8] sm:$0xff]
          %v2564 = vld [vmem:[#allocation2 + $0xb0] sm:$0xff]
          %v2565 = vld [vmem:[#allocation2 + $0xb8] sm:$0xff]
          %v2566 = vld [vmem:[#allocation2 + $0xc0] sm:$0xff]
          %v2567 = vld [vmem:[#allocation2 + $0xc8] sm:$0xff]
          %v2568 = vld [vmem:[#allocation2 + $0xd0] sm:$0xff]
          %v2569 = vld [vmem:[#allocation2 + $0xd8] sm:$0xff]
          %v2570 = vld [vmem:[#allocation2 + $0xe0] sm:$0xff]
          %v2571 = vld [vmem:[#allocation2 + $0xe8] sm:$0xff]
          %v2572 = vld [vmem:[#allocation2 + $0xf0] sm:$0xff]
          %v2573 = vld [vmem:[#allocation2 + $0xf8] sm:$0xff]
          %2575 = vset.pattern.permute.xlu0 0
          %2576 = vperm.xlu0 %2575, %v2542
          %v2577 = vpop.permute.xlu0 %2576
          %2580 = vset.pattern.permute.xlu0 0
          %2581 = vperm.xlu0 %2580, %v2543
          %v2582 = vpop.permute.xlu0 %2581
          %2585 = vset.pattern.permute.xlu0 0
          %2586 = vperm.xlu0 %2585, %v2544
          %v2587 = vpop.permute.xlu0 %2586
          %2590 = vset.pattern.permute.xlu0 0
          %2591 = vperm.xlu0 %2590, %v2545
          %v2592 = vpop.permute.xlu0 %2591
          %2595 = vset.pattern.permute.xlu0 0
          %2596 = vperm.xlu0 %2595, %v2546
          %v2597 = vpop.permute.xlu0 %2596
          %2600 = vset.pattern.permute.xlu0 0
          %2601 = vperm.xlu0 %2600, %v2547
          %v2602 = vpop.permute.xlu0 %2601
          %2605 = vset.pattern.permute.xlu0 0
          %2606 = vperm.xlu0 %2605, %v2548
          %v2607 = vpop.permute.xlu0 %2606
          %2610 = vset.pattern.permute.xlu0 0
          %2611 = vperm.xlu0 %2610, %v2549
          %v2612 = vpop.permute.xlu0 %2611
          %2615 = vset.pattern.permute.xlu0 0
          %2616 = vperm.xlu0 %2615, %v2550
          %v2617 = vpop.permute.xlu0 %2616
          %2620 = vset.pattern.permute.xlu0 0
          %2621 = vperm.xlu0 %2620, %v2551
          %v2622 = vpop.permute.xlu0 %2621
          %2625 = vset.pattern.permute.xlu0 0
          %2626 = vperm.xlu0 %2625, %v2552
          %v2627 = vpop.permute.xlu0 %2626
          %2630 = vset.pattern.permute.xlu0 0
          %2631 = vperm.xlu0 %2630, %v2553
          %v2632 = vpop.permute.xlu0 %2631
          %2635 = vset.pattern.permute.xlu0 0
          %2636 = vperm.xlu0 %2635, %v2554
          %v2637 = vpop.permute.xlu0 %2636
          %2640 = vset.pattern.permute.xlu0 0
          %2641 = vperm.xlu0 %2640, %v2555
          %v2642 = vpop.permute.xlu0 %2641
          %2645 = vset.pattern.permute.xlu0 0
          %2646 = vperm.xlu0 %2645, %v2556
          %v2647 = vpop.permute.xlu0 %2646
          %2650 = vset.pattern.permute.xlu0 0
          %2651 = vperm.xlu0 %2650, %v2557
          %v2652 = vpop.permute.xlu0 %2651
          %2655 = vset.pattern.permute.xlu0 0
          %2656 = vperm.xlu0 %2655, %v2558
          %v2657 = vpop.permute.xlu0 %2656
          %2660 = vset.pattern.permute.xlu0 0
          %2661 = vperm.xlu0 %2660, %v2559
          %v2662 = vpop.permute.xlu0 %2661
          %2665 = vset.pattern.permute.xlu0 0
          %2666 = vperm.xlu0 %2665, %v2560
          %v2667 = vpop.permute.xlu0 %2666
          %2670 = vset.pattern.permute.xlu0 0
          %2671 = vperm.xlu0 %2670, %v2561
          %v2672 = vpop.permute.xlu0 %2671
          %2675 = vset.pattern.permute.xlu0 0
          %2676 = vperm.xlu0 %2675, %v2562
          %v2677 = vpop.permute.xlu0 %2676
          %2680 = vset.pattern.permute.xlu0 0
          %2681 = vperm.xlu0 %2680, %v2563
          %v2682 = vpop.permute.xlu0 %2681
          %2685 = vset.pattern.permute.xlu0 0
          %2686 = vperm.xlu0 %2685, %v2564
          %v2687 = vpop.permute.xlu0 %2686
          %2690 = vset.pattern.permute.xlu0 0
          %2691 = vperm.xlu0 %2690, %v2565
          %v2692 = vpop.permute.xlu0 %2691
          %2695 = vset.pattern.permute.xlu0 0
          %2696 = vperm.xlu0 %2695, %v2566
          %v2697 = vpop.permute.xlu0 %2696
          %2700 = vset.pattern.permute.xlu0 0
          %2701 = vperm.xlu0 %2700, %v2567
          %v2702 = vpop.permute.xlu0 %2701
          %2705 = vset.pattern.permute.xlu0 0
          %2706 = vperm.xlu0 %2705, %v2568
          %v2707 = vpop.permute.xlu0 %2706
          %2710 = vset.pattern.permute.xlu0 0
          %2711 = vperm.xlu0 %2710, %v2569
          %v2712 = vpop.permute.xlu0 %2711
          %2715 = vset.pattern.permute.xlu0 0
          %2716 = vperm.xlu0 %2715, %v2570
          %v2717 = vpop.permute.xlu0 %2716
          %2720 = vset.pattern.permute.xlu0 0
          %2721 = vperm.xlu0 %2720, %v2571
          %v2722 = vpop.permute.xlu0 %2721
          %2725 = vset.pattern.permute.xlu0 0
          %2726 = vperm.xlu0 %2725, %v2572
          %v2727 = vpop.permute.xlu0 %2726
          %2730 = vset.pattern.permute.xlu0 0
          %2731 = vperm.xlu0 %2730, %v2573
          %v2732 = vpop.permute.xlu0 %2731
          %v2734 = vsub.f32 %v735, %v2577
          %v2735 = vsub.f32 %v824, %v2577
          %v2736 = vsub.f32 %v913, %v2577
          %v2737 = vsub.f32 %v1002, %v2577
          %v2738 = vsub.f32 %v737, %v2582
          %v2739 = vsub.f32 %v826, %v2582
          %v2740 = vsub.f32 %v915, %v2582
          %v2741 = vsub.f32 %v1004, %v2582
          %v2742 = vsub.f32 %v740, %v2587
          %v2743 = vsub.f32 %v829, %v2587
          %v2744 = vsub.f32 %v918, %v2587
          %v2745 = vsub.f32 %v1007, %v2587
          %v2746 = vsub.f32 %v742, %v2592
          %v2747 = vsub.f32 %v831, %v2592
          %v2748 = vsub.f32 %v920, %v2592
          %v2749 = vsub.f32 %v1009, %v2592
          %v2750 = vsub.f32 %v745, %v2597
          %v2751 = vsub.f32 %v834, %v2597
          %v2752 = vsub.f32 %v923, %v2597
          %v2753 = vsub.f32 %v1012, %v2597
          %v2754 = vsub.f32 %v747, %v2602
          %v2755 = vsub.f32 %v836, %v2602
          %v2756 = vsub.f32 %v925, %v2602
          %v2757 = vsub.f32 %v1014, %v2602
          %v2758 = vsub.f32 %v750, %v2607
          %v2759 = vsub.f32 %v839, %v2607
          %v2760 = vsub.f32 %v928, %v2607
          %v2761 = vsub.f32 %v1017, %v2607
          %v2762 = vsub.f32 %v752, %v2612
          %v2763 = vsub.f32 %v841, %v2612
          %v2764 = vsub.f32 %v930, %v2612
          %v2765 = vsub.f32 %v1019, %v2612
          %v2766 = vsub.f32 %v755, %v2617
          %v2767 = vsub.f32 %v844, %v2617
          %v2768 = vsub.f32 %v933, %v2617
          %v2769 = vsub.f32 %v1022, %v2617
          %v2770 = vsub.f32 %v757, %v2622
          %v2771 = vsub.f32 %v846, %v2622
          %v2772 = vsub.f32 %v935, %v2622
          %v2773 = vsub.f32 %v1024, %v2622
          %v2774 = vsub.f32 %v760, %v2627
          %v2775 = vsub.f32 %v849, %v2627
          %v2776 = vsub.f32 %v938, %v2627
          %v2777 = vsub.f32 %v1027, %v2627
          %v2778 = vsub.f32 %v762, %v2632
          %v2779 = vsub.f32 %v851, %v2632
          %v2780 = vsub.f32 %v940, %v2632
          %v2781 = vsub.f32 %v1029, %v2632
          %v2782 = vsub.f32 %v765, %v2637
          %v2783 = vsub.f32 %v854, %v2637
          %v2784 = vsub.f32 %v943, %v2637
          %v2785 = vsub.f32 %v1032, %v2637
          %v2786 = vsub.f32 %v767, %v2642
          %v2787 = vsub.f32 %v856, %v2642
          %v2788 = vsub.f32 %v945, %v2642
          %v2789 = vsub.f32 %v1034, %v2642
          %v2790 = vsub.f32 %v770, %v2647
          %v2791 = vsub.f32 %v859, %v2647
          %v2792 = vsub.f32 %v948, %v2647
          %v2793 = vsub.f32 %v1037, %v2647
          %v2794 = vsub.f32 %v772, %v2652
          %v2795 = vsub.f32 %v861, %v2652
          %v2796 = vsub.f32 %v950, %v2652
          %v2797 = vsub.f32 %v1039, %v2652
          %v2798 = vsub.f32 %v775, %v2657
          %v2799 = vsub.f32 %v864, %v2657
          %v2800 = vsub.f32 %v953, %v2657
          %v2801 = vsub.f32 %v1042, %v2657
          %v2802 = vsub.f32 %v777, %v2662
          %v2803 = vsub.f32 %v866, %v2662
          %v2804 = vsub.f32 %v955, %v2662
          %v2805 = vsub.f32 %v1044, %v2662
          %v2806 = vsub.f32 %v780, %v2667
          %v2807 = vsub.f32 %v869, %v2667
          %v2808 = vsub.f32 %v958, %v2667
          %v2809 = vsub.f32 %v1047, %v2667
          %v2810 = vsub.f32 %v782, %v2672
          %v2811 = vsub.f32 %v871, %v2672
          %v2812 = vsub.f32 %v960, %v2672
          %v2813 = vsub.f32 %v1049, %v2672
          %v2814 = vsub.f32 %v785, %v2677
          %v2815 = vsub.f32 %v874, %v2677
          %v2816 = vsub.f32 %v963, %v2677
          %v2817 = vsub.f32 %v1052, %v2677
          %v2818 = vsub.f32 %v787, %v2682
          %v2819 = vsub.f32 %v876, %v2682
          %v2820 = vsub.f32 %v965, %v2682
          %v2821 = vsub.f32 %v1054, %v2682
          %v2822 = vsub.f32 %v790, %v2687
          %v2823 = vsub.f32 %v879, %v2687
          %v2824 = vsub.f32 %v968, %v2687
          %v2825 = vsub.f32 %v1057, %v2687
          %v2826 = vsub.f32 %v792, %v2692
          %v2827 = vsub.f32 %v881, %v2692
          %v2828 = vsub.f32 %v970, %v2692
          %v2829 = vsub.f32 %v1059, %v2692
          %v2830 = vsub.f32 %v795, %v2697
          %v2831 = vsub.f32 %v884, %v2697
          %v2832 = vsub.f32 %v973, %v2697
          %v2833 = vsub.f32 %v1062, %v2697
          %v2834 = vsub.f32 %v797, %v2702
          %v2835 = vsub.f32 %v886, %v2702
          %v2836 = vsub.f32 %v975, %v2702
          %v2837 = vsub.f32 %v1064, %v2702
          %v2838 = vsub.f32 %v800, %v2707
          %v2839 = vsub.f32 %v889, %v2707
          %v2840 = vsub.f32 %v978, %v2707
          %v2841 = vsub.f32 %v1067, %v2707
          %v2842 = vsub.f32 %v802, %v2712
          %v2843 = vsub.f32 %v891, %v2712
          %v2844 = vsub.f32 %v980, %v2712
          %v2845 = vsub.f32 %v1069, %v2712
          %v2846 = vsub.f32 %v805, %v2717
          %v2847 = vsub.f32 %v894, %v2717
          %v2848 = vsub.f32 %v983, %v2717
          %v2849 = vsub.f32 %v1072, %v2717
          %v2850 = vsub.f32 %v807, %v2722
          %v2851 = vsub.f32 %v896, %v2722
          %v2852 = vsub.f32 %v985, %v2722
          %v2853 = vsub.f32 %v1074, %v2722
          %v2854 = vsub.f32 %v810, %v2727
          %v2855 = vsub.f32 %v899, %v2727
          %v2856 = vsub.f32 %v988, %v2727
          %v2857 = vsub.f32 %v1077, %v2727
          %v2858 = vsub.f32 %v812, %v2732
          %v2859 = vsub.f32 %v901, %v2732
          %v2860 = vsub.f32 %v990, %v2732
          %v2861 = vsub.f32 %v1079, %v2732
          %2862 = vst [vmem:[%s213] sm:$0xff] %v2734
          %2863 = vst [vmem:[%s213 + $0x8] sm:$0xff] %v2735
          %2864 = vst [vmem:[%s213 + $0x10] sm:$0xff] %v2736
          %2865 = vst [vmem:[%s213 + $0x18] sm:$0xff] %v2737
          %2866 = vst [vmem:[%s213 + $0x20] sm:$0xff] %v2738
          %2867 = vst [vmem:[%s213 + $0x28] sm:$0xff] %v2739
          %2868 = vst [vmem:[%s213 + $0x30] sm:$0xff] %v2740
          %2869 = vst [vmem:[%s213 + $0x38] sm:$0xff] %v2741
          %2870 = vst [vmem:[%s213 + $0x40] sm:$0xff] %v2742
          %2871 = vst [vmem:[%s213 + $0x48] sm:$0xff] %v2743
          %2872 = vst [vmem:[%s213 + $0x50] sm:$0xff] %v2744
          %2873 = vst [vmem:[%s213 + $0x58] sm:$0xff] %v2745
          %2874 = vst [vmem:[%s213 + $0x60] sm:$0xff] %v2746
          %2875 = vst [vmem:[%s213 + $0x68] sm:$0xff] %v2747
          %2876 = vst [vmem:[%s213 + $0x70] sm:$0xff] %v2748
          %2877 = vst [vmem:[%s213 + $0x78] sm:$0xff] %v2749
          %2878 = vst [vmem:[%s213 + $0x80] sm:$0xff] %v2750
          %2879 = vst [vmem:[%s213 + $0x88] sm:$0xff] %v2751
          %2880 = vst [vmem:[%s213 + $0x90] sm:$0xff] %v2752
          %2881 = vst [vmem:[%s213 + $0x98] sm:$0xff] %v2753
          %2882 = vst [vmem:[%s213 + $0xa0] sm:$0xff] %v2754
          %2883 = vst [vmem:[%s213 + $0xa8] sm:$0xff] %v2755
          %2884 = vst [vmem:[%s213 + $0xb0] sm:$0xff] %v2756
          %2885 = vst [vmem:[%s213 + $0xb8] sm:$0xff] %v2757
          %2886 = vst [vmem:[%s213 + $0xc0] sm:$0xff] %v2758
          %2887 = vst [vmem:[%s213 + $0xc8] sm:$0xff] %v2759
          %2888 = vst [vmem:[%s213 + $0xd0] sm:$0xff] %v2760
          %2889 = vst [vmem:[%s213 + $0xd8] sm:$0xff] %v2761
          %2890 = vst [vmem:[%s213 + $0xe0] sm:$0xff] %v2762
          %2891 = vst [vmem:[%s213 + $0xe8] sm:$0xff] %v2763
          %2892 = vst [vmem:[%s213 + $0xf0] sm:$0xff] %v2764
          %2893 = vst [vmem:[%s213 + $0xf8] sm:$0xff] %v2765
          %2894 = vst [vmem:[%s213 + $0x100] sm:$0xff] %v2766
          %2895 = vst [vmem:[%s213 + $0x108] sm:$0xff] %v2767
          %2896 = vst [vmem:[%s213 + $0x110] sm:$0xff] %v2768
          %2897 = vst [vmem:[%s213 + $0x118] sm:$0xff] %v2769
          %2898 = vst [vmem:[%s213 + $0x120] sm:$0xff] %v2770
          %2899 = vst [vmem:[%s213 + $0x128] sm:$0xff] %v2771
          %2900 = vst [vmem:[%s213 + $0x130] sm:$0xff] %v2772
          %2901 = vst [vmem:[%s213 + $0x138] sm:$0xff] %v2773
          %2902 = vst [vmem:[%s213 + $0x140] sm:$0xff] %v2774
          %2903 = vst [vmem:[%s213 + $0x148] sm:$0xff] %v2775
          %2904 = vst [vmem:[%s213 + $0x150] sm:$0xff] %v2776
          %2905 = vst [vmem:[%s213 + $0x158] sm:$0xff] %v2777
          %2906 = vst [vmem:[%s213 + $0x160] sm:$0xff] %v2778
          %2907 = vst [vmem:[%s213 + $0x168] sm:$0xff] %v2779
          %2908 = vst [vmem:[%s213 + $0x170] sm:$0xff] %v2780
          %2909 = vst [vmem:[%s213 + $0x178] sm:$0xff] %v2781
          %2910 = vst [vmem:[%s213 + $0x180] sm:$0xff] %v2782
          %2911 = vst [vmem:[%s213 + $0x188] sm:$0xff] %v2783
          %2912 = vst [vmem:[%s213 + $0x190] sm:$0xff] %v2784
          %2913 = vst [vmem:[%s213 + $0x198] sm:$0xff] %v2785
          %2914 = vst [vmem:[%s213 + $0x1a0] sm:$0xff] %v2786
          %2915 = vst [vmem:[%s213 + $0x1a8] sm:$0xff] %v2787
          %2916 = vst [vmem:[%s213 + $0x1b0] sm:$0xff] %v2788
          %2917 = vst [vmem:[%s213 + $0x1b8] sm:$0xff] %v2789
          %2918 = vst [vmem:[%s213 + $0x1c0] sm:$0xff] %v2790
          %2919 = vst [vmem:[%s213 + $0x1c8] sm:$0xff] %v2791
          %2920 = vst [vmem:[%s213 + $0x1d0] sm:$0xff] %v2792
          %2921 = vst [vmem:[%s213 + $0x1d8] sm:$0xff] %v2793
          %2922 = vst [vmem:[%s213 + $0x1e0] sm:$0xff] %v2794
          %2923 = vst [vmem:[%s213 + $0x1e8] sm:$0xff] %v2795
          %2924 = vst [vmem:[%s213 + $0x1f0] sm:$0xff] %v2796
          %2925 = vst [vmem:[%s213 + $0x1f8] sm:$0xff] %v2797
          %2926 = vst [vmem:[%s213 + $0x200] sm:$0xff] %v2798
          %2927 = vst [vmem:[%s213 + $0x208] sm:$0xff] %v2799
          %2928 = vst [vmem:[%s213 + $0x210] sm:$0xff] %v2800
          %2929 = vst [vmem:[%s213 + $0x218] sm:$0xff] %v2801
          %2930 = vst [vmem:[%s213 + $0x220] sm:$0xff] %v2802
          %2931 = vst [vmem:[%s213 + $0x228] sm:$0xff] %v2803
          %2932 = vst [vmem:[%s213 + $0x230] sm:$0xff] %v2804
          %2933 = vst [vmem:[%s213 + $0x238] sm:$0xff] %v2805
          %2934 = vst [vmem:[%s213 + $0x240] sm:$0xff] %v2806
          %2935 = vst [vmem:[%s213 + $0x248] sm:$0xff] %v2807
          %2936 = vst [vmem:[%s213 + $0x250] sm:$0xff] %v2808
          %2937 = vst [vmem:[%s213 + $0x258] sm:$0xff] %v2809
          %2938 = vst [vmem:[%s213 + $0x260] sm:$0xff] %v2810
          %2939 = vst [vmem:[%s213 + $0x268] sm:$0xff] %v2811
          %2940 = vst [vmem:[%s213 + $0x270] sm:$0xff] %v2812
          %2941 = vst [vmem:[%s213 + $0x278] sm:$0xff] %v2813
          %2942 = vst [vmem:[%s213 + $0x280] sm:$0xff] %v2814
          %2943 = vst [vmem:[%s213 + $0x288] sm:$0xff] %v2815
          %2944 = vst [vmem:[%s213 + $0x290] sm:$0xff] %v2816
          %2945 = vst [vmem:[%s213 + $0x298] sm:$0xff] %v2817
          %2946 = vst [vmem:[%s213 + $0x2a0] sm:$0xff] %v2818
          %2947 = vst [vmem:[%s213 + $0x2a8] sm:$0xff] %v2819
          %2948 = vst [vmem:[%s213 + $0x2b0] sm:$0xff] %v2820
          %2949 = vst [vmem:[%s213 + $0x2b8] sm:$0xff] %v2821
          %2950 = vst [vmem:[%s213 + $0x2c0] sm:$0xff] %v2822
          %2951 = vst [vmem:[%s213 + $0x2c8] sm:$0xff] %v2823
          %2952 = vst [vmem:[%s213 + $0x2d0] sm:$0xff] %v2824
          %2953 = vst [vmem:[%s213 + $0x2d8] sm:$0xff] %v2825
          %2954 = vst [vmem:[%s213 + $0x2e0] sm:$0xff] %v2826
          %2955 = vst [vmem:[%s213 + $0x2e8] sm:$0xff] %v2827
          %2956 = vst [vmem:[%s213 + $0x2f0] sm:$0xff] %v2828
          %2957 = vst [vmem:[%s213 + $0x2f8] sm:$0xff] %v2829
          %2958 = vst [vmem:[%s213 + $0x300] sm:$0xff] %v2830
          %2959 = vst [vmem:[%s213 + $0x308] sm:$0xff] %v2831
          %2960 = vst [vmem:[%s213 + $0x310] sm:$0xff] %v2832
          %2961 = vst [vmem:[%s213 + $0x318] sm:$0xff] %v2833
          %2962 = vst [vmem:[%s213 + $0x320] sm:$0xff] %v2834
          %2963 = vst [vmem:[%s213 + $0x328] sm:$0xff] %v2835
          %2964 = vst [vmem:[%s213 + $0x330] sm:$0xff] %v2836
          %2965 = vst [vmem:[%s213 + $0x338] sm:$0xff] %v2837
          %2966 = vst [vmem:[%s213 + $0x340] sm:$0xff] %v2838
          %2967 = vst [vmem:[%s213 + $0x348] sm:$0xff] %v2839
          %2968 = vst [vmem:[%s213 + $0x350] sm:$0xff] %v2840
          %2969 = vst [vmem:[%s213 + $0x358] sm:$0xff] %v2841
          %2970 = vst [vmem:[%s213 + $0x360] sm:$0xff] %v2842
          %2971 = vst [vmem:[%s213 + $0x368] sm:$0xff] %v2843
          %2972 = vst [vmem:[%s213 + $0x370] sm:$0xff] %v2844
          %2973 = vst [vmem:[%s213 + $0x378] sm:$0xff] %v2845
          %2974 = vst [vmem:[%s213 + $0x380] sm:$0xff] %v2846
          %2975 = vst [vmem:[%s213 + $0x388] sm:$0xff] %v2847
          %2976 = vst [vmem:[%s213 + $0x390] sm:$0xff] %v2848
          %2977 = vst [vmem:[%s213 + $0x398] sm:$0xff] %v2849
          %2978 = vst [vmem:[%s213 + $0x3a0] sm:$0xff] %v2850
          %2979 = vst [vmem:[%s213 + $0x3a8] sm:$0xff] %v2851
          %2980 = vst [vmem:[%s213 + $0x3b0] sm:$0xff] %v2852
          %2981 = vst [vmem:[%s213 + $0x3b8] sm:$0xff] %v2853
          %2982 = vst [vmem:[%s213 + $0x3c0] sm:$0xff] %v2854
          %2983 = vst [vmem:[%s213 + $0x3c8] sm:$0xff] %v2855
          %2984 = vst [vmem:[%s213 + $0x3d0] sm:$0xff] %v2856
          %2985 = vst [vmem:[%s213 + $0x3d8] sm:$0xff] %v2857
          %2986 = vst [vmem:[%s213 + $0x3e0] sm:$0xff] %v2858
          %2987 = vst [vmem:[%s213 + $0x3e8] sm:$0xff] %v2859
          %2988 = vst [vmem:[%s213 + $0x3f0] sm:$0xff] %v2860
          %2989 = vst [vmem:[%s213 + $0x3f8] sm:$0xff] %v2861
        $region48: #{projection_layer.1} parent=31 // pred_fallthru
          _
        %s2990 = sand.u32 %s123, 1
        %s2991 = sand.u32 %s123, 1
        %s2992 = smul.addr %s2991, 1024
        %s2993 = scalar_lea.vmem [#allocation4], %s2992
        // Predicated region
        $region49: #{projection_layer.1} parent=31 // pred_check
          %p2994 = pneg %p133
        $region50: #{projection_layer.1} parent=31 // pred_check_branch
          %2996 = sbr.rel (%p2994) target = $region52
        $region51: #{projection_layer.1} parent=31 // pred_region
          %s2997 = smul.u32 %s20, %s21
          %s2998 = smul.u32 32, %s19
          %s2999 = smul.u32 4, %s2997
          %s3000 = smul.addr %s2998, 8
          %s3001 = sadd.s32 %s2999, %s3000
          %s3002 = smul.addr %s3001, 8
          %s3003 = scalar_lea.vmem %s3, %s3002
          // Predicated region
          $region53: #{projection_layer.1} parent=51 // pred_check
            _
          $region54: #{projection_layer.1} parent=51 // pred_check_branch
            %3005 = sbr.rel (0) target = $region56
          $region55: #{projection_layer.1} parent=51 // pred_region
            // Predicated region
            $region57: #{projection_layer.1} parent=55 // pred_check
              _
            $region58: #{projection_layer.1} parent=55 // pred_check_branch
              %3007 = sbr.rel (0) target = $region60
            $region59: #{projection_layer.1} parent=55 // pred_region
              loop: start=0, step=1, limit=1
              $region61: #{projection_layer.1} parent=59 // loop_pre_header
                _
              $region62: #{projection_layer.1} parent=59 // loop_header
                %s3009 = sphi 0, %s3013
                %p3010 = scmp.ge.s32.totalorder %s3009, 1
                %s3014 = sphi %s2993, %s2993
                %s3015 = sphi %s3003, %s3003
              $region63: #{projection_layer.1} parent=59 // loop_header_branch
                %3012 = sbr.rel (%p3010) target = $region67
              $region64: #{projection_layer.1} parent=59 // loop_body
                %v3016 = vld [vmem:[%s3014] sm:$0xff]
                %3017 = vst [vmem:[%s3015] sm:$0xff] %v3016
                %v3018 = vld [vmem:[%s3014 + $0x8] sm:$0xff]
                %3019 = vst [vmem:[%s3015 + $0x8] sm:$0xff] %v3018
                %v3020 = vld [vmem:[%s3014 + $0x10] sm:$0xff]
                %3021 = vst [vmem:[%s3015 + $0x10] sm:$0xff] %v3020
                %v3022 = vld [vmem:[%s3014 + $0x18] sm:$0xff]
                %3023 = vst [vmem:[%s3015 + $0x18] sm:$0xff] %v3022
                %v3024 = vld [vmem:[%s3014 + $0x20] sm:$0xff]
                %3025 = vst [vmem:[%s3015 + $0x40] sm:$0xff] %v3024
                %v3026 = vld [vmem:[%s3014 + $0x28] sm:$0xff]
                %3027 = vst [vmem:[%s3015 + $0x48] sm:$0xff] %v3026
                %v3028 = vld [vmem:[%s3014 + $0x30] sm:$0xff]
                %3029 = vst [vmem:[%s3015 + $0x50] sm:$0xff] %v3028
                %v3030 = vld [vmem:[%s3014 + $0x38] sm:$0xff]
                %3031 = vst [vmem:[%s3015 + $0x58] sm:$0xff] %v3030
                %v3032 = vld [vmem:[%s3014 + $0x40] sm:$0xff]
                %3033 = vst [vmem:[%s3015 + $0x80] sm:$0xff] %v3032
                %v3034 = vld [vmem:[%s3014 + $0x48] sm:$0xff]
                %3035 = vst [vmem:[%s3015 + $0x88] sm:$0xff] %v3034
                %v3036 = vld [vmem:[%s3014 + $0x50] sm:$0xff]
                %3037 = vst [vmem:[%s3015 + $0x90] sm:$0xff] %v3036
                %v3038 = vld [vmem:[%s3014 + $0x58] sm:$0xff]
                %3039 = vst [vmem:[%s3015 + $0x98] sm:$0xff] %v3038
                %v3040 = vld [vmem:[%s3014 + $0x60] sm:$0xff]
                %3041 = vst [vmem:[%s3015 + $0xc0] sm:$0xff] %v3040
                %v3042 = vld [vmem:[%s3014 + $0x68] sm:$0xff]
                %3043 = vst [vmem:[%s3015 + $0xc8] sm:$0xff] %v3042
                %v3044 = vld [vmem:[%s3014 + $0x70] sm:$0xff]
                %3045 = vst [vmem:[%s3015 + $0xd0] sm:$0xff] %v3044
                %v3046 = vld [vmem:[%s3014 + $0x78] sm:$0xff]
                %3047 = vst [vmem:[%s3015 + $0xd8] sm:$0xff] %v3046
                %v3048 = vld [vmem:[%s3014 + $0x80] sm:$0xff]
                %3049 = vst [vmem:[%s3015 + $0x100] sm:$0xff] %v3048
                %v3050 = vld [vmem:[%s3014 + $0x88] sm:$0xff]
                %3051 = vst [vmem:[%s3015 + $0x108] sm:$0xff] %v3050
                %v3052 = vld [vmem:[%s3014 + $0x90] sm:$0xff]
                %3053 = vst [vmem:[%s3015 + $0x110] sm:$0xff] %v3052
                %v3054 = vld [vmem:[%s3014 + $0x98] sm:$0xff]
                %3055 = vst [vmem:[%s3015 + $0x118] sm:$0xff] %v3054
                %v3056 = vld [vmem:[%s3014 + $0xa0] sm:$0xff]
                %3057 = vst [vmem:[%s3015 + $0x140] sm:$0xff] %v3056
                %v3058 = vld [vmem:[%s3014 + $0xa8] sm:$0xff]
                %3059 = vst [vmem:[%s3015 + $0x148] sm:$0xff] %v3058
                %v3060 = vld [vmem:[%s3014 + $0xb0] sm:$0xff]
                %3061 = vst [vmem:[%s3015 + $0x150] sm:$0xff] %v3060
                %v3062 = vld [vmem:[%s3014 + $0xb8] sm:$0xff]
                %3063 = vst [vmem:[%s3015 + $0x158] sm:$0xff] %v3062
                %v3064 = vld [vmem:[%s3014 + $0xc0] sm:$0xff]
                %3065 = vst [vmem:[%s3015 + $0x180] sm:$0xff] %v3064
                %v3066 = vld [vmem:[%s3014 + $0xc8] sm:$0xff]
                %3067 = vst [vmem:[%s3015 + $0x188] sm:$0xff] %v3066
                %v3068 = vld [vmem:[%s3014 + $0xd0] sm:$0xff]
                %3069 = vst [vmem:[%s3015 + $0x190] sm:$0xff] %v3068
                %v3070 = vld [vmem:[%s3014 + $0xd8] sm:$0xff]
                %3071 = vst [vmem:[%s3015 + $0x198] sm:$0xff] %v3070
                %v3072 = vld [vmem:[%s3014 + $0xe0] sm:$0xff]
                %3073 = vst [vmem:[%s3015 + $0x1c0] sm:$0xff] %v3072
                %v3074 = vld [vmem:[%s3014 + $0xe8] sm:$0xff]
                %3075 = vst [vmem:[%s3015 + $0x1c8] sm:$0xff] %v3074
                %v3076 = vld [vmem:[%s3014 + $0xf0] sm:$0xff]
                %3077 = vst [vmem:[%s3015 + $0x1d0] sm:$0xff] %v3076
                %v3078 = vld [vmem:[%s3014 + $0xf8] sm:$0xff]
                %3079 = vst [vmem:[%s3015 + $0x1d8] sm:$0xff] %v3078
                %v3080 = vld [vmem:[%s3014 + $0x100] sm:$0xff]
                %3081 = vst [vmem:[%s3015 + $0x200] sm:$0xff] %v3080
                %v3082 = vld [vmem:[%s3014 + $0x108] sm:$0xff]
                %3083 = vst [vmem:[%s3015 + $0x208] sm:$0xff] %v3082
                %v3084 = vld [vmem:[%s3014 + $0x110] sm:$0xff]
                %3085 = vst [vmem:[%s3015 + $0x210] sm:$0xff] %v3084
                %v3086 = vld [vmem:[%s3014 + $0x118] sm:$0xff]
                %3087 = vst [vmem:[%s3015 + $0x218] sm:$0xff] %v3086
                %v3088 = vld [vmem:[%s3014 + $0x120] sm:$0xff]
                %3089 = vst [vmem:[%s3015 + $0x240] sm:$0xff] %v3088
                %v3090 = vld [vmem:[%s3014 + $0x128] sm:$0xff]
                %3091 = vst [vmem:[%s3015 + $0x248] sm:$0xff] %v3090
                %v3092 = vld [vmem:[%s3014 + $0x130] sm:$0xff]
                %3093 = vst [vmem:[%s3015 + $0x250] sm:$0xff] %v3092
                %v3094 = vld [vmem:[%s3014 + $0x138] sm:$0xff]
                %3095 = vst [vmem:[%s3015 + $0x258] sm:$0xff] %v3094
                %v3096 = vld [vmem:[%s3014 + $0x140] sm:$0xff]
                %3097 = vst [vmem:[%s3015 + $0x280] sm:$0xff] %v3096
                %v3098 = vld [vmem:[%s3014 + $0x148] sm:$0xff]
                %3099 = vst [vmem:[%s3015 + $0x288] sm:$0xff] %v3098
                %v3100 = vld [vmem:[%s3014 + $0x150] sm:$0xff]
                %3101 = vst [vmem:[%s3015 + $0x290] sm:$0xff] %v3100
                %v3102 = vld [vmem:[%s3014 + $0x158] sm:$0xff]
                %3103 = vst [vmem:[%s3015 + $0x298] sm:$0xff] %v3102
                %v3104 = vld [vmem:[%s3014 + $0x160] sm:$0xff]
                %3105 = vst [vmem:[%s3015 + $0x2c0] sm:$0xff] %v3104
                %v3106 = vld [vmem:[%s3014 + $0x168] sm:$0xff]
                %3107 = vst [vmem:[%s3015 + $0x2c8] sm:$0xff] %v3106
                %v3108 = vld [vmem:[%s3014 + $0x170] sm:$0xff]
                %3109 = vst [vmem:[%s3015 + $0x2d0] sm:$0xff] %v3108
                %v3110 = vld [vmem:[%s3014 + $0x178] sm:$0xff]
                %3111 = vst [vmem:[%s3015 + $0x2d8] sm:$0xff] %v3110
                %v3112 = vld [vmem:[%s3014 + $0x180] sm:$0xff]
                %3113 = vst [vmem:[%s3015 + $0x300] sm:$0xff] %v3112
                %v3114 = vld [vmem:[%s3014 + $0x188] sm:$0xff]
                %3115 = vst [vmem:[%s3015 + $0x308] sm:$0xff] %v3114
                %v3116 = vld [vmem:[%s3014 + $0x190] sm:$0xff]
                %3117 = vst [vmem:[%s3015 + $0x310] sm:$0xff] %v3116
                %v3118 = vld [vmem:[%s3014 + $0x198] sm:$0xff]
                %3119 = vst [vmem:[%s3015 + $0x318] sm:$0xff] %v3118
                %v3120 = vld [vmem:[%s3014 + $0x1a0] sm:$0xff]
                %3121 = vst [vmem:[%s3015 + $0x340] sm:$0xff] %v3120
                %v3122 = vld [vmem:[%s3014 + $0x1a8] sm:$0xff]
                %3123 = vst [vmem:[%s3015 + $0x348] sm:$0xff] %v3122
                %v3124 = vld [vmem:[%s3014 + $0x1b0] sm:$0xff]
                %3125 = vst [vmem:[%s3015 + $0x350] sm:$0xff] %v3124
                %v3126 = vld [vmem:[%s3014 + $0x1b8] sm:$0xff]
                %3127 = vst [vmem:[%s3015 + $0x358] sm:$0xff] %v3126
                %v3128 = vld [vmem:[%s3014 + $0x1c0] sm:$0xff]
                %3129 = vst [vmem:[%s3015 + $0x380] sm:$0xff] %v3128
                %v3130 = vld [vmem:[%s3014 + $0x1c8] sm:$0xff]
                %3131 = vst [vmem:[%s3015 + $0x388] sm:$0xff] %v3130
                %v3132 = vld [vmem:[%s3014 + $0x1d0] sm:$0xff]
                %3133 = vst [vmem:[%s3015 + $0x390] sm:$0xff] %v3132
                %v3134 = vld [vmem:[%s3014 + $0x1d8] sm:$0xff]
                %3135 = vst [vmem:[%s3015 + $0x398] sm:$0xff] %v3134
                %v3136 = vld [vmem:[%s3014 + $0x1e0] sm:$0xff]
                %3137 = vst [vmem:[%s3015 + $0x3c0] sm:$0xff] %v3136
                %v3138 = vld [vmem:[%s3014 + $0x1e8] sm:$0xff]
                %3139 = vst [vmem:[%s3015 + $0x3c8] sm:$0xff] %v3138
                %v3140 = vld [vmem:[%s3014 + $0x1f0] sm:$0xff]
                %3141 = vst [vmem:[%s3015 + $0x3d0] sm:$0xff] %v3140
                %v3142 = vld [vmem:[%s3014 + $0x1f8] sm:$0xff]
                %3143 = vst [vmem:[%s3015 + $0x3d8] sm:$0xff] %v3142
                %v3144 = vld [vmem:[%s3014 + $0x200] sm:$0xff]
                %3145 = vst [vmem:[%s3015 + $0x400] sm:$0xff] %v3144
                %v3146 = vld [vmem:[%s3014 + $0x208] sm:$0xff]
                %3147 = vst [vmem:[%s3015 + $0x408] sm:$0xff] %v3146
                %v3148 = vld [vmem:[%s3014 + $0x210] sm:$0xff]
                %3149 = vst [vmem:[%s3015 + $0x410] sm:$0xff] %v3148
                %v3150 = vld [vmem:[%s3014 + $0x218] sm:$0xff]
                %3151 = vst [vmem:[%s3015 + $0x418] sm:$0xff] %v3150
                %v3152 = vld [vmem:[%s3014 + $0x220] sm:$0xff]
                %3153 = vst [vmem:[%s3015 + $0x440] sm:$0xff] %v3152
                %v3154 = vld [vmem:[%s3014 + $0x228] sm:$0xff]
                %3155 = vst [vmem:[%s3015 + $0x448] sm:$0xff] %v3154
                %v3156 = vld [vmem:[%s3014 + $0x230] sm:$0xff]
                %3157 = vst [vmem:[%s3015 + $0x450] sm:$0xff] %v3156
                %v3158 = vld [vmem:[%s3014 + $0x238] sm:$0xff]
                %3159 = vst [vmem:[%s3015 + $0x458] sm:$0xff] %v3158
                %v3160 = vld [vmem:[%s3014 + $0x240] sm:$0xff]
                %3161 = vst [vmem:[%s3015 + $0x480] sm:$0xff] %v3160
                %v3162 = vld [vmem:[%s3014 + $0x248] sm:$0xff]
                %3163 = vst [vmem:[%s3015 + $0x488] sm:$0xff] %v3162
                %v3164 = vld [vmem:[%s3014 + $0x250] sm:$0xff]
                %3165 = vst [vmem:[%s3015 + $0x490] sm:$0xff] %v3164
                %v3166 = vld [vmem:[%s3014 + $0x258] sm:$0xff]
                %3167 = vst [vmem:[%s3015 + $0x498] sm:$0xff] %v3166
                %v3168 = vld [vmem:[%s3014 + $0x260] sm:$0xff]
                %3169 = vst [vmem:[%s3015 + $0x4c0] sm:$0xff] %v3168
                %v3170 = vld [vmem:[%s3014 + $0x268] sm:$0xff]
                %3171 = vst [vmem:[%s3015 + $0x4c8] sm:$0xff] %v3170
                %v3172 = vld [vmem:[%s3014 + $0x270] sm:$0xff]
                %3173 = vst [vmem:[%s3015 + $0x4d0] sm:$0xff] %v3172
                %v3174 = vld [vmem:[%s3014 + $0x278] sm:$0xff]
                %3175 = vst [vmem:[%s3015 + $0x4d8] sm:$0xff] %v3174
                %v3176 = vld [vmem:[%s3014 + $0x280] sm:$0xff]
                %3177 = vst [vmem:[%s3015 + $0x500] sm:$0xff] %v3176
                %v3178 = vld [vmem:[%s3014 + $0x288] sm:$0xff]
                %3179 = vst [vmem:[%s3015 + $0x508] sm:$0xff] %v3178
                %v3180 = vld [vmem:[%s3014 + $0x290] sm:$0xff]
                %3181 = vst [vmem:[%s3015 + $0x510] sm:$0xff] %v3180
                %v3182 = vld [vmem:[%s3014 + $0x298] sm:$0xff]
                %3183 = vst [vmem:[%s3015 + $0x518] sm:$0xff] %v3182
                %v3184 = vld [vmem:[%s3014 + $0x2a0] sm:$0xff]
                %3185 = vst [vmem:[%s3015 + $0x540] sm:$0xff] %v3184
                %v3186 = vld [vmem:[%s3014 + $0x2a8] sm:$0xff]
                %3187 = vst [vmem:[%s3015 + $0x548] sm:$0xff] %v3186
                %v3188 = vld [vmem:[%s3014 + $0x2b0] sm:$0xff]
                %3189 = vst [vmem:[%s3015 + $0x550] sm:$0xff] %v3188
                %v3190 = vld [vmem:[%s3014 + $0x2b8] sm:$0xff]
                %3191 = vst [vmem:[%s3015 + $0x558] sm:$0xff] %v3190
                %v3192 = vld [vmem:[%s3014 + $0x2c0] sm:$0xff]
                %3193 = vst [vmem:[%s3015 + $0x580] sm:$0xff] %v3192
                %v3194 = vld [vmem:[%s3014 + $0x2c8] sm:$0xff]
                %3195 = vst [vmem:[%s3015 + $0x588] sm:$0xff] %v3194
                %v3196 = vld [vmem:[%s3014 + $0x2d0] sm:$0xff]
                %3197 = vst [vmem:[%s3015 + $0x590] sm:$0xff] %v3196
                %v3198 = vld [vmem:[%s3014 + $0x2d8] sm:$0xff]
                %3199 = vst [vmem:[%s3015 + $0x598] sm:$0xff] %v3198
                %v3200 = vld [vmem:[%s3014 + $0x2e0] sm:$0xff]
                %3201 = vst [vmem:[%s3015 + $0x5c0] sm:$0xff] %v3200
                %v3202 = vld [vmem:[%s3014 + $0x2e8] sm:$0xff]
                %3203 = vst [vmem:[%s3015 + $0x5c8] sm:$0xff] %v3202
                %v3204 = vld [vmem:[%s3014 + $0x2f0] sm:$0xff]
                %3205 = vst [vmem:[%s3015 + $0x5d0] sm:$0xff] %v3204
                %v3206 = vld [vmem:[%s3014 + $0x2f8] sm:$0xff]
                %3207 = vst [vmem:[%s3015 + $0x5d8] sm:$0xff] %v3206
                %v3208 = vld [vmem:[%s3014 + $0x300] sm:$0xff]
                %3209 = vst [vmem:[%s3015 + $0x600] sm:$0xff] %v3208
                %v3210 = vld [vmem:[%s3014 + $0x308] sm:$0xff]
                %3211 = vst [vmem:[%s3015 + $0x608] sm:$0xff] %v3210
                %v3212 = vld [vmem:[%s3014 + $0x310] sm:$0xff]
                %3213 = vst [vmem:[%s3015 + $0x610] sm:$0xff] %v3212
                %v3214 = vld [vmem:[%s3014 + $0x318] sm:$0xff]
                %3215 = vst [vmem:[%s3015 + $0x618] sm:$0xff] %v3214
                %v3216 = vld [vmem:[%s3014 + $0x320] sm:$0xff]
                %3217 = vst [vmem:[%s3015 + $0x640] sm:$0xff] %v3216
                %v3218 = vld [vmem:[%s3014 + $0x328] sm:$0xff]
                %3219 = vst [vmem:[%s3015 + $0x648] sm:$0xff] %v3218
                %v3220 = vld [vmem:[%s3014 + $0x330] sm:$0xff]
                %3221 = vst [vmem:[%s3015 + $0x650] sm:$0xff] %v3220
                %v3222 = vld [vmem:[%s3014 + $0x338] sm:$0xff]
                %3223 = vst [vmem:[%s3015 + $0x658] sm:$0xff] %v3222
                %v3224 = vld [vmem:[%s3014 + $0x340] sm:$0xff]
                %3225 = vst [vmem:[%s3015 + $0x680] sm:$0xff] %v3224
                %v3226 = vld [vmem:[%s3014 + $0x348] sm:$0xff]
                %3227 = vst [vmem:[%s3015 + $0x688] sm:$0xff] %v3226
                %v3228 = vld [vmem:[%s3014 + $0x350] sm:$0xff]
                %3229 = vst [vmem:[%s3015 + $0x690] sm:$0xff] %v3228
                %v3230 = vld [vmem:[%s3014 + $0x358] sm:$0xff]
                %3231 = vst [vmem:[%s3015 + $0x698] sm:$0xff] %v3230
                %v3232 = vld [vmem:[%s3014 + $0x360] sm:$0xff]
                %3233 = vst [vmem:[%s3015 + $0x6c0] sm:$0xff] %v3232
                %v3234 = vld [vmem:[%s3014 + $0x368] sm:$0xff]
                %3235 = vst [vmem:[%s3015 + $0x6c8] sm:$0xff] %v3234
                %v3236 = vld [vmem:[%s3014 + $0x370] sm:$0xff]
                %3237 = vst [vmem:[%s3015 + $0x6d0] sm:$0xff] %v3236
                %v3238 = vld [vmem:[%s3014 + $0x378] sm:$0xff]
                %3239 = vst [vmem:[%s3015 + $0x6d8] sm:$0xff] %v3238
                %v3240 = vld [vmem:[%s3014 + $0x380] sm:$0xff]
                %3241 = vst [vmem:[%s3015 + $0x700] sm:$0xff] %v3240
                %v3242 = vld [vmem:[%s3014 + $0x388] sm:$0xff]
                %3243 = vst [vmem:[%s3015 + $0x708] sm:$0xff] %v3242
                %v3244 = vld [vmem:[%s3014 + $0x390] sm:$0xff]
                %3245 = vst [vmem:[%s3015 + $0x710] sm:$0xff] %v3244
                %v3246 = vld [vmem:[%s3014 + $0x398] sm:$0xff]
                %3247 = vst [vmem:[%s3015 + $0x718] sm:$0xff] %v3246
                %v3248 = vld [vmem:[%s3014 + $0x3a0] sm:$0xff]
                %3249 = vst [vmem:[%s3015 + $0x740] sm:$0xff] %v3248
                %v3250 = vld [vmem:[%s3014 + $0x3a8] sm:$0xff]
                %3251 = vst [vmem:[%s3015 + $0x748] sm:$0xff] %v3250
                %v3252 = vld [vmem:[%s3014 + $0x3b0] sm:$0xff]
                %3253 = vst [vmem:[%s3015 + $0x750] sm:$0xff] %v3252
                %v3254 = vld [vmem:[%s3014 + $0x3b8] sm:$0xff]
                %3255 = vst [vmem:[%s3015 + $0x758] sm:$0xff] %v3254
                %v3256 = vld [vmem:[%s3014 + $0x3c0] sm:$0xff]
                %3257 = vst [vmem:[%s3015 + $0x780] sm:$0xff] %v3256
                %v3258 = vld [vmem:[%s3014 + $0x3c8] sm:$0xff]
                %3259 = vst [vmem:[%s3015 + $0x788] sm:$0xff] %v3258
                %v3260 = vld [vmem:[%s3014 + $0x3d0] sm:$0xff]
                %3261 = vst [vmem:[%s3015 + $0x790] sm:$0xff] %v3260
                %v3262 = vld [vmem:[%s3014 + $0x3d8] sm:$0xff]
                %3263 = vst [vmem:[%s3015 + $0x798] sm:$0xff] %v3262
                %v3264 = vld [vmem:[%s3014 + $0x3e0] sm:$0xff]
                %3265 = vst [vmem:[%s3015 + $0x7c0] sm:$0xff] %v3264
                %v3266 = vld [vmem:[%s3014 + $0x3e8] sm:$0xff]
                %3267 = vst [vmem:[%s3015 + $0x7c8] sm:$0xff] %v3266
                %v3268 = vld [vmem:[%s3014 + $0x3f0] sm:$0xff]
                %3269 = vst [vmem:[%s3015 + $0x7d0] sm:$0xff] %v3268
                %v3270 = vld [vmem:[%s3014 + $0x3f8] sm:$0xff]
                %3271 = vst [vmem:[%s3015 + $0x7d8] sm:$0xff] %v3270
              $region65: #{projection_layer.1} parent=59 // loop_footer
                %s3013 = sadd.s32 1, %s3009
              $region66: #{projection_layer.1} parent=59 // loop_footer_branch
                %3008 = sbr.rel target = $region62
              $region67: #{projection_layer.1} parent=59 // loop_exit
                _
            $region60: #{projection_layer.1} parent=55 // pred_fallthru
              _
            // Predicated region
            $region68: #{projection_layer.1} parent=55 // pred_check
              _
            $region69: #{projection_layer.1} parent=55 // pred_check_branch
              %3273 = sbr.rel target = $region71
            $region70: #{projection_layer.1} parent=55 // pred_region
              _
            $region71: #{projection_layer.1} parent=55 // pred_fallthru
              _
          $region56: #{projection_layer.1} parent=51 // pred_fallthru
            _
          %3274 = vnop
        $region52: #{projection_layer.1} parent=31 // pred_fallthru
          _
      $region32: #{projection_layer.1} parent=5 // pred_fallthru
        _
      %p3275 = scmp.le.s32.totalorder 2, %s9
      // Predicated region
      $region72: #{projection_layer.1} parent=5 // pred_check
        %p3276 = pneg %p3275
      $region73: #{projection_layer.1} parent=5 // pred_check_branch
        %3278 = sbr.rel (%p3276) target = $region75
      $region74: #{projection_layer.1} parent=5 // pred_region
        %s3279 = ssub.s32 %s9, 2
        // Predicated region
        $region76: #{projection_layer.1} parent=74 // pred_check
          %p3280 = pneg %p139
        $region77: #{projection_layer.1} parent=74 // pred_check_branch
          %3282 = sbr.rel (%p3280) target = $region79
        $region78: #{projection_layer.1} parent=74 // pred_region
          %s3283 = sand.u32 %s124, 1
          %s3284 = sand.u32 %s124, 1
          %s3285 = smul.addr %s3284, 1024
          %s3286 = scalar_lea.vmem [#allocation4], %s3285
        $region79: #{projection_layer.1} parent=74 // pred_fallthru
          _
      $region75: #{projection_layer.1} parent=5 // pred_fallthru
        _
    $region6: #{projection_layer.1} parent=1 // loop_footer
      %s13 = sadd.s32 1, %s9
    $region7: #{projection_layer.1} parent=1 // loop_footer_branch
      %8 = sbr.rel target = $region3
    $region8: #{projection_layer.1} parent=1 // loop_exit
      _

</llo_original>
